<compile_context>
chip_gen: v5e
topology: v5e:2x2
jax: 0.10.0
libtpu: 0.0.40
codegen_flags: <defaults>
</compile_context>

<pallas_src>
import jax
import jax.numpy as jnp
from jax.experimental import pallas as pl
from jax.experimental.pallas import tpu as pltpu

IN_DIM = 4 * 32 * 13          # 1664 (already a multiple of 128)
H1, H2, H3, OUT = 600, 300, 150, 2
H1P, H2P, H3P = 640, 384, 256  # lane-aligned (multiples of 128)


def _round_up(n, m):
    return (n + m - 1) // m * m


def _pad_to(a, shape):
    pads = [(0, t - s) for s, t in zip(a.shape, shape)]
    return jnp.pad(a, pads)


def _mlp_softmax_kernel(x_ref,
                        w1_ref, b1_ref,
                        w2_ref, b2_ref,
                        w3_ref, b3_ref,
                        w4_ref, b4_ref,
                        o_ref):
    x = x_ref[...]  # (TB, IN_DIM) bf16

    # Layer 1: bf16 MXU, f32 accumulate, f32 elementwise.
    h = jnp.dot(x, w1_ref[...], preferred_element_type=jnp.float32) + b1_ref[...]
    h = jnp.maximum(h, 0.0)

    h = jnp.dot(h.astype(jnp.bfloat16), w2_ref[...],
                preferred_element_type=jnp.float32) + b2_ref[...]
    h = jnp.maximum(h, 0.0)

    h = jnp.dot(h.astype(jnp.bfloat16), w3_ref[...],
                preferred_element_type=jnp.float32) + b3_ref[...]
    h = jnp.maximum(h, 0.0)

    logits = jnp.dot(h.astype(jnp.bfloat16), w4_ref[...],
                     preferred_element_type=jnp.float32) + b4_ref[...]  # (TB, 2)

    # 2-class softmax as sigmoid of the logit difference (avoids XLU reductions
    # over a 2-wide lane vector): softmax([a,b]) = [sigmoid(a-b), 1-sigmoid(a-b)].
    d = logits[:, 0:1] - logits[:, 1:2]                  # (TB, 1)
    p0 = 1.0 / (1.0 + jnp.exp(-d))                       # (TB, 1), EUP exp
    col = jax.lax.broadcasted_iota(jnp.int32, o_ref.shape, 1)
    o_ref[...] = jnp.where(col == 0, p0, 1.0 - p0).astype(o_ref.dtype)


def discriminator1_forward(x, prep):
    """x: (B, 4, 32, 13) float32.  prep: padded/bf16 params from prepare_params."""
    B = x.shape[0]
    x_flat = x.reshape(B, -1).astype(jnp.bfloat16)  # torch.flatten(x, start_dim=1)
    assert x_flat.shape[1] == IN_DIM

    # Pad batch so the tile is (8,128)-friendly and divides the grid evenly.
    b8 = _round_up(B, 8)
    tb = min(256, b8)
    b_pad = _round_up(b8, tb)
    if b_pad != B:
        x_flat = jnp.pad(x_flat, ((0, b_pad - B), (0, 0)))
    grid = (b_pad // tb,)

    def const(i):  # weights/biases: same block every grid step -> stay resident
        return (0, 0)

    in_specs = [
        pl.BlockSpec((tb, IN_DIM), lambda i: (i, 0)),   # x tile (double-buffered)
        pl.BlockSpec((IN_DIM, H1P), const),
        pl.BlockSpec((1, H1P), const),
        pl.BlockSpec((H1P, H2P), const),
        pl.BlockSpec((1, H2P), const),
        pl.BlockSpec((H2P, H3P), const),
        pl.BlockSpec((1, H3P), const),
        pl.BlockSpec((H3P, OUT), const),
        pl.BlockSpec((1, OUT), const),
    ]
    out_spec = pl.BlockSpec((tb, OUT), lambda i: (i, 0))

    out = pl.pallas_call(
        _mlp_softmax_kernel,
        out_shape=jax.ShapeDtypeStruct((b_pad, OUT), jnp.float32),
        grid=grid,
        in_specs=in_specs,
        out_specs=out_spec,
        compiler_params=pltpu.CompilerParams(
            dimension_semantics=("parallel",),   # shard batch tiles across TCs (v7x)
            vmem_limit_bytes=48 << 20,           # fits v7x's 64 MiB physical VMEM
        ),
    )(x_flat,
      prep["w1"], prep["b1"],
      prep["w2"], prep["b2"],
      prep["w3"], prep["b3"],
      prep["w4"], prep["b4"])
    return out[:B]


def init_params(key):
    """Deterministic init matching the PyTorch layer shapes.

    PyTorch stores Linear weight as (out, in); we store the transpose (in, out)."""
    ks = jax.random.split(key, 8)

    def lin(kw, kb, fan_in, fan_out):
        bound = 1.0 / jnp.sqrt(fan_in)
        w = jax.random.uniform(kw, (fan_in, fan_out), jnp.float32, -bound, bound)
        b = jax.random.uniform(kb, (1, fan_out), jnp.float32, -bound, bound)
        return w, b

    w1, b1 = lin(ks[0], ks[1], IN_DIM, H1)
    w2, b2 = lin(ks[2], ks[3], H1, H2)
    w3, b3 = lin(ks[4], ks[5], H2, H3)
    w4, b4 = lin(ks[6], ks[7], H3, OUT)
    return dict(w1=w1, b1=b1, w2=w2, b2=b2, w3=w3, b3=b3, w4=w4, b4=b4)


def prepare_params(p):
    """Zero-pad hidden dims to lane multiples of 128; weights bf16, biases f32.

    Padded bias entries are exactly 0 (ReLU keeps padded lanes at 0) and padded
    downstream weight rows are 0, so results are bit-identical to the unpadded math."""
    w1 = _pad_to(p["w1"], (IN_DIM, H1P)).astype(jnp.bfloat16)
    b1 = _pad_to(p["b1"], (1, H1P)).astype(jnp.float32)
    w2 = _pad_to(p["w2"], (H1P, H2P)).astype(jnp.bfloat16)
    b2 = _pad_to(p["b2"], (1, H2P)).astype(jnp.float32)
    w3 = _pad_to(p["w3"], (H2P, H3P)).astype(jnp.bfloat16)
    b3 = _pad_to(p["b3"], (1, H3P)).astype(jnp.float32)
    w4 = _pad_to(p["w4"], (H3P, OUT)).astype(jnp.bfloat16)
    b4 = p["b4"].astype(jnp.float32)
    return dict(w1=w1, b1=b1, w2=w2, b2=b2, w3=w3, b3=b3, w4=w4, b4=b4)


def reference_forward_f32(x, p):
    """Pure-JAX f32 reference replicating the PyTorch module semantics."""
    h = x.reshape(x.shape[0], -1)
    h = jax.nn.relu(h @ p["w1"] + p["b1"])
    h = jax.nn.relu(h @ p["w2"] + p["b2"])
    h = jax.nn.relu(h @ p["w3"] + p["b3"])
    return jax.nn.softmax(h @ p["w4"] + p["b4"], axis=1)


def reference_forward_mirror(x, prep):
    """Pure-JAX reference with the same bf16-operand / f32-accumulate casts as the kernel."""
    h = x.reshape(x.shape[0], -1).astype(jnp.bfloat16)
    h = jnp.maximum(jnp.dot(h, prep["w1"], preferred_element_type=jnp.float32)
                    + prep["b1"], 0.0)
    h = jnp.maximum(jnp.dot(h.astype(jnp.bfloat16), prep["w2"],
                            preferred_element_type=jnp.float32) + prep["b2"], 0.0)
    h = jnp.maximum(jnp.dot(h.astype(jnp.bfloat16), prep["w3"],
                            preferred_element_type=jnp.float32) + prep["b3"], 0.0)
    logits = jnp.dot(h.astype(jnp.bfloat16), prep["w4"],
                     preferred_element_type=jnp.float32) + prep["b4"]
    return jax.nn.softmax(logits, axis=1)


if __name__ == "__main__":
    key = jax.random.PRNGKey(0)
    k_params, k_x = jax.random.split(key)

    params = init_params(k_params)
    prep = prepare_params(params)
    x = jax.random.normal(k_x, (2, 4, 32, 13), dtype=jnp.float32)

    out = discriminator1_forward(x, prep)
    out = jax.block_until_ready(out)
    assert out.shape == (2, 2)

    # Tight check against a reference using identical bf16/f32 casts.
    ref_mirror = reference_forward_mirror(x, prep)
    assert jnp.allclose(out, ref_mirror, atol=2e-3, rtol=2e-3)

    # Loose check against the full-f32 PyTorch-semantics reference (bf16 weights).
    ref_f32 = reference_forward_f32(x, params)
    assert jnp.allclose(out, ref_f32, atol=3e-2, rtol=3e-2)

    # Rows sum to 1 (softmax).
    assert jnp.allclose(jnp.sum(out, axis=1), jnp.ones((2,)), atol=1e-5)

    print("KERNEL_OK")
</pallas_src>

<mosaic_0001>
module attributes {stable_mosaic.version = 11 : i64} {
  func.func @_mlp_softmax_kernel(%arg0: i32, %arg1: memref<8x1664xbf16, #tpu.memory_space<vmem>>, %arg2: memref<1664x640xbf16, #tpu.memory_space<vmem>>, %arg3: memref<1x640xf32, #tpu.memory_space<vmem>>, %arg4: memref<640x384xbf16, #tpu.memory_space<vmem>>, %arg5: memref<1x384xf32, #tpu.memory_space<vmem>>, %arg6: memref<384x256xbf16, #tpu.memory_space<vmem>>, %arg7: memref<1x256xf32, #tpu.memory_space<vmem>>, %arg8: memref<256x2xbf16, #tpu.memory_space<vmem>>, %arg9: memref<1x2xf32, #tpu.memory_space<vmem>>, %arg10: memref<8x2xf32, #tpu.memory_space<vmem>>) attributes {dimension_semantics = [#tpu.dimension_semantics<parallel>], iteration_bounds = array<i64: 1>, scalar_prefetch = 0 : i64, scratch_operands = 0 : i64, tpu.core_type = #tpu.core_type<tc>, window_params = [{transform_indices = @transform_0, window_bounds = array<i64: 8, 1664>}, {pipeline_mode = #tpu.pipeline_mode<synchronous>, transform_indices = @transform_1, window_bounds = array<i64: 1664, 640>}, {pipeline_mode = #tpu.pipeline_mode<synchronous>, transform_indices = @transform_2, window_bounds = array<i64: 1, 640>}, {pipeline_mode = #tpu.pipeline_mode<synchronous>, transform_indices = @transform_3, window_bounds = array<i64: 640, 384>}, {pipeline_mode = #tpu.pipeline_mode<synchronous>, transform_indices = @transform_4, window_bounds = array<i64: 1, 384>}, {pipeline_mode = #tpu.pipeline_mode<synchronous>, transform_indices = @transform_5, window_bounds = array<i64: 384, 256>}, {pipeline_mode = #tpu.pipeline_mode<synchronous>, transform_indices = @transform_6, window_bounds = array<i64: 1, 256>}, {pipeline_mode = #tpu.pipeline_mode<synchronous>, transform_indices = @transform_7, window_bounds = array<i64: 256, 2>}, {pipeline_mode = #tpu.pipeline_mode<synchronous>, transform_indices = @transform_8, window_bounds = array<i64: 1, 2>}, {transform_indices = @transform_9, window_bounds = array<i64: 8, 2>}]} {
    %c0 = arith.constant 0 : index
    %c0_0 = arith.constant 0 : index
    %0 = vector.load %arg1[%c0, %c0_0] : memref<8x1664xbf16, #tpu.memory_space<vmem>>, vector<8x1664xbf16>
    %c0_1 = arith.constant 0 : index
    %c0_2 = arith.constant 0 : index
    %1 = vector.load %arg2[%c0_1, %c0_2] : memref<1664x640xbf16, #tpu.memory_space<vmem>>, vector<1664x640xbf16>
    %cst = arith.constant dense<0.000000e+00> : vector<8x640xf32>
    %2 = tpu.matmul %0, %1, %cst {dimension_numbers = #tpu.dot_dimension_numbers<[1], [0], [0], [1], [0, 0, 1, 1], [], []>} : vector<8x1664xbf16>, vector<1664x640xbf16>, vector<8x640xf32> -> vector<8x640xf32>
    %c0_3 = arith.constant 0 : index
    %c0_4 = arith.constant 0 : index
    %3 = vector.load %arg3[%c0_3, %c0_4] : memref<1x640xf32, #tpu.memory_space<vmem>>, vector<1x640xf32>
    %4 = vector.broadcast %3 : vector<1x640xf32> to vector<8x640xf32>
    %5 = arith.addf %2, %4 : vector<8x640xf32>
    %cst_5 = arith.constant 0.000000e+00 : f32
    %6 = vector.broadcast %cst_5 : f32 to vector<8x640xf32>
    %7 = arith.maximumf %5, %6 : vector<8x640xf32>
    %8 = arith.truncf %7 : vector<8x640xf32> to vector<8x640xbf16>
    %c0_6 = arith.constant 0 : index
    %c0_7 = arith.constant 0 : index
    %9 = vector.load %arg4[%c0_6, %c0_7] : memref<640x384xbf16, #tpu.memory_space<vmem>>, vector<640x384xbf16>
    %cst_8 = arith.constant dense<0.000000e+00> : vector<8x384xf32>
    %10 = tpu.matmul %8, %9, %cst_8 {dimension_numbers = #tpu.dot_dimension_numbers<[1], [0], [0], [1], [0, 0, 1, 1], [], []>} : vector<8x640xbf16>, vector<640x384xbf16>, vector<8x384xf32> -> vector<8x384xf32>
    %c0_9 = arith.constant 0 : index
    %c0_10 = arith.constant 0 : index
    %11 = vector.load %arg5[%c0_9, %c0_10] : memref<1x384xf32, #tpu.memory_space<vmem>>, vector<1x384xf32>
    %12 = vector.broadcast %11 : vector<1x384xf32> to vector<8x384xf32>
    %13 = arith.addf %10, %12 : vector<8x384xf32>
    %cst_11 = arith.constant 0.000000e+00 : f32
    %14 = vector.broadcast %cst_11 : f32 to vector<8x384xf32>
    %15 = arith.maximumf %13, %14 : vector<8x384xf32>
    %16 = arith.truncf %15 : vector<8x384xf32> to vector<8x384xbf16>
    %c0_12 = arith.constant 0 : index
    %c0_13 = arith.constant 0 : index
    %17 = vector.load %arg6[%c0_12, %c0_13] : memref<384x256xbf16, #tpu.memory_space<vmem>>, vector<384x256xbf16>
    %cst_14 = arith.constant dense<0.000000e+00> : vector<8x256xf32>
    %18 = tpu.matmul %16, %17, %cst_14 {dimension_numbers = #tpu.dot_dimension_numbers<[1], [0], [0], [1], [0, 0, 1, 1], [], []>} : vector<8x384xbf16>, vector<384x256xbf16>, vector<8x256xf32> -> vector<8x256xf32>
    %c0_15 = arith.constant 0 : index
    %c0_16 = arith.constant 0 : index
    %19 = vector.load %arg7[%c0_15, %c0_16] : memref<1x256xf32, #tpu.memory_space<vmem>>, vector<1x256xf32>
    %20 = vector.broadcast %19 : vector<1x256xf32> to vector<8x256xf32>
    %21 = arith.addf %18, %20 : vector<8x256xf32>
    %cst_17 = arith.constant 0.000000e+00 : f32
    %22 = vector.broadcast %cst_17 : f32 to vector<8x256xf32>
    %23 = arith.maximumf %21, %22 : vector<8x256xf32>
    %24 = arith.truncf %23 : vector<8x256xf32> to vector<8x256xbf16>
    %c0_18 = arith.constant 0 : index
    %c0_19 = arith.constant 0 : index
    %25 = vector.load %arg8[%c0_18, %c0_19] : memref<256x2xbf16, #tpu.memory_space<vmem>>, vector<256x2xbf16>
    %cst_20 = arith.constant dense<0.000000e+00> : vector<8x2xf32>
    %26 = tpu.matmul %24, %25, %cst_20 {dimension_numbers = #tpu.dot_dimension_numbers<[1], [0], [0], [1], [0, 0, 1, 1], [], []>} : vector<8x256xbf16>, vector<256x2xbf16>, vector<8x2xf32> -> vector<8x2xf32>
    %c0_21 = arith.constant 0 : index
    %c0_22 = arith.constant 0 : index
    %27 = vector.load %arg9[%c0_21, %c0_22] : memref<1x2xf32, #tpu.memory_space<vmem>>, vector<1x2xf32>
    %28 = vector.broadcast %27 : vector<1x2xf32> to vector<8x2xf32>
    %29 = arith.addf %26, %28 : vector<8x2xf32>
    %30 = vector.extract_strided_slice %29 {offsets = [0, 0], sizes = [8, 1], strides = [1, 1]} : vector<8x2xf32> to vector<8x1xf32>
    %31 = vector.extract_strided_slice %29 {offsets = [0, 1], sizes = [8, 1], strides = [1, 1]} : vector<8x2xf32> to vector<8x1xf32>
    %32 = arith.subf %30, %31 : vector<8x1xf32>
    %cst_23 = arith.constant 0.000000e+00 : f32
    %33 = vector.broadcast %cst_23 : f32 to vector<8x1xf32>
    %34 = arith.subf %33, %32 : vector<8x1xf32>
    %35 = math.exp %34 : vector<8x1xf32>
    %cst_24 = arith.constant 1.000000e+00 : f32
    %36 = vector.broadcast %cst_24 : f32 to vector<8x1xf32>
    %37 = arith.addf %36, %35 : vector<8x1xf32>
    %cst_25 = arith.constant 1.000000e+00 : f32
    %38 = vector.broadcast %cst_25 : f32 to vector<8x1xf32>
    %39 = arith.divf %38, %37 : vector<8x1xf32>
    %40 = tpu.iota {dimensions = array<i32: 1>} : vector<8x2xi32>
    %c0_i32 = arith.constant 0 : i32
    %41 = vector.broadcast %c0_i32 : i32 to vector<8x2xi32>
    %42 = arith.cmpi eq, %40, %41 : vector<8x2xi32>
    %cst_26 = arith.constant 1.000000e+00 : f32
    %43 = vector.broadcast %cst_26 : f32 to vector<8x1xf32>
    %44 = arith.subf %43, %39 : vector<8x1xf32>
    %45 = vector.shape_cast %39 : vector<8x1xf32> to vector<8x1xf32>
    %46 = vector.broadcast %45 : vector<8x1xf32> to vector<8x2xf32>
    %47 = vector.shape_cast %44 : vector<8x1xf32> to vector<8x1xf32>
    %48 = vector.broadcast %47 : vector<8x1xf32> to vector<8x2xf32>
    %49 = arith.select %42, %46, %48 : vector<8x2xi1>, vector<8x2xf32>
    %c0_27 = arith.constant 0 : index
    %c0_28 = arith.constant 0 : index
    %50 = vector.load %arg10[%c0_27, %c0_28] : memref<8x2xf32, #tpu.memory_space<vmem>>, vector<8x2xf32>
    tpu.vector_store %arg10[%c0_27, %c0_28], %49 {strides = array<i32>} : memref<8x2xf32, #tpu.memory_space<vmem>>, vector<8x2xf32>,
    return
  }
  func.func @transform_0(%arg0: i32) -> (i32, i32) {
    %c0_i32 = arith.constant 0 : i32
    %c0_i32_0 = arith.constant 0 : i32
    return %arg0, %c0_i32 : i32, i32
  }
  func.func @transform_1(%arg0: i32) -> (i32, i32) {
    %c0_i32 = arith.constant 0 : i32
    %c0_i32_0 = arith.constant 0 : i32
    %c0_i32_1 = arith.constant 0 : i32
    return %c0_i32, %c0_i32_0 : i32, i32
  }
  func.func @transform_2(%arg0: i32) -> (i32, i32) {
    %c0_i32 = arith.constant 0 : i32
    %c0_i32_0 = arith.constant 0 : i32
    %c0_i32_1 = arith.constant 0 : i32
    return %c0_i32, %c0_i32_0 : i32, i32
  }
  func.func @transform_3(%arg0: i32) -> (i32, i32) {
    %c0_i32 = arith.constant 0 : i32
    %c0_i32_0 = arith.constant 0 : i32
    %c0_i32_1 = arith.constant 0 : i32
    return %c0_i32, %c0_i32_0 : i32, i32
  }
  func.func @transform_4(%arg0: i32) -> (i32, i32) {
    %c0_i32 = arith.constant 0 : i32
    %c0_i32_0 = arith.constant 0 : i32
    %c0_i32_1 = arith.constant 0 : i32
    return %c0_i32, %c0_i32_0 : i32, i32
  }
  func.func @transform_5(%arg0: i32) -> (i32, i32) {
    %c0_i32 = arith.constant 0 : i32
    %c0_i32_0 = arith.constant 0 : i32
    %c0_i32_1 = arith.constant 0 : i32
    return %c0_i32, %c0_i32_0 : i32, i32
  }
  func.func @transform_6(%arg0: i32) -> (i32, i32) {
    %c0_i32 = arith.constant 0 : i32
    %c0_i32_0 = arith.constant 0 : i32
    %c0_i32_1 = arith.constant 0 : i32
    return %c0_i32, %c0_i32_0 : i32, i32
  }
  func.func @transform_7(%arg0: i32) -> (i32, i32) {
    %c0_i32 = arith.constant 0 : i32
    %c0_i32_0 = arith.constant 0 : i32
    %c0_i32_1 = arith.constant 0 : i32
    return %c0_i32, %c0_i32_0 : i32, i32
  }
  func.func @transform_8(%arg0: i32) -> (i32, i32) {
    %c0_i32 = arith.constant 0 : i32
    %c0_i32_0 = arith.constant 0 : i32
    %c0_i32_1 = arith.constant 0 : i32
    return %c0_i32, %c0_i32_0 : i32, i32
  }
  func.func @transform_9(%arg0: i32) -> (i32, i32) {
    %c0_i32 = arith.constant 0 : i32
    %c0_i32_0 = arith.constant 0 : i32
    return %arg0, %c0_i32 : i32, i32
  }
}

</mosaic_0001>

<llo_original>
// kernel: tpu_custom_call.1
$region0: #{tpu_custom_call.1}
  #allocation0 [shape = 'u32[]', space=smem, size = 0x4, offset = 0x4, fixed_abs, tag = 'smem constant byte address 0x4 - core index']
  #allocation1 [shape = 'u32[72,128]{1,0:T(1,128)}', space=vmem, size = 0x9000, scoped, tag = 'internal scratch']
  %s0 = inlined_call_operand.hbm [shape: bf16[8,1664], index: 0, kind: input, shape index: {}]
  %s1 = inlined_call_operand.hbm [shape: bf16[1664,640], index: 1, kind: input, shape index: {}]
  %s2 = inlined_call_operand.hbm [shape: f32[1,640], index: 2, kind: input, shape index: {}]
  %s3 = inlined_call_operand.hbm [shape: bf16[640,384], index: 3, kind: input, shape index: {}]
  %s4 = inlined_call_operand.hbm [shape: f32[1,384], index: 4, kind: input, shape index: {}]
  %s5 = inlined_call_operand.hbm [shape: bf16[384,256], index: 5, kind: input, shape index: {}]
  %s6 = inlined_call_operand.hbm [shape: f32[1,256], index: 6, kind: input, shape index: {}]
  %s7 = inlined_call_operand.vmem [shape: bf16[256,2], index: 7, kind: input, shape index: {}]
  %s8 = inlined_call_operand.hbm [shape: f32[1,2], index: 8, kind: input, shape index: {}]
  %s9 = inlined_call_operand.vmem [shape: f32[8,2], index: 9, kind: output, shape index: {}]
  %s10 = sld [smem:[#allocation0]]
  $region78: #{tpu_custom_call.1} parent=0
    _
  %s12 = ssub.s32 1, %s10
  %s13 = scalar_select 0, %s12, %s10
  $region1: #{tpu_custom_call.1} parent=0
    #allocation2 [shape = 'u8[26624]{0}', space=vmem, size = 0x6800, scoped, tag = 'input window, operand 0, single buffered']
    #allocation3 [shape = 's32[1]{0}', space=sflag, size = 0x4, scoped, tag = 'scoped memory for tpu_custom_call.1']
    #allocation4 [shape = 'u8[2129920]{0}', space=vmem, size = 0x208000, scoped, tag = 'input window, operand 1, single buffered']
    #allocation5 [shape = 's32[1]{0}', space=sflag, size = 0x4, scoped, tag = 'scoped memory for tpu_custom_call.1']
    #allocation6 [shape = 'u8[2560]{0}', space=vmem, size = 0xc00, scoped, tag = 'input window, operand 2, single buffered']
    #allocation7 [shape = 'u8[491520]{0}', space=vmem, size = 0x78000, scoped, tag = 'input window, operand 3, single buffered']
    #allocation8 [shape = 's32[1]{0}', space=sflag, size = 0x4, scoped, tag = 'scoped memory for tpu_custom_call.1']
    #allocation9 [shape = 'u8[1536]{0}', space=vmem, size = 0x800, scoped, tag = 'input window, operand 4, single buffered']
    #allocation10 [shape = 'u8[196608]{0}', space=vmem, size = 0x30000, scoped, tag = 'input window, operand 5, single buffered']
    #allocation11 [shape = 's32[1]{0}', space=sflag, size = 0x4, scoped, tag = 'scoped memory for tpu_custom_call.1']
    #allocation12 [shape = 'u8[1024]{0}', space=vmem, size = 0x400, scoped, tag = 'input window, operand 6, single buffered']
    #allocation13 [shape = 'u8[512]{0}', space=vmem, size = 0x400, scoped, tag = 'input window, operand 8, single buffered']
    #allocation14 [shape = 's32[1]{0}', space=sflag, size = 0x4, scoped, tag = 'scoped memory for tpu_custom_call.1']
    %14 = vsyncpa [#allocation3], 0
    %15 = vsyncpa [#allocation5], 0
    %16 = vsyncpa [#allocation8], 0
    %17 = vsyncpa [#allocation11], 0
    %18 = vsyncpa [#allocation14], 0
    // Predicated region
    $region2: #{tpu_custom_call.1} parent=1 // pred_check
      _
    $region3: #{tpu_custom_call.1} parent=1 // pred_check_branch
      %20 = sbr.rel (0) target = $region5
    $region4: #{tpu_custom_call.1} parent=1 // pred_region
      %22 = vsyncadd [#allocation3], 0
      %s24 = sshll.u32 %s0, 4
      %s25 = int_to_ptr.hbm [resolvable:$true] %s24
      %s26 = sshll.u32 [#allocation2], 4
      %s27 = int_to_ptr.vmem [resolvable:$true] %s26
      %29 = dma.hbm_to_vmem [thread:$0]  %s25, 832, %s27, [#allocation3]
    $region5: #{tpu_custom_call.1} parent=1 // pred_fallthru
      _
    // Predicated region
    $region6: #{tpu_custom_call.1} parent=1 // pred_check
      _
    $region7: #{tpu_custom_call.1} parent=1 // pred_check_branch
      %31 = sbr.rel (0) target = $region9
    $region8: #{tpu_custom_call.1} parent=1 // pred_region
      %33 = vsyncadd [#allocation5], 0
      %s34 = sshll.u32 %s1, 4
      %s35 = int_to_ptr.hbm [resolvable:$true] %s34
      %s36 = sshll.u32 [#allocation4], 4
      %s37 = int_to_ptr.vmem [resolvable:$true] %s36
      %42 = dma.hbm_to_vmem [thread:$0]  %s35, 66560, %s37, [#allocation5], 320, 320, 20
    $region9: #{tpu_custom_call.1} parent=1 // pred_fallthru
      _
    // Predicated region
    $region10: #{tpu_custom_call.1} parent=1 // pred_check
      _
    $region11: #{tpu_custom_call.1} parent=1 // pred_check_branch
      %44 = sbr.rel (0) target = $region13
    $region12: #{tpu_custom_call.1} parent=1 // pred_region
      %46 = vsyncadd [#allocation5], 0
      %s48 = sshll.u32 %s2, 4
      %s49 = int_to_ptr.hbm [resolvable:$true] %s48
      %s50 = sshll.u32 [#allocation6], 4
      %s51 = int_to_ptr.vmem [resolvable:$true] %s50
      %53 = dma.hbm_to_vmem [thread:$0]  %s49, 80, %s51, [#allocation5]
    $region13: #{tpu_custom_call.1} parent=1 // pred_fallthru
      _
    // Predicated region
    $region14: #{tpu_custom_call.1} parent=1 // pred_check
      _
    $region15: #{tpu_custom_call.1} parent=1 // pred_check_branch
      %55 = sbr.rel (0) target = $region17
    $region16: #{tpu_custom_call.1} parent=1 // pred_region
      %57 = vsyncadd [#allocation8], 0
      %s58 = sshll.u32 %s3, 4
      %s59 = int_to_ptr.hbm [resolvable:$true] %s58
      %s60 = sshll.u32 [#allocation7], 4
      %s61 = int_to_ptr.vmem [resolvable:$true] %s60
      %66 = dma.hbm_to_vmem [thread:$0]  %s59, 15360, %s61, [#allocation8], 192, 192, 12
    $region17: #{tpu_custom_call.1} parent=1 // pred_fallthru
      _
    // Predicated region
    $region18: #{tpu_custom_call.1} parent=1 // pred_check
      _
    $region19: #{tpu_custom_call.1} parent=1 // pred_check_branch
      %68 = sbr.rel (0) target = $region21
    $region20: #{tpu_custom_call.1} parent=1 // pred_region
      %70 = vsyncadd [#allocation8], 0
      %s72 = sshll.u32 %s4, 4
      %s73 = int_to_ptr.hbm [resolvable:$true] %s72
      %s74 = sshll.u32 [#allocation9], 4
      %s75 = int_to_ptr.vmem [resolvable:$true] %s74
      %77 = dma.hbm_to_vmem [thread:$0]  %s73, 48, %s75, [#allocation8]
    $region21: #{tpu_custom_call.1} parent=1 // pred_fallthru
      _
    // Predicated region
    $region22: #{tpu_custom_call.1} parent=1 // pred_check
      _
    $region23: #{tpu_custom_call.1} parent=1 // pred_check_branch
      %79 = sbr.rel (0) target = $region25
    $region24: #{tpu_custom_call.1} parent=1 // pred_region
      %81 = vsyncadd [#allocation11], 0
      %s82 = sshll.u32 %s5, 4
      %s83 = int_to_ptr.hbm [resolvable:$true] %s82
      %s84 = sshll.u32 [#allocation10], 4
      %s85 = int_to_ptr.vmem [resolvable:$true] %s84
      %90 = dma.hbm_to_vmem [thread:$0]  %s83, 6144, %s85, [#allocation11], 128, 128, 8
    $region25: #{tpu_custom_call.1} parent=1 // pred_fallthru
      _
    // Predicated region
    $region26: #{tpu_custom_call.1} parent=1 // pred_check
      _
    $region27: #{tpu_custom_call.1} parent=1 // pred_check_branch
      %92 = sbr.rel (0) target = $region29
    $region28: #{tpu_custom_call.1} parent=1 // pred_region
      %94 = vsyncadd [#allocation11], 0
      %s96 = sshll.u32 %s6, 4
      %s97 = int_to_ptr.hbm [resolvable:$true] %s96
      %s98 = sshll.u32 [#allocation12], 4
      %s99 = int_to_ptr.vmem [resolvable:$true] %s98
      %101 = dma.hbm_to_vmem [thread:$0]  %s97, 32, %s99, [#allocation11]
    $region29: #{tpu_custom_call.1} parent=1 // pred_fallthru
      _
    // Predicated region
    $region30: #{tpu_custom_call.1} parent=1 // pred_check
      _
    $region31: #{tpu_custom_call.1} parent=1 // pred_check_branch
      %103 = sbr.rel (0) target = $region33
    $region32: #{tpu_custom_call.1} parent=1 // pred_region
      _
    $region33: #{tpu_custom_call.1} parent=1 // pred_fallthru
      _
    // Predicated region
    $region34: #{tpu_custom_call.1} parent=1 // pred_check
      _
    $region35: #{tpu_custom_call.1} parent=1 // pred_check_branch
      %105 = sbr.rel (0) target = $region37
    $region36: #{tpu_custom_call.1} parent=1 // pred_region
      %107 = vsyncadd [#allocation14], 0
      %s109 = sshll.u32 %s8, 4
      %s110 = int_to_ptr.hbm [resolvable:$true] %s109
      %s111 = sshll.u32 [#allocation13], 4
      %s112 = int_to_ptr.vmem [resolvable:$true] %s111
      %114 = dma.hbm_to_vmem [thread:$0]  %s110, 16, %s112, [#allocation14]
    $region37: #{tpu_custom_call.1} parent=1 // pred_fallthru
      _
    // Predicated region
    $region38: #{tpu_custom_call.1} parent=1 // pred_check
      _
    $region39: #{tpu_custom_call.1} parent=1 // pred_check_branch
      %116 = sbr.rel (0) target = $region41
    $region40: #{tpu_custom_call.1} parent=1 // pred_region
      %118 = dma.done [#allocation3], 832
    $region41: #{tpu_custom_call.1} parent=1 // pred_fallthru
      _
    // Predicated region
    $region42: #{tpu_custom_call.1} parent=1 // pred_check
      _
    $region43: #{tpu_custom_call.1} parent=1 // pred_check_branch
      %120 = sbr.rel (0) target = $region45
    $region44: #{tpu_custom_call.1} parent=1 // pred_region
      %122 = dma.done [#allocation5], 66560
    $region45: #{tpu_custom_call.1} parent=1 // pred_fallthru
      _
    // Predicated region
    $region46: #{tpu_custom_call.1} parent=1 // pred_check
      _
    $region47: #{tpu_custom_call.1} parent=1 // pred_check_branch
      %124 = sbr.rel (0) target = $region49
    $region48: #{tpu_custom_call.1} parent=1 // pred_region
      %126 = dma.done [#allocation5], 80
    $region49: #{tpu_custom_call.1} parent=1 // pred_fallthru
      _
    // Predicated region
    $region50: #{tpu_custom_call.1} parent=1 // pred_check
      _
    $region51: #{tpu_custom_call.1} parent=1 // pred_check_branch
      %128 = sbr.rel (0) target = $region53
    $region52: #{tpu_custom_call.1} parent=1 // pred_region
      %130 = dma.done [#allocation8], 15360
    $region53: #{tpu_custom_call.1} parent=1 // pred_fallthru
      _
    // Predicated region
    $region54: #{tpu_custom_call.1} parent=1 // pred_check
      _
    $region55: #{tpu_custom_call.1} parent=1 // pred_check_branch
      %132 = sbr.rel (0) target = $region57
    $region56: #{tpu_custom_call.1} parent=1 // pred_region
      %134 = dma.done [#allocation8], 48
    $region57: #{tpu_custom_call.1} parent=1 // pred_fallthru
      _
    // Predicated region
    $region58: #{tpu_custom_call.1} parent=1 // pred_check
      _
    $region59: #{tpu_custom_call.1} parent=1 // pred_check_branch
      %136 = sbr.rel (0) target = $region61
    $region60: #{tpu_custom_call.1} parent=1 // pred_region
      %138 = dma.done [#allocation11], 6144
    $region61: #{tpu_custom_call.1} parent=1 // pred_fallthru
      _
    // Predicated region
    $region62: #{tpu_custom_call.1} parent=1 // pred_check
      _
    $region63: #{tpu_custom_call.1} parent=1 // pred_check_branch
      %140 = sbr.rel (0) target = $region65
    $region64: #{tpu_custom_call.1} parent=1 // pred_region
      %142 = dma.done [#allocation11], 32
    $region65: #{tpu_custom_call.1} parent=1 // pred_fallthru
      _
    // Predicated region
    $region66: #{tpu_custom_call.1} parent=1 // pred_check
      _
    $region67: #{tpu_custom_call.1} parent=1 // pred_check_branch
      %144 = sbr.rel (0) target = $region69
    $region68: #{tpu_custom_call.1} parent=1 // pred_region
      %146 = dma.done [#allocation14], 16
    $region69: #{tpu_custom_call.1} parent=1 // pred_fallthru
      _
    %v147 = vld [vmem:[#allocation2] sm:$0xff]
    %v148 = vld [vmem:[#allocation2 + $0x8] sm:$0xff]
    %v149 = vld [vmem:[#allocation2 + $0x10] sm:$0xff]
    %v150 = vld [vmem:[#allocation2 + $0x18] sm:$0xff]
    %v151 = vld [vmem:[#allocation2 + $0x20] sm:$0xff]
    %v152 = vld [vmem:[#allocation2 + $0x28] sm:$0xff]
    %v153 = vld [vmem:[#allocation2 + $0x30] sm:$0xf]
    %v154 = vld [vmem:[#allocation4] sm:$0xff]
    %v155 = vld [vmem:[#allocation4 + $0x8] sm:$0xff]
    %v156 = vld [vmem:[#allocation4 + $0x10] sm:$0xf]
    %v157 = vld [vmem:[#allocation4 + $0x14] sm:$0xff]
    %v158 = vld [vmem:[#allocation4 + $0x1c] sm:$0xff]
    %v159 = vld [vmem:[#allocation4 + $0x24] sm:$0xf]
    %v160 = vld [vmem:[#allocation4 + $0x28] sm:$0xff]
    %v161 = vld [vmem:[#allocation4 + $0x30] sm:$0xff]
    %v162 = vld [vmem:[#allocation4 + $0x38] sm:$0xf]
    %v163 = vld [vmem:[#allocation4 + $0x3c] sm:$0xff]
    %v164 = vld [vmem:[#allocation4 + $0x44] sm:$0xff]
    %v165 = vld [vmem:[#allocation4 + $0x4c] sm:$0xf]
    %v166 = vld [vmem:[#allocation4 + $0x50] sm:$0xff]
    %v167 = vld [vmem:[#allocation4 + $0x58] sm:$0xff]
    %v168 = vld [vmem:[#allocation4 + $0x60] sm:$0xf]
    %v169 = vld [vmem:[#allocation4 + $0x64] sm:$0xff]
    %v170 = vld [vmem:[#allocation4 + $0x6c] sm:$0xff]
    %v171 = vld [vmem:[#allocation4 + $0x74] sm:$0xf]
    %v172 = vld [vmem:[#allocation4 + $0x78] sm:$0xff]
    %v173 = vld [vmem:[#allocation4 + $0x80] sm:$0xff]
    %v174 = vld [vmem:[#allocation4 + $0x88] sm:$0xf]
    %v175 = vld [vmem:[#allocation4 + $0x8c] sm:$0xff]
    %v176 = vld [vmem:[#allocation4 + $0x94] sm:$0xff]
    %v177 = vld [vmem:[#allocation4 + $0x9c] sm:$0xf]
    %v178 = vld [vmem:[#allocation4 + $0xa0] sm:$0xff]
    %v179 = vld [vmem:[#allocation4 + $0xa8] sm:$0xff]
    %v180 = vld [vmem:[#allocation4 + $0xb0] sm:$0xf]
    %v181 = vld [vmem:[#allocation4 + $0xb4] sm:$0xff]
    %v182 = vld [vmem:[#allocation4 + $0xbc] sm:$0xff]
    %v183 = vld [vmem:[#allocation4 + $0xc4] sm:$0xf]
    %v184 = vld [vmem:[#allocation4 + $0xc8] sm:$0xff]
    %v185 = vld [vmem:[#allocation4 + $0xd0] sm:$0xff]
    %v186 = vld [vmem:[#allocation4 + $0xd8] sm:$0xf]
    %v187 = vld [vmem:[#allocation4 + $0xdc] sm:$0xff]
    %v188 = vld [vmem:[#allocation4 + $0xe4] sm:$0xff]
    %v189 = vld [vmem:[#allocation4 + $0xec] sm:$0xf]
    %v190 = vld [vmem:[#allocation4 + $0xf0] sm:$0xff]
    %v191 = vld [vmem:[#allocation4 + $0xf8] sm:$0xff]
    %v192 = vld [vmem:[#allocation4 + $0x100] sm:$0xf]
    %v193 = vld [vmem:[#allocation4 + $0x104] sm:$0xff]
    %v194 = vld [vmem:[#allocation4 + $0x10c] sm:$0xff]
    %v195 = vld [vmem:[#allocation4 + $0x114] sm:$0xf]
    %v196 = vld [vmem:[#allocation4 + $0x118] sm:$0xff]
    %v197 = vld [vmem:[#allocation4 + $0x120] sm:$0xff]
    %v198 = vld [vmem:[#allocation4 + $0x128] sm:$0xf]
    %v199 = vld [vmem:[#allocation4 + $0x12c] sm:$0xff]
    %v200 = vld [vmem:[#allocation4 + $0x134] sm:$0xff]
    %v201 = vld [vmem:[#allocation4 + $0x13c] sm:$0xf]
    %v202 = vld [vmem:[#allocation4 + $0x140] sm:$0xff]
    %v203 = vld [vmem:[#allocation4 + $0x148] sm:$0xff]
    %v204 = vld [vmem:[#allocation4 + $0x150] sm:$0xf]
    %v205 = vld [vmem:[#allocation4 + $0x154] sm:$0xff]
    %v206 = vld [vmem:[#allocation4 + $0x15c] sm:$0xff]
    %v207 = vld [vmem:[#allocation4 + $0x164] sm:$0xf]
    %v208 = vld [vmem:[#allocation4 + $0x168] sm:$0xff]
    %v209 = vld [vmem:[#allocation4 + $0x170] sm:$0xff]
    %v210 = vld [vmem:[#allocation4 + $0x178] sm:$0xf]
    %v211 = vld [vmem:[#allocation4 + $0x17c] sm:$0xff]
    %v212 = vld [vmem:[#allocation4 + $0x184] sm:$0xff]
    %v213 = vld [vmem:[#allocation4 + $0x18c] sm:$0xf]
    %v214 = vld [vmem:[#allocation4 + $0x190] sm:$0xff]
    %v215 = vld [vmem:[#allocation4 + $0x198] sm:$0xff]
    %v216 = vld [vmem:[#allocation4 + $0x1a0] sm:$0xf]
    %v217 = vld [vmem:[#allocation4 + $0x1a4] sm:$0xff]
    %v218 = vld [vmem:[#allocation4 + $0x1ac] sm:$0xff]
    %v219 = vld [vmem:[#allocation4 + $0x1b4] sm:$0xf]
    %v220 = vld [vmem:[#allocation4 + $0x1b8] sm:$0xff]
    %v221 = vld [vmem:[#allocation4 + $0x1c0] sm:$0xff]
    %v222 = vld [vmem:[#allocation4 + $0x1c8] sm:$0xf]
    %v223 = vld [vmem:[#allocation4 + $0x1cc] sm:$0xff]
    %v224 = vld [vmem:[#allocation4 + $0x1d4] sm:$0xff]
    %v225 = vld [vmem:[#allocation4 + $0x1dc] sm:$0xf]
    %v226 = vld [vmem:[#allocation4 + $0x1e0] sm:$0xff]
    %v227 = vld [vmem:[#allocation4 + $0x1e8] sm:$0xff]
    %v228 = vld [vmem:[#allocation4 + $0x1f0] sm:$0xf]
    %v229 = vld [vmem:[#allocation4 + $0x1f4] sm:$0xff]
    %v230 = vld [vmem:[#allocation4 + $0x1fc] sm:$0xff]
    %v231 = vld [vmem:[#allocation4 + $0x204] sm:$0xf]
    %v232 = vld [vmem:[#allocation4 + $0x208] sm:$0xff]
    %v233 = vld [vmem:[#allocation4 + $0x210] sm:$0xff]
    %v234 = vld [vmem:[#allocation4 + $0x218] sm:$0xf]
    %v235 = vld [vmem:[#allocation4 + $0x21c] sm:$0xff]
    %v236 = vld [vmem:[#allocation4 + $0x224] sm:$0xff]
    %v237 = vld [vmem:[#allocation4 + $0x22c] sm:$0xf]
    %v238 = vld [vmem:[#allocation4 + $0x230] sm:$0xff]
    %v239 = vld [vmem:[#allocation4 + $0x238] sm:$0xff]
    %v240 = vld [vmem:[#allocation4 + $0x240] sm:$0xf]
    %v241 = vld [vmem:[#allocation4 + $0x244] sm:$0xff]
    %v242 = vld [vmem:[#allocation4 + $0x24c] sm:$0xff]
    %v243 = vld [vmem:[#allocation4 + $0x254] sm:$0xf]
    %v244 = vld [vmem:[#allocation4 + $0x258] sm:$0xff]
    %v245 = vld [vmem:[#allocation4 + $0x260] sm:$0xff]
    %v246 = vld [vmem:[#allocation4 + $0x268] sm:$0xf]
    %v247 = vld [vmem:[#allocation4 + $0x26c] sm:$0xff]
    %v248 = vld [vmem:[#allocation4 + $0x274] sm:$0xff]
    %v249 = vld [vmem:[#allocation4 + $0x27c] sm:$0xf]
    %v250 = vld [vmem:[#allocation4 + $0x280] sm:$0xff]
    %v251 = vld [vmem:[#allocation4 + $0x288] sm:$0xff]
    %v252 = vld [vmem:[#allocation4 + $0x290] sm:$0xf]
    %v253 = vld [vmem:[#allocation4 + $0x294] sm:$0xff]
    %v254 = vld [vmem:[#allocation4 + $0x29c] sm:$0xff]
    %v255 = vld [vmem:[#allocation4 + $0x2a4] sm:$0xf]
    %v256 = vld [vmem:[#allocation4 + $0x2a8] sm:$0xff]
    %v257 = vld [vmem:[#allocation4 + $0x2b0] sm:$0xff]
    %v258 = vld [vmem:[#allocation4 + $0x2b8] sm:$0xf]
    %v259 = vld [vmem:[#allocation4 + $0x2bc] sm:$0xff]
    %v260 = vld [vmem:[#allocation4 + $0x2c4] sm:$0xff]
    %v261 = vld [vmem:[#allocation4 + $0x2cc] sm:$0xf]
    %v262 = vld [vmem:[#allocation4 + $0x2d0] sm:$0xff]
    %v263 = vld [vmem:[#allocation4 + $0x2d8] sm:$0xff]
    %v264 = vld [vmem:[#allocation4 + $0x2e0] sm:$0xf]
    %v265 = vld [vmem:[#allocation4 + $0x2e4] sm:$0xff]
    %v266 = vld [vmem:[#allocation4 + $0x2ec] sm:$0xff]
    %v267 = vld [vmem:[#allocation4 + $0x2f4] sm:$0xf]
    %v268 = vld [vmem:[#allocation4 + $0x2f8] sm:$0xff]
    %v269 = vld [vmem:[#allocation4 + $0x300] sm:$0xff]
    %v270 = vld [vmem:[#allocation4 + $0x308] sm:$0xf]
    %v271 = vld [vmem:[#allocation4 + $0x30c] sm:$0xff]
    %v272 = vld [vmem:[#allocation4 + $0x314] sm:$0xff]
    %v273 = vld [vmem:[#allocation4 + $0x31c] sm:$0xf]
    %v274 = vld [vmem:[#allocation4 + $0x320] sm:$0xff]
    %v275 = vld [vmem:[#allocation4 + $0x328] sm:$0xff]
    %v276 = vld [vmem:[#allocation4 + $0x330] sm:$0xf]
    %v277 = vld [vmem:[#allocation4 + $0x334] sm:$0xff]
    %v278 = vld [vmem:[#allocation4 + $0x33c] sm:$0xff]
    %v279 = vld [vmem:[#allocation4 + $0x344] sm:$0xf]
    %v280 = vld [vmem:[#allocation4 + $0x348] sm:$0xff]
    %v281 = vld [vmem:[#allocation4 + $0x350] sm:$0xff]
    %v282 = vld [vmem:[#allocation4 + $0x358] sm:$0xf]
    %v283 = vld [vmem:[#allocation4 + $0x35c] sm:$0xff]
    %v284 = vld [vmem:[#allocation4 + $0x364] sm:$0xff]
    %v285 = vld [vmem:[#allocation4 + $0x36c] sm:$0xf]
    %v286 = vld [vmem:[#allocation4 + $0x370] sm:$0xff]
    %v287 = vld [vmem:[#allocation4 + $0x378] sm:$0xff]
    %v288 = vld [vmem:[#allocation4 + $0x380] sm:$0xf]
    %v289 = vld [vmem:[#allocation4 + $0x384] sm:$0xff]
    %v290 = vld [vmem:[#allocation4 + $0x38c] sm:$0xff]
    %v291 = vld [vmem:[#allocation4 + $0x394] sm:$0xf]
    %v292 = vld [vmem:[#allocation4 + $0x398] sm:$0xff]
    %v293 = vld [vmem:[#allocation4 + $0x3a0] sm:$0xff]
    %v294 = vld [vmem:[#allocation4 + $0x3a8] sm:$0xf]
    %v295 = vld [vmem:[#allocation4 + $0x3ac] sm:$0xff]
    %v296 = vld [vmem:[#allocation4 + $0x3b4] sm:$0xff]
    %v297 = vld [vmem:[#allocation4 + $0x3bc] sm:$0xf]
    %v298 = vld [vmem:[#allocation4 + $0x3c0] sm:$0xff]
    %v299 = vld [vmem:[#allocation4 + $0x3c8] sm:$0xff]
    %v300 = vld [vmem:[#allocation4 + $0x3d0] sm:$0xf]
    %v301 = vld [vmem:[#allocation4 + $0x3d4] sm:$0xff]
    %v302 = vld [vmem:[#allocation4 + $0x3dc] sm:$0xff]
    %v303 = vld [vmem:[#allocation4 + $0x3e4] sm:$0xf]
    %v304 = vld [vmem:[#allocation4 + $0x3e8] sm:$0xff]
    %v305 = vld [vmem:[#allocation4 + $0x3f0] sm:$0xff]
    %v306 = vld [vmem:[#allocation4 + $0x3f8] sm:$0xf]
    %v307 = vld [vmem:[#allocation4 + $0x3fc] sm:$0xff]
    %v308 = vld [vmem:[#allocation4 + $0x404] sm:$0xff]
    %v309 = vld [vmem:[#allocation4 + $0x40c] sm:$0xf]
    %v310 = vld [vmem:[#allocation4 + $0x410] sm:$0xff]
    %v311 = vld [vmem:[#allocation4 + $0x418] sm:$0xff]
    %v312 = vld [vmem:[#allocation4 + $0x420] sm:$0xf]
    %v313 = vld [vmem:[#allocation4 + $0x424] sm:$0xff]
    %v314 = vld [vmem:[#allocation4 + $0x42c] sm:$0xff]
    %v315 = vld [vmem:[#allocation4 + $0x434] sm:$0xf]
    %v316 = vld [vmem:[#allocation4 + $0x438] sm:$0xff]
    %v317 = vld [vmem:[#allocation4 + $0x440] sm:$0xff]
    %v318 = vld [vmem:[#allocation4 + $0x448] sm:$0xf]
    %v319 = vld [vmem:[#allocation4 + $0x44c] sm:$0xff]
    %v320 = vld [vmem:[#allocation4 + $0x454] sm:$0xff]
    %v321 = vld [vmem:[#allocation4 + $0x45c] sm:$0xf]
    %v322 = vld [vmem:[#allocation4 + $0x460] sm:$0xff]
    %v323 = vld [vmem:[#allocation4 + $0x468] sm:$0xff]
    %v324 = vld [vmem:[#allocation4 + $0x470] sm:$0xf]
    %v325 = vld [vmem:[#allocation4 + $0x474] sm:$0xff]
    %v326 = vld [vmem:[#allocation4 + $0x47c] sm:$0xff]
    %v327 = vld [vmem:[#allocation4 + $0x484] sm:$0xf]
    %v328 = vld [vmem:[#allocation4 + $0x488] sm:$0xff]
    %v329 = vld [vmem:[#allocation4 + $0x490] sm:$0xff]
    %v330 = vld [vmem:[#allocation4 + $0x498] sm:$0xf]
    %v331 = vld [vmem:[#allocation4 + $0x49c] sm:$0xff]
    %v332 = vld [vmem:[#allocation4 + $0x4a4] sm:$0xff]
    %v333 = vld [vmem:[#allocation4 + $0x4ac] sm:$0xf]
    %v334 = vld [vmem:[#allocation4 + $0x4b0] sm:$0xff]
    %v335 = vld [vmem:[#allocation4 + $0x4b8] sm:$0xff]
    %v336 = vld [vmem:[#allocation4 + $0x4c0] sm:$0xf]
    %v337 = vld [vmem:[#allocation4 + $0x4c4] sm:$0xff]
    %v338 = vld [vmem:[#allocation4 + $0x4cc] sm:$0xff]
    %v339 = vld [vmem:[#allocation4 + $0x4d4] sm:$0xf]
    %v340 = vld [vmem:[#allocation4 + $0x4d8] sm:$0xff]
    %v341 = vld [vmem:[#allocation4 + $0x4e0] sm:$0xff]
    %v342 = vld [vmem:[#allocation4 + $0x4e8] sm:$0xf]
    %v343 = vld [vmem:[#allocation4 + $0x4ec] sm:$0xff]
    %v344 = vld [vmem:[#allocation4 + $0x4f4] sm:$0xff]
    %v345 = vld [vmem:[#allocation4 + $0x4fc] sm:$0xf]
    %v346 = vld [vmem:[#allocation4 + $0x500] sm:$0xff]
    %v347 = vld [vmem:[#allocation4 + $0x508] sm:$0xff]
    %v348 = vld [vmem:[#allocation4 + $0x510] sm:$0xf]
    %v349 = vld [vmem:[#allocation4 + $0x514] sm:$0xff]
    %v350 = vld [vmem:[#allocation4 + $0x51c] sm:$0xff]
    %v351 = vld [vmem:[#allocation4 + $0x524] sm:$0xf]
    %v352 = vld [vmem:[#allocation4 + $0x528] sm:$0xff]
    %v353 = vld [vmem:[#allocation4 + $0x530] sm:$0xff]
    %v354 = vld [vmem:[#allocation4 + $0x538] sm:$0xf]
    %v355 = vld [vmem:[#allocation4 + $0x53c] sm:$0xff]
    %v356 = vld [vmem:[#allocation4 + $0x544] sm:$0xff]
    %v357 = vld [vmem:[#allocation4 + $0x54c] sm:$0xf]
    %v358 = vld [vmem:[#allocation4 + $0x550] sm:$0xff]
    %v359 = vld [vmem:[#allocation4 + $0x558] sm:$0xff]
    %v360 = vld [vmem:[#allocation4 + $0x560] sm:$0xf]
    %v361 = vld [vmem:[#allocation4 + $0x564] sm:$0xff]
    %v362 = vld [vmem:[#allocation4 + $0x56c] sm:$0xff]
    %v363 = vld [vmem:[#allocation4 + $0x574] sm:$0xf]
    %v364 = vld [vmem:[#allocation4 + $0x578] sm:$0xff]
    %v365 = vld [vmem:[#allocation4 + $0x580] sm:$0xff]
    %v366 = vld [vmem:[#allocation4 + $0x588] sm:$0xf]
    %v367 = vld [vmem:[#allocation4 + $0x58c] sm:$0xff]
    %v368 = vld [vmem:[#allocation4 + $0x594] sm:$0xff]
    %v369 = vld [vmem:[#allocation4 + $0x59c] sm:$0xf]
    %v370 = vld [vmem:[#allocation4 + $0x5a0] sm:$0xff]
    %v371 = vld [vmem:[#allocation4 + $0x5a8] sm:$0xff]
    %v372 = vld [vmem:[#allocation4 + $0x5b0] sm:$0xf]
    %v373 = vld [vmem:[#allocation4 + $0x5b4] sm:$0xff]
    %v374 = vld [vmem:[#allocation4 + $0x5bc] sm:$0xff]
    %v375 = vld [vmem:[#allocation4 + $0x5c4] sm:$0xf]
    %v376 = vld [vmem:[#allocation4 + $0x5c8] sm:$0xff]
    %v377 = vld [vmem:[#allocation4 + $0x5d0] sm:$0xff]
    %v378 = vld [vmem:[#allocation4 + $0x5d8] sm:$0xf]
    %v379 = vld [vmem:[#allocation4 + $0x5dc] sm:$0xff]
    %v380 = vld [vmem:[#allocation4 + $0x5e4] sm:$0xff]
    %v381 = vld [vmem:[#allocation4 + $0x5ec] sm:$0xf]
    %v382 = vld [vmem:[#allocation4 + $0x5f0] sm:$0xff]
    %v383 = vld [vmem:[#allocation4 + $0x5f8] sm:$0xff]
    %v384 = vld [vmem:[#allocation4 + $0x600] sm:$0xf]
    %v385 = vld [vmem:[#allocation4 + $0x604] sm:$0xff]
    %v386 = vld [vmem:[#allocation4 + $0x60c] sm:$0xff]
    %v387 = vld [vmem:[#allocation4 + $0x614] sm:$0xf]
    %v388 = vld [vmem:[#allocation4 + $0x618] sm:$0xff]
    %v389 = vld [vmem:[#allocation4 + $0x620] sm:$0xff]
    %v390 = vld [vmem:[#allocation4 + $0x628] sm:$0xf]
    %v391 = vld [vmem:[#allocation4 + $0x62c] sm:$0xff]
    %v392 = vld [vmem:[#allocation4 + $0x634] sm:$0xff]
    %v393 = vld [vmem:[#allocation4 + $0x63c] sm:$0xf]
    %v394 = vld [vmem:[#allocation4 + $0x640] sm:$0xff]
    %v395 = vld [vmem:[#allocation4 + $0x648] sm:$0xff]
    %v396 = vld [vmem:[#allocation4 + $0x650] sm:$0xf]
    %v397 = vld [vmem:[#allocation4 + $0x654] sm:$0xff]
    %v398 = vld [vmem:[#allocation4 + $0x65c] sm:$0xff]
    %v399 = vld [vmem:[#allocation4 + $0x664] sm:$0xf]
    %v400 = vld [vmem:[#allocation4 + $0x668] sm:$0xff]
    %v401 = vld [vmem:[#allocation4 + $0x670] sm:$0xff]
    %v402 = vld [vmem:[#allocation4 + $0x678] sm:$0xf]
    %v403 = vld [vmem:[#allocation4 + $0x67c] sm:$0xff]
    %v404 = vld [vmem:[#allocation4 + $0x684] sm:$0xff]
    %v405 = vld [vmem:[#allocation4 + $0x68c] sm:$0xf]
    %v406 = vld [vmem:[#allocation4 + $0x690] sm:$0xff]
    %v407 = vld [vmem:[#allocation4 + $0x698] sm:$0xff]
    %v408 = vld [vmem:[#allocation4 + $0x6a0] sm:$0xf]
    %v409 = vld [vmem:[#allocation4 + $0x6a4] sm:$0xff]
    %v410 = vld [vmem:[#allocation4 + $0x6ac] sm:$0xff]
    %v411 = vld [vmem:[#allocation4 + $0x6b4] sm:$0xf]
    %v412 = vld [vmem:[#allocation4 + $0x6b8] sm:$0xff]
    %v413 = vld [vmem:[#allocation4 + $0x6c0] sm:$0xff]
    %v414 = vld [vmem:[#allocation4 + $0x6c8] sm:$0xf]
    %v415 = vld [vmem:[#allocation4 + $0x6cc] sm:$0xff]
    %v416 = vld [vmem:[#allocation4 + $0x6d4] sm:$0xff]
    %v417 = vld [vmem:[#allocation4 + $0x6dc] sm:$0xf]
    %v418 = vld [vmem:[#allocation4 + $0x6e0] sm:$0xff]
    %v419 = vld [vmem:[#allocation4 + $0x6e8] sm:$0xff]
    %v420 = vld [vmem:[#allocation4 + $0x6f0] sm:$0xf]
    %v421 = vld [vmem:[#allocation4 + $0x6f4] sm:$0xff]
    %v422 = vld [vmem:[#allocation4 + $0x6fc] sm:$0xff]
    %v423 = vld [vmem:[#allocation4 + $0x704] sm:$0xf]
    %v424 = vld [vmem:[#allocation4 + $0x708] sm:$0xff]
    %v425 = vld [vmem:[#allocation4 + $0x710] sm:$0xff]
    %v426 = vld [vmem:[#allocation4 + $0x718] sm:$0xf]
    %v427 = vld [vmem:[#allocation4 + $0x71c] sm:$0xff]
    %v428 = vld [vmem:[#allocation4 + $0x724] sm:$0xff]
    %v429 = vld [vmem:[#allocation4 + $0x72c] sm:$0xf]
    %v430 = vld [vmem:[#allocation4 + $0x730] sm:$0xff]
    %v431 = vld [vmem:[#allocation4 + $0x738] sm:$0xff]
    %v432 = vld [vmem:[#allocation4 + $0x740] sm:$0xf]
    %v433 = vld [vmem:[#allocation4 + $0x744] sm:$0xff]
    %v434 = vld [vmem:[#allocation4 + $0x74c] sm:$0xff]
    %v435 = vld [vmem:[#allocation4 + $0x754] sm:$0xf]
    %v436 = vld [vmem:[#allocation4 + $0x758] sm:$0xff]
    %v437 = vld [vmem:[#allocation4 + $0x760] sm:$0xff]
    %v438 = vld [vmem:[#allocation4 + $0x768] sm:$0xf]
    %v439 = vld [vmem:[#allocation4 + $0x76c] sm:$0xff]
    %v440 = vld [vmem:[#allocation4 + $0x774] sm:$0xff]
    %v441 = vld [vmem:[#allocation4 + $0x77c] sm:$0xf]
    %v442 = vld [vmem:[#allocation4 + $0x780] sm:$0xff]
    %v443 = vld [vmem:[#allocation4 + $0x788] sm:$0xff]
    %v444 = vld [vmem:[#allocation4 + $0x790] sm:$0xf]
    %v445 = vld [vmem:[#allocation4 + $0x794] sm:$0xff]
    %v446 = vld [vmem:[#allocation4 + $0x79c] sm:$0xff]
    %v447 = vld [vmem:[#allocation4 + $0x7a4] sm:$0xf]
    %v448 = vld [vmem:[#allocation4 + $0x7a8] sm:$0xff]
    %v449 = vld [vmem:[#allocation4 + $0x7b0] sm:$0xff]
    %v450 = vld [vmem:[#allocation4 + $0x7b8] sm:$0xf]
    %v451 = vld [vmem:[#allocation4 + $0x7bc] sm:$0xff]
    %v452 = vld [vmem:[#allocation4 + $0x7c4] sm:$0xff]
    %v453 = vld [vmem:[#allocation4 + $0x7cc] sm:$0xf]
    %v454 = vld [vmem:[#allocation4 + $0x7d0] sm:$0xff]
    %v455 = vld [vmem:[#allocation4 + $0x7d8] sm:$0xff]
    %v456 = vld [vmem:[#allocation4 + $0x7e0] sm:$0xf]
    %v457 = vld [vmem:[#allocation4 + $0x7e4] sm:$0xff]
    %v458 = vld [vmem:[#allocation4 + $0x7ec] sm:$0xff]
    %v459 = vld [vmem:[#allocation4 + $0x7f4] sm:$0xf]
    %v460 = vld [vmem:[#allocation4 + $0x7f8] sm:$0xff]
    %v461 = vld [vmem:[#allocation4 + $0x800] sm:$0xff]
    %v462 = vld [vmem:[#allocation4 + $0x808] sm:$0xf]
    %v463 = vld [vmem:[#allocation4 + $0x80c] sm:$0xff]
    %v464 = vld [vmem:[#allocation4 + $0x814] sm:$0xff]
    %v465 = vld [vmem:[#allocation4 + $0x81c] sm:$0xf]
    %v466 = vld [vmem:[#allocation4 + $0x820] sm:$0xff]
    %v467 = vld [vmem:[#allocation4 + $0x828] sm:$0xff]
    %v468 = vld [vmem:[#allocation4 + $0x830] sm:$0xf]
    %v469 = vld [vmem:[#allocation4 + $0x834] sm:$0xff]
    %v470 = vld [vmem:[#allocation4 + $0x83c] sm:$0xff]
    %v471 = vld [vmem:[#allocation4 + $0x844] sm:$0xf]
    %v472 = vld [vmem:[#allocation4 + $0x848] sm:$0xff]
    %v473 = vld [vmem:[#allocation4 + $0x850] sm:$0xff]
    %v474 = vld [vmem:[#allocation4 + $0x858] sm:$0xf]
    %v475 = vld [vmem:[#allocation4 + $0x85c] sm:$0xff]
    %v476 = vld [vmem:[#allocation4 + $0x864] sm:$0xff]
    %v477 = vld [vmem:[#allocation4 + $0x86c] sm:$0xf]
    %v478 = vld [vmem:[#allocation4 + $0x870] sm:$0xff]
    %v479 = vld [vmem:[#allocation4 + $0x878] sm:$0xff]
    %v480 = vld [vmem:[#allocation4 + $0x880] sm:$0xf]
    %v481 = vld [vmem:[#allocation4 + $0x884] sm:$0xff]
    %v482 = vld [vmem:[#allocation4 + $0x88c] sm:$0xff]
    %v483 = vld [vmem:[#allocation4 + $0x894] sm:$0xf]
    %v484 = vld [vmem:[#allocation4 + $0x898] sm:$0xff]
    %v485 = vld [vmem:[#allocation4 + $0x8a0] sm:$0xff]
    %v486 = vld [vmem:[#allocation4 + $0x8a8] sm:$0xf]
    %v487 = vld [vmem:[#allocation4 + $0x8ac] sm:$0xff]
    %v488 = vld [vmem:[#allocation4 + $0x8b4] sm:$0xff]
    %v489 = vld [vmem:[#allocation4 + $0x8bc] sm:$0xf]
    %v490 = vld [vmem:[#allocation4 + $0x8c0] sm:$0xff]
    %v491 = vld [vmem:[#allocation4 + $0x8c8] sm:$0xff]
    %v492 = vld [vmem:[#allocation4 + $0x8d0] sm:$0xf]
    %v493 = vld [vmem:[#allocation4 + $0x8d4] sm:$0xff]
    %v494 = vld [vmem:[#allocation4 + $0x8dc] sm:$0xff]
    %v495 = vld [vmem:[#allocation4 + $0x8e4] sm:$0xf]
    %v496 = vld [vmem:[#allocation4 + $0x8e8] sm:$0xff]
    %v497 = vld [vmem:[#allocation4 + $0x8f0] sm:$0xff]
    %v498 = vld [vmem:[#allocation4 + $0x8f8] sm:$0xf]
    %v499 = vld [vmem:[#allocation4 + $0x8fc] sm:$0xff]
    %v500 = vld [vmem:[#allocation4 + $0x904] sm:$0xff]
    %v501 = vld [vmem:[#allocation4 + $0x90c] sm:$0xf]
    %v502 = vld [vmem:[#allocation4 + $0x910] sm:$0xff]
    %v503 = vld [vmem:[#allocation4 + $0x918] sm:$0xff]
    %v504 = vld [vmem:[#allocation4 + $0x920] sm:$0xf]
    %v505 = vld [vmem:[#allocation4 + $0x924] sm:$0xff]
    %v506 = vld [vmem:[#allocation4 + $0x92c] sm:$0xff]
    %v507 = vld [vmem:[#allocation4 + $0x934] sm:$0xf]
    %v508 = vld [vmem:[#allocation4 + $0x938] sm:$0xff]
    %v509 = vld [vmem:[#allocation4 + $0x940] sm:$0xff]
    %v510 = vld [vmem:[#allocation4 + $0x948] sm:$0xf]
    %v511 = vld [vmem:[#allocation4 + $0x94c] sm:$0xff]
    %v512 = vld [vmem:[#allocation4 + $0x954] sm:$0xff]
    %v513 = vld [vmem:[#allocation4 + $0x95c] sm:$0xf]
    %v514 = vld [vmem:[#allocation4 + $0x960] sm:$0xff]
    %v515 = vld [vmem:[#allocation4 + $0x968] sm:$0xff]
    %v516 = vld [vmem:[#allocation4 + $0x970] sm:$0xf]
    %v517 = vld [vmem:[#allocation4 + $0x974] sm:$0xff]
    %v518 = vld [vmem:[#allocation4 + $0x97c] sm:$0xff]
    %v519 = vld [vmem:[#allocation4 + $0x984] sm:$0xf]
    %v520 = vld [vmem:[#allocation4 + $0x988] sm:$0xff]
    %v521 = vld [vmem:[#allocation4 + $0x990] sm:$0xff]
    %v522 = vld [vmem:[#allocation4 + $0x998] sm:$0xf]
    %v523 = vld [vmem:[#allocation4 + $0x99c] sm:$0xff]
    %v524 = vld [vmem:[#allocation4 + $0x9a4] sm:$0xff]
    %v525 = vld [vmem:[#allocation4 + $0x9ac] sm:$0xf]
    %v526 = vld [vmem:[#allocation4 + $0x9b0] sm:$0xff]
    %v527 = vld [vmem:[#allocation4 + $0x9b8] sm:$0xff]
    %v528 = vld [vmem:[#allocation4 + $0x9c0] sm:$0xf]
    %v529 = vld [vmem:[#allocation4 + $0x9c4] sm:$0xff]
    %v530 = vld [vmem:[#allocation4 + $0x9cc] sm:$0xff]
    %v531 = vld [vmem:[#allocation4 + $0x9d4] sm:$0xf]
    %v532 = vld [vmem:[#allocation4 + $0x9d8] sm:$0xff]
    %v533 = vld [vmem:[#allocation4 + $0x9e0] sm:$0xff]
    %v534 = vld [vmem:[#allocation4 + $0x9e8] sm:$0xf]
    %v535 = vld [vmem:[#allocation4 + $0x9ec] sm:$0xff]
    %v536 = vld [vmem:[#allocation4 + $0x9f4] sm:$0xff]
    %v537 = vld [vmem:[#allocation4 + $0x9fc] sm:$0xf]
    %v538 = vld [vmem:[#allocation4 + $0xa00] sm:$0xff]
    %v539 = vld [vmem:[#allocation4 + $0xa08] sm:$0xff]
    %v540 = vld [vmem:[#allocation4 + $0xa10] sm:$0xf]
    %v541 = vld [vmem:[#allocation4 + $0xa14] sm:$0xff]
    %v542 = vld [vmem:[#allocation4 + $0xa1c] sm:$0xff]
    %v543 = vld [vmem:[#allocation4 + $0xa24] sm:$0xf]
    %v544 = vld [vmem:[#allocation4 + $0xa28] sm:$0xff]
    %v545 = vld [vmem:[#allocation4 + $0xa30] sm:$0xff]
    %v546 = vld [vmem:[#allocation4 + $0xa38] sm:$0xf]
    %v547 = vld [vmem:[#allocation4 + $0xa3c] sm:$0xff]
    %v548 = vld [vmem:[#allocation4 + $0xa44] sm:$0xff]
    %v549 = vld [vmem:[#allocation4 + $0xa4c] sm:$0xf]
    %v550 = vld [vmem:[#allocation4 + $0xa50] sm:$0xff]
    %v551 = vld [vmem:[#allocation4 + $0xa58] sm:$0xff]
    %v552 = vld [vmem:[#allocation4 + $0xa60] sm:$0xf]
    %v553 = vld [vmem:[#allocation4 + $0xa64] sm:$0xff]
    %v554 = vld [vmem:[#allocation4 + $0xa6c] sm:$0xff]
    %v555 = vld [vmem:[#allocation4 + $0xa74] sm:$0xf]
    %v556 = vld [vmem:[#allocation4 + $0xa78] sm:$0xff]
    %v557 = vld [vmem:[#allocation4 + $0xa80] sm:$0xff]
    %v558 = vld [vmem:[#allocation4 + $0xa88] sm:$0xf]
    %v559 = vld [vmem:[#allocation4 + $0xa8c] sm:$0xff]
    %v560 = vld [vmem:[#allocation4 + $0xa94] sm:$0xff]
    %v561 = vld [vmem:[#allocation4 + $0xa9c] sm:$0xf]
    %v562 = vld [vmem:[#allocation4 + $0xaa0] sm:$0xff]
    %v563 = vld [vmem:[#allocation4 + $0xaa8] sm:$0xff]
    %v564 = vld [vmem:[#allocation4 + $0xab0] sm:$0xf]
    %v565 = vld [vmem:[#allocation4 + $0xab4] sm:$0xff]
    %v566 = vld [vmem:[#allocation4 + $0xabc] sm:$0xff]
    %v567 = vld [vmem:[#allocation4 + $0xac4] sm:$0xf]
    %v568 = vld [vmem:[#allocation4 + $0xac8] sm:$0xff]
    %v569 = vld [vmem:[#allocation4 + $0xad0] sm:$0xff]
    %v570 = vld [vmem:[#allocation4 + $0xad8] sm:$0xf]
    %v571 = vld [vmem:[#allocation4 + $0xadc] sm:$0xff]
    %v572 = vld [vmem:[#allocation4 + $0xae4] sm:$0xff]
    %v573 = vld [vmem:[#allocation4 + $0xaec] sm:$0xf]
    %v574 = vld [vmem:[#allocation4 + $0xaf0] sm:$0xff]
    %v575 = vld [vmem:[#allocation4 + $0xaf8] sm:$0xff]
    %v576 = vld [vmem:[#allocation4 + $0xb00] sm:$0xf]
    %v577 = vld [vmem:[#allocation4 + $0xb04] sm:$0xff]
    %v578 = vld [vmem:[#allocation4 + $0xb0c] sm:$0xff]
    %v579 = vld [vmem:[#allocation4 + $0xb14] sm:$0xf]
    %v580 = vld [vmem:[#allocation4 + $0xb18] sm:$0xff]
    %v581 = vld [vmem:[#allocation4 + $0xb20] sm:$0xff]
    %v582 = vld [vmem:[#allocation4 + $0xb28] sm:$0xf]
    %v583 = vld [vmem:[#allocation4 + $0xb2c] sm:$0xff]
    %v584 = vld [vmem:[#allocation4 + $0xb34] sm:$0xff]
    %v585 = vld [vmem:[#allocation4 + $0xb3c] sm:$0xf]
    %v586 = vld [vmem:[#allocation4 + $0xb40] sm:$0xff]
    %v587 = vld [vmem:[#allocation4 + $0xb48] sm:$0xff]
    %v588 = vld [vmem:[#allocation4 + $0xb50] sm:$0xf]
    %v589 = vld [vmem:[#allocation4 + $0xb54] sm:$0xff]
    %v590 = vld [vmem:[#allocation4 + $0xb5c] sm:$0xff]
    %v591 = vld [vmem:[#allocation4 + $0xb64] sm:$0xf]
    %v592 = vld [vmem:[#allocation4 + $0xb68] sm:$0xff]
    %v593 = vld [vmem:[#allocation4 + $0xb70] sm:$0xff]
    %v594 = vld [vmem:[#allocation4 + $0xb78] sm:$0xf]
    %v595 = vld [vmem:[#allocation4 + $0xb7c] sm:$0xff]
    %v596 = vld [vmem:[#allocation4 + $0xb84] sm:$0xff]
    %v597 = vld [vmem:[#allocation4 + $0xb8c] sm:$0xf]
    %v598 = vld [vmem:[#allocation4 + $0xb90] sm:$0xff]
    %v599 = vld [vmem:[#allocation4 + $0xb98] sm:$0xff]
    %v600 = vld [vmem:[#allocation4 + $0xba0] sm:$0xf]
    %v601 = vld [vmem:[#allocation4 + $0xba4] sm:$0xff]
    %v602 = vld [vmem:[#allocation4 + $0xbac] sm:$0xff]
    %v603 = vld [vmem:[#allocation4 + $0xbb4] sm:$0xf]
    %v604 = vld [vmem:[#allocation4 + $0xbb8] sm:$0xff]
    %v605 = vld [vmem:[#allocation4 + $0xbc0] sm:$0xff]
    %v606 = vld [vmem:[#allocation4 + $0xbc8] sm:$0xf]
    %v607 = vld [vmem:[#allocation4 + $0xbcc] sm:$0xff]
    %v608 = vld [vmem:[#allocation4 + $0xbd4] sm:$0xff]
    %v609 = vld [vmem:[#allocation4 + $0xbdc] sm:$0xf]
    %v610 = vld [vmem:[#allocation4 + $0xbe0] sm:$0xff]
    %v611 = vld [vmem:[#allocation4 + $0xbe8] sm:$0xff]
    %v612 = vld [vmem:[#allocation4 + $0xbf0] sm:$0xf]
    %v613 = vld [vmem:[#allocation4 + $0xbf4] sm:$0xff]
    %v614 = vld [vmem:[#allocation4 + $0xbfc] sm:$0xff]
    %v615 = vld [vmem:[#allocation4 + $0xc04] sm:$0xf]
    %v616 = vld [vmem:[#allocation4 + $0xc08] sm:$0xff]
    %v617 = vld [vmem:[#allocation4 + $0xc10] sm:$0xff]
    %v618 = vld [vmem:[#allocation4 + $0xc18] sm:$0xf]
    %v619 = vld [vmem:[#allocation4 + $0xc1c] sm:$0xff]
    %v620 = vld [vmem:[#allocation4 + $0xc24] sm:$0xff]
    %v621 = vld [vmem:[#allocation4 + $0xc2c] sm:$0xf]
    %v622 = vld [vmem:[#allocation4 + $0xc30] sm:$0xff]
    %v623 = vld [vmem:[#allocation4 + $0xc38] sm:$0xff]
    %v624 = vld [vmem:[#allocation4 + $0xc40] sm:$0xf]
    %v625 = vld [vmem:[#allocation4 + $0xc44] sm:$0xff]
    %v626 = vld [vmem:[#allocation4 + $0xc4c] sm:$0xff]
    %v627 = vld [vmem:[#allocation4 + $0xc54] sm:$0xf]
    %v628 = vld [vmem:[#allocation4 + $0xc58] sm:$0xff]
    %v629 = vld [vmem:[#allocation4 + $0xc60] sm:$0xff]
    %v630 = vld [vmem:[#allocation4 + $0xc68] sm:$0xf]
    %v631 = vld [vmem:[#allocation4 + $0xc6c] sm:$0xff]
    %v632 = vld [vmem:[#allocation4 + $0xc74] sm:$0xff]
    %v633 = vld [vmem:[#allocation4 + $0xc7c] sm:$0xf]
    %v634 = vld [vmem:[#allocation4 + $0xc80] sm:$0xff]
    %v635 = vld [vmem:[#allocation4 + $0xc88] sm:$0xff]
    %v636 = vld [vmem:[#allocation4 + $0xc90] sm:$0xf]
    %v637 = vld [vmem:[#allocation4 + $0xc94] sm:$0xff]
    %v638 = vld [vmem:[#allocation4 + $0xc9c] sm:$0xff]
    %v639 = vld [vmem:[#allocation4 + $0xca4] sm:$0xf]
    %v640 = vld [vmem:[#allocation4 + $0xca8] sm:$0xff]
    %v641 = vld [vmem:[#allocation4 + $0xcb0] sm:$0xff]
    %v642 = vld [vmem:[#allocation4 + $0xcb8] sm:$0xf]
    %v643 = vld [vmem:[#allocation4 + $0xcbc] sm:$0xff]
    %v644 = vld [vmem:[#allocation4 + $0xcc4] sm:$0xff]
    %v645 = vld [vmem:[#allocation4 + $0xccc] sm:$0xf]
    %v646 = vld [vmem:[#allocation4 + $0xcd0] sm:$0xff]
    %v647 = vld [vmem:[#allocation4 + $0xcd8] sm:$0xff]
    %v648 = vld [vmem:[#allocation4 + $0xce0] sm:$0xf]
    %v649 = vld [vmem:[#allocation4 + $0xce4] sm:$0xff]
    %v650 = vld [vmem:[#allocation4 + $0xcec] sm:$0xff]
    %v651 = vld [vmem:[#allocation4 + $0xcf4] sm:$0xf]
    %v652 = vld [vmem:[#allocation4 + $0xcf8] sm:$0xff]
    %v653 = vld [vmem:[#allocation4 + $0xd00] sm:$0xff]
    %v654 = vld [vmem:[#allocation4 + $0xd08] sm:$0xf]
    %v655 = vld [vmem:[#allocation4 + $0xd0c] sm:$0xff]
    %v656 = vld [vmem:[#allocation4 + $0xd14] sm:$0xff]
    %v657 = vld [vmem:[#allocation4 + $0xd1c] sm:$0xf]
    %v658 = vld [vmem:[#allocation4 + $0xd20] sm:$0xff]
    %v659 = vld [vmem:[#allocation4 + $0xd28] sm:$0xff]
    %v660 = vld [vmem:[#allocation4 + $0xd30] sm:$0xf]
    %v661 = vld [vmem:[#allocation4 + $0xd34] sm:$0xff]
    %v662 = vld [vmem:[#allocation4 + $0xd3c] sm:$0xff]
    %v663 = vld [vmem:[#allocation4 + $0xd44] sm:$0xf]
    %v664 = vld [vmem:[#allocation4 + $0xd48] sm:$0xff]
    %v665 = vld [vmem:[#allocation4 + $0xd50] sm:$0xff]
    %v666 = vld [vmem:[#allocation4 + $0xd58] sm:$0xf]
    %v667 = vld [vmem:[#allocation4 + $0xd5c] sm:$0xff]
    %v668 = vld [vmem:[#allocation4 + $0xd64] sm:$0xff]
    %v669 = vld [vmem:[#allocation4 + $0xd6c] sm:$0xf]
    %v670 = vld [vmem:[#allocation4 + $0xd70] sm:$0xff]
    %v671 = vld [vmem:[#allocation4 + $0xd78] sm:$0xff]
    %v672 = vld [vmem:[#allocation4 + $0xd80] sm:$0xf]
    %v673 = vld [vmem:[#allocation4 + $0xd84] sm:$0xff]
    %v674 = vld [vmem:[#allocation4 + $0xd8c] sm:$0xff]
    %v675 = vld [vmem:[#allocation4 + $0xd94] sm:$0xf]
    %v676 = vld [vmem:[#allocation4 + $0xd98] sm:$0xff]
    %v677 = vld [vmem:[#allocation4 + $0xda0] sm:$0xff]
    %v678 = vld [vmem:[#allocation4 + $0xda8] sm:$0xf]
    %v679 = vld [vmem:[#allocation4 + $0xdac] sm:$0xff]
    %v680 = vld [vmem:[#allocation4 + $0xdb4] sm:$0xff]
    %v681 = vld [vmem:[#allocation4 + $0xdbc] sm:$0xf]
    %v682 = vld [vmem:[#allocation4 + $0xdc0] sm:$0xff]
    %v683 = vld [vmem:[#allocation4 + $0xdc8] sm:$0xff]
    %v684 = vld [vmem:[#allocation4 + $0xdd0] sm:$0xf]
    %v685 = vld [vmem:[#allocation4 + $0xdd4] sm:$0xff]
    %v686 = vld [vmem:[#allocation4 + $0xddc] sm:$0xff]
    %v687 = vld [vmem:[#allocation4 + $0xde4] sm:$0xf]
    %v688 = vld [vmem:[#allocation4 + $0xde8] sm:$0xff]
    %v689 = vld [vmem:[#allocation4 + $0xdf0] sm:$0xff]
    %v690 = vld [vmem:[#allocation4 + $0xdf8] sm:$0xf]
    %v691 = vld [vmem:[#allocation4 + $0xdfc] sm:$0xff]
    %v692 = vld [vmem:[#allocation4 + $0xe04] sm:$0xff]
    %v693 = vld [vmem:[#allocation4 + $0xe0c] sm:$0xf]
    %v694 = vld [vmem:[#allocation4 + $0xe10] sm:$0xff]
    %v695 = vld [vmem:[#allocation4 + $0xe18] sm:$0xff]
    %v696 = vld [vmem:[#allocation4 + $0xe20] sm:$0xf]
    %v697 = vld [vmem:[#allocation4 + $0xe24] sm:$0xff]
    %v698 = vld [vmem:[#allocation4 + $0xe2c] sm:$0xff]
    %v699 = vld [vmem:[#allocation4 + $0xe34] sm:$0xf]
    %v700 = vld [vmem:[#allocation4 + $0xe38] sm:$0xff]
    %v701 = vld [vmem:[#allocation4 + $0xe40] sm:$0xff]
    %v702 = vld [vmem:[#allocation4 + $0xe48] sm:$0xf]
    %v703 = vld [vmem:[#allocation4 + $0xe4c] sm:$0xff]
    %v704 = vld [vmem:[#allocation4 + $0xe54] sm:$0xff]
    %v705 = vld [vmem:[#allocation4 + $0xe5c] sm:$0xf]
    %v706 = vld [vmem:[#allocation4 + $0xe60] sm:$0xff]
    %v707 = vld [vmem:[#allocation4 + $0xe68] sm:$0xff]
    %v708 = vld [vmem:[#allocation4 + $0xe70] sm:$0xf]
    %v709 = vld [vmem:[#allocation4 + $0xe74] sm:$0xff]
    %v710 = vld [vmem:[#allocation4 + $0xe7c] sm:$0xff]
    %v711 = vld [vmem:[#allocation4 + $0xe84] sm:$0xf]
    %v712 = vld [vmem:[#allocation4 + $0xe88] sm:$0xff]
    %v713 = vld [vmem:[#allocation4 + $0xe90] sm:$0xff]
    %v714 = vld [vmem:[#allocation4 + $0xe98] sm:$0xf]
    %v715 = vld [vmem:[#allocation4 + $0xe9c] sm:$0xff]
    %v716 = vld [vmem:[#allocation4 + $0xea4] sm:$0xff]
    %v717 = vld [vmem:[#allocation4 + $0xeac] sm:$0xf]
    %v718 = vld [vmem:[#allocation4 + $0xeb0] sm:$0xff]
    %v719 = vld [vmem:[#allocation4 + $0xeb8] sm:$0xff]
    %v720 = vld [vmem:[#allocation4 + $0xec0] sm:$0xf]
    %v721 = vld [vmem:[#allocation4 + $0xec4] sm:$0xff]
    %v722 = vld [vmem:[#allocation4 + $0xecc] sm:$0xff]
    %v723 = vld [vmem:[#allocation4 + $0xed4] sm:$0xf]
    %v724 = vld [vmem:[#allocation4 + $0xed8] sm:$0xff]
    %v725 = vld [vmem:[#allocation4 + $0xee0] sm:$0xff]
    %v726 = vld [vmem:[#allocation4 + $0xee8] sm:$0xf]
    %v727 = vld [vmem:[#allocation4 + $0xeec] sm:$0xff]
    %v728 = vld [vmem:[#allocation4 + $0xef4] sm:$0xff]
    %v729 = vld [vmem:[#allocation4 + $0xefc] sm:$0xf]
    %v730 = vld [vmem:[#allocation4 + $0xf00] sm:$0xff]
    %v731 = vld [vmem:[#allocation4 + $0xf08] sm:$0xff]
    %v732 = vld [vmem:[#allocation4 + $0xf10] sm:$0xf]
    %v733 = vld [vmem:[#allocation4 + $0xf14] sm:$0xff]
    %v734 = vld [vmem:[#allocation4 + $0xf1c] sm:$0xff]
    %v735 = vld [vmem:[#allocation4 + $0xf24] sm:$0xf]
    %v736 = vld [vmem:[#allocation4 + $0xf28] sm:$0xff]
    %v737 = vld [vmem:[#allocation4 + $0xf30] sm:$0xff]
    %v738 = vld [vmem:[#allocation4 + $0xf38] sm:$0xf]
    %v739 = vld [vmem:[#allocation4 + $0xf3c] sm:$0xff]
    %v740 = vld [vmem:[#allocation4 + $0xf44] sm:$0xff]
    %v741 = vld [vmem:[#allocation4 + $0xf4c] sm:$0xf]
    %v742 = vld [vmem:[#allocation4 + $0xf50] sm:$0xff]
    %v743 = vld [vmem:[#allocation4 + $0xf58] sm:$0xff]
    %v744 = vld [vmem:[#allocation4 + $0xf60] sm:$0xf]
    %v745 = vld [vmem:[#allocation4 + $0xf64] sm:$0xff]
    %v746 = vld [vmem:[#allocation4 + $0xf6c] sm:$0xff]
    %v747 = vld [vmem:[#allocation4 + $0xf74] sm:$0xf]
    %v748 = vld [vmem:[#allocation4 + $0xf78] sm:$0xff]
    %v749 = vld [vmem:[#allocation4 + $0xf80] sm:$0xff]
    %v750 = vld [vmem:[#allocation4 + $0xf88] sm:$0xf]
    %v751 = vld [vmem:[#allocation4 + $0xf8c] sm:$0xff]
    %v752 = vld [vmem:[#allocation4 + $0xf94] sm:$0xff]
    %v753 = vld [vmem:[#allocation4 + $0xf9c] sm:$0xf]
    %v754 = vld [vmem:[#allocation4 + $0xfa0] sm:$0xff]
    %v755 = vld [vmem:[#allocation4 + $0xfa8] sm:$0xff]
    %v756 = vld [vmem:[#allocation4 + $0xfb0] sm:$0xf]
    %v757 = vld [vmem:[#allocation4 + $0xfb4] sm:$0xff]
    %v758 = vld [vmem:[#allocation4 + $0xfbc] sm:$0xff]
    %v759 = vld [vmem:[#allocation4 + $0xfc4] sm:$0xf]
    %v760 = vld [vmem:[#allocation4 + $0xfc8] sm:$0xff]
    %v761 = vld [vmem:[#allocation4 + $0xfd0] sm:$0xff]
    %v762 = vld [vmem:[#allocation4 + $0xfd8] sm:$0xf]
    %v763 = vld [vmem:[#allocation4 + $0xfdc] sm:$0xff]
    %v764 = vld [vmem:[#allocation4 + $0xfe4] sm:$0xff]
    %v765 = vld [vmem:[#allocation4 + $0xfec] sm:$0xf]
    %v766 = vld [vmem:[#allocation4 + $0xff0] sm:$0xff]
    %v767 = vld [vmem:[#allocation4 + $0xff8] sm:$0xff]
    %v768 = vld [vmem:[#allocation4 + $0x1000] sm:$0xf]
    %v769 = vld [vmem:[#allocation4 + $0x1004] sm:$0xff]
    %v770 = vld [vmem:[#allocation4 + $0x100c] sm:$0xff]
    %v771 = vld [vmem:[#allocation4 + $0x1014] sm:$0xf]
    %v772 = vld [vmem:[#allocation4 + $0x1018] sm:$0xff]
    %v773 = vld [vmem:[#allocation4 + $0x1020] sm:$0xff]
    %v774 = vld [vmem:[#allocation4 + $0x1028] sm:$0xf]
    %v775 = vld [vmem:[#allocation4 + $0x102c] sm:$0xff]
    %v776 = vld [vmem:[#allocation4 + $0x1034] sm:$0xff]
    %v777 = vld [vmem:[#allocation4 + $0x103c] sm:$0xf]
    %v778 = vld [vmem:[#allocation6] sm:$0x1f]
    %v780 = vperm.slane %v778, 0
    %v781 = vperm.slane %v778, 1
    %v782 = vperm.slane %v778, 2
    %v783 = vperm.slane %v778, 3
    %v784 = vperm.slane %v778, 4
    %v797 = vunpack.c.l.b16 %v147
    %v798 = vunpack.c.h.b16 %v147
    %v799 = vunpack.c.l.b16 %v148
    %v800 = vunpack.c.h.b16 %v148
    %v801 = vunpack.c.l.b16 %v149
    %v802 = vunpack.c.h.b16 %v149
    %v803 = vunpack.c.l.b16 %v150
    %v804 = vunpack.c.h.b16 %v150
    %v805 = vunpack.c.l.b16 %v151
    %v806 = vunpack.c.h.b16 %v151
    %v807 = vunpack.c.l.b16 %v152
    %v808 = vunpack.c.h.b16 %v152
    %v809 = vunpack.c.l.b16 %v153
    %v810 = vpack.c.b16 %v797, %v797
    %v811 = vpack.c.b16 %v798, %v798
    %v812 = vpack.c.b16 %v799, %v799
    %v813 = vpack.c.b16 %v800, %v800
    %v814 = vpack.c.b16 %v801, %v801
    %v815 = vpack.c.b16 %v802, %v802
    %v816 = vpack.c.b16 %v803, %v803
    %v817 = vpack.c.b16 %v804, %v804
    %v818 = vpack.c.b16 %v805, %v805
    %v819 = vpack.c.b16 %v806, %v806
    %v820 = vpack.c.b16 %v807, %v807
    %v821 = vpack.c.b16 %v808, %v808
    %v822 = vpack.c.b16 %v809, %v809
    %v1460 = vunpack.c.l.b16 %v154
    %v1461 = vunpack.c.h.b16 %v154
    %v1462 = vunpack.c.l.b16 %v155
    %v1463 = vunpack.c.h.b16 %v155
    %v1464 = vunpack.c.l.b16 %v156
    %v1465 = vunpack.c.l.b16 %v157
    %v1466 = vunpack.c.h.b16 %v157
    %v1467 = vunpack.c.l.b16 %v158
    %v1468 = vunpack.c.h.b16 %v158
    %v1469 = vunpack.c.l.b16 %v159
    %v1470 = vunpack.c.l.b16 %v160
    %v1471 = vunpack.c.h.b16 %v160
    %v1472 = vunpack.c.l.b16 %v161
    %v1473 = vunpack.c.h.b16 %v161
    %v1474 = vunpack.c.l.b16 %v162
    %v1475 = vunpack.c.l.b16 %v163
    %v1476 = vunpack.c.h.b16 %v163
    %v1477 = vunpack.c.l.b16 %v164
    %v1478 = vunpack.c.h.b16 %v164
    %v1479 = vunpack.c.l.b16 %v165
    %v1480 = vunpack.c.l.b16 %v166
    %v1481 = vunpack.c.h.b16 %v166
    %v1482 = vunpack.c.l.b16 %v167
    %v1483 = vunpack.c.h.b16 %v167
    %v1484 = vunpack.c.l.b16 %v168
    %v1485 = vunpack.c.l.b16 %v169
    %v1486 = vunpack.c.h.b16 %v169
    %v1487 = vunpack.c.l.b16 %v170
    %v1488 = vunpack.c.h.b16 %v170
    %v1489 = vunpack.c.l.b16 %v171
    %v1490 = vunpack.c.l.b16 %v172
    %v1491 = vunpack.c.h.b16 %v172
    %v1492 = vunpack.c.l.b16 %v173
    %v1493 = vunpack.c.h.b16 %v173
    %v1494 = vunpack.c.l.b16 %v174
    %v1495 = vunpack.c.l.b16 %v175
    %v1496 = vunpack.c.h.b16 %v175
    %v1497 = vunpack.c.l.b16 %v176
    %v1498 = vunpack.c.h.b16 %v176
    %v1499 = vunpack.c.l.b16 %v177
    %v1500 = vunpack.c.l.b16 %v178
    %v1501 = vunpack.c.h.b16 %v178
    %v1502 = vunpack.c.l.b16 %v179
    %v1503 = vunpack.c.h.b16 %v179
    %v1504 = vunpack.c.l.b16 %v180
    %v1505 = vunpack.c.l.b16 %v181
    %v1506 = vunpack.c.h.b16 %v181
    %v1507 = vunpack.c.l.b16 %v182
    %v1508 = vunpack.c.h.b16 %v182
    %v1509 = vunpack.c.l.b16 %v183
    %v1510 = vunpack.c.l.b16 %v184
    %v1511 = vunpack.c.h.b16 %v184
    %v1512 = vunpack.c.l.b16 %v185
    %v1513 = vunpack.c.h.b16 %v185
    %v1514 = vunpack.c.l.b16 %v186
    %v1515 = vunpack.c.l.b16 %v187
    %v1516 = vunpack.c.h.b16 %v187
    %v1517 = vunpack.c.l.b16 %v188
    %v1518 = vunpack.c.h.b16 %v188
    %v1519 = vunpack.c.l.b16 %v189
    %v1520 = vunpack.c.l.b16 %v190
    %v1521 = vunpack.c.h.b16 %v190
    %v1522 = vunpack.c.l.b16 %v191
    %v1523 = vunpack.c.h.b16 %v191
    %v1524 = vunpack.c.l.b16 %v192
    %v1525 = vunpack.c.l.b16 %v193
    %v1526 = vunpack.c.h.b16 %v193
    %v1527 = vunpack.c.l.b16 %v194
    %v1528 = vunpack.c.h.b16 %v194
    %v1529 = vunpack.c.l.b16 %v195
    %v1530 = vunpack.c.l.b16 %v196
    %v1531 = vunpack.c.h.b16 %v196
    %v1532 = vunpack.c.l.b16 %v197
    %v1533 = vunpack.c.h.b16 %v197
    %v1534 = vunpack.c.l.b16 %v198
    %v1535 = vunpack.c.l.b16 %v199
    %v1536 = vunpack.c.h.b16 %v199
    %v1537 = vunpack.c.l.b16 %v200
    %v1538 = vunpack.c.h.b16 %v200
    %v1539 = vunpack.c.l.b16 %v201
    %v1540 = vunpack.c.l.b16 %v202
    %v1541 = vunpack.c.h.b16 %v202
    %v1542 = vunpack.c.l.b16 %v203
    %v1543 = vunpack.c.h.b16 %v203
    %v1544 = vunpack.c.l.b16 %v204
    %v1545 = vunpack.c.l.b16 %v205
    %v1546 = vunpack.c.h.b16 %v205
    %v1547 = vunpack.c.l.b16 %v206
    %v1548 = vunpack.c.h.b16 %v206
    %v1549 = vunpack.c.l.b16 %v207
    %v1550 = vunpack.c.l.b16 %v208
    %v1551 = vunpack.c.h.b16 %v208
    %v1552 = vunpack.c.l.b16 %v209
    %v1553 = vunpack.c.h.b16 %v209
    %v1554 = vunpack.c.l.b16 %v210
    %v1555 = vunpack.c.l.b16 %v211
    %v1556 = vunpack.c.h.b16 %v211
    %v1557 = vunpack.c.l.b16 %v212
    %v1558 = vunpack.c.h.b16 %v212
    %v1559 = vunpack.c.l.b16 %v213
    %v1560 = vunpack.c.l.b16 %v214
    %v1561 = vunpack.c.h.b16 %v214
    %v1562 = vunpack.c.l.b16 %v215
    %v1563 = vunpack.c.h.b16 %v215
    %v1564 = vunpack.c.l.b16 %v216
    %v1565 = vunpack.c.l.b16 %v217
    %v1566 = vunpack.c.h.b16 %v217
    %v1567 = vunpack.c.l.b16 %v218
    %v1568 = vunpack.c.h.b16 %v218
    %v1569 = vunpack.c.l.b16 %v219
    %v1570 = vunpack.c.l.b16 %v220
    %v1571 = vunpack.c.h.b16 %v220
    %v1572 = vunpack.c.l.b16 %v221
    %v1573 = vunpack.c.h.b16 %v221
    %v1574 = vunpack.c.l.b16 %v222
    %v1575 = vunpack.c.l.b16 %v223
    %v1576 = vunpack.c.h.b16 %v223
    %v1577 = vunpack.c.l.b16 %v224
    %v1578 = vunpack.c.h.b16 %v224
    %v1579 = vunpack.c.l.b16 %v225
    %v1580 = vunpack.c.l.b16 %v226
    %v1581 = vunpack.c.h.b16 %v226
    %v1582 = vunpack.c.l.b16 %v227
    %v1583 = vunpack.c.h.b16 %v227
    %v1584 = vunpack.c.l.b16 %v228
    %v1585 = vunpack.c.l.b16 %v229
    %v1586 = vunpack.c.h.b16 %v229
    %v1587 = vunpack.c.l.b16 %v230
    %v1588 = vunpack.c.h.b16 %v230
    %v1589 = vunpack.c.l.b16 %v231
    %v1590 = vunpack.c.l.b16 %v232
    %v1591 = vunpack.c.h.b16 %v232
    %v1592 = vunpack.c.l.b16 %v233
    %v1593 = vunpack.c.h.b16 %v233
    %v1594 = vunpack.c.l.b16 %v234
    %v1595 = vunpack.c.l.b16 %v235
    %v1596 = vunpack.c.h.b16 %v235
    %v1597 = vunpack.c.l.b16 %v236
    %v1598 = vunpack.c.h.b16 %v236
    %v1599 = vunpack.c.l.b16 %v237
    %v1600 = vunpack.c.l.b16 %v238
    %v1601 = vunpack.c.h.b16 %v238
    %v1602 = vunpack.c.l.b16 %v239
    %v1603 = vunpack.c.h.b16 %v239
    %v1604 = vunpack.c.l.b16 %v240
    %v1605 = vunpack.c.l.b16 %v241
    %v1606 = vunpack.c.h.b16 %v241
    %v1607 = vunpack.c.l.b16 %v242
    %v1608 = vunpack.c.h.b16 %v242
    %v1609 = vunpack.c.l.b16 %v243
    %v1610 = vunpack.c.l.b16 %v244
    %v1611 = vunpack.c.h.b16 %v244
    %v1612 = vunpack.c.l.b16 %v245
    %v1613 = vunpack.c.h.b16 %v245
    %v1614 = vunpack.c.l.b16 %v246
    %v1615 = vunpack.c.l.b16 %v247
    %v1616 = vunpack.c.h.b16 %v247
    %v1617 = vunpack.c.l.b16 %v248
    %v1618 = vunpack.c.h.b16 %v248
    %v1619 = vunpack.c.l.b16 %v249
    %v1620 = vunpack.c.l.b16 %v250
    %v1621 = vunpack.c.h.b16 %v250
    %v1622 = vunpack.c.l.b16 %v251
    %v1623 = vunpack.c.h.b16 %v251
    %v1624 = vunpack.c.l.b16 %v252
    %v1625 = vunpack.c.l.b16 %v253
    %v1626 = vunpack.c.h.b16 %v253
    %v1627 = vunpack.c.l.b16 %v254
    %v1628 = vunpack.c.h.b16 %v254
    %v1629 = vunpack.c.l.b16 %v255
    %v1630 = vunpack.c.l.b16 %v256
    %v1631 = vunpack.c.h.b16 %v256
    %v1632 = vunpack.c.l.b16 %v257
    %v1633 = vunpack.c.h.b16 %v257
    %v1634 = vunpack.c.l.b16 %v258
    %v1635 = vunpack.c.l.b16 %v259
    %v1636 = vunpack.c.h.b16 %v259
    %v1637 = vunpack.c.l.b16 %v260
    %v1638 = vunpack.c.h.b16 %v260
    %v1639 = vunpack.c.l.b16 %v261
    %v1640 = vunpack.c.l.b16 %v262
    %v1641 = vunpack.c.h.b16 %v262
    %v1642 = vunpack.c.l.b16 %v263
    %v1643 = vunpack.c.h.b16 %v263
    %v1644 = vunpack.c.l.b16 %v264
    %v1645 = vunpack.c.l.b16 %v265
    %v1646 = vunpack.c.h.b16 %v265
    %v1647 = vunpack.c.l.b16 %v266
    %v1648 = vunpack.c.h.b16 %v266
    %v1649 = vunpack.c.l.b16 %v267
    %v1650 = vunpack.c.l.b16 %v268
    %v1651 = vunpack.c.h.b16 %v268
    %v1652 = vunpack.c.l.b16 %v269
    %v1653 = vunpack.c.h.b16 %v269
    %v1654 = vunpack.c.l.b16 %v270
    %v1655 = vunpack.c.l.b16 %v271
    %v1656 = vunpack.c.h.b16 %v271
    %v1657 = vunpack.c.l.b16 %v272
    %v1658 = vunpack.c.h.b16 %v272
    %v1659 = vunpack.c.l.b16 %v273
    %v1660 = vunpack.c.l.b16 %v274
    %v1661 = vunpack.c.h.b16 %v274
    %v1662 = vunpack.c.l.b16 %v275
    %v1663 = vunpack.c.h.b16 %v275
    %v1664 = vunpack.c.l.b16 %v276
    %v1665 = vunpack.c.l.b16 %v277
    %v1666 = vunpack.c.h.b16 %v277
    %v1667 = vunpack.c.l.b16 %v278
    %v1668 = vunpack.c.h.b16 %v278
    %v1669 = vunpack.c.l.b16 %v279
    %v1670 = vunpack.c.l.b16 %v280
    %v1671 = vunpack.c.h.b16 %v280
    %v1672 = vunpack.c.l.b16 %v281
    %v1673 = vunpack.c.h.b16 %v281
    %v1674 = vunpack.c.l.b16 %v282
    %v1675 = vunpack.c.l.b16 %v283
    %v1676 = vunpack.c.h.b16 %v283
    %v1677 = vunpack.c.l.b16 %v284
    %v1678 = vunpack.c.h.b16 %v284
    %v1679 = vunpack.c.l.b16 %v285
    %v1680 = vunpack.c.l.b16 %v286
    %v1681 = vunpack.c.h.b16 %v286
    %v1682 = vunpack.c.l.b16 %v287
    %v1683 = vunpack.c.h.b16 %v287
    %v1684 = vunpack.c.l.b16 %v288
    %v1685 = vunpack.c.l.b16 %v289
    %v1686 = vunpack.c.h.b16 %v289
    %v1687 = vunpack.c.l.b16 %v290
    %v1688 = vunpack.c.h.b16 %v290
    %v1689 = vunpack.c.l.b16 %v291
    %v1690 = vunpack.c.l.b16 %v292
    %v1691 = vunpack.c.h.b16 %v292
    %v1692 = vunpack.c.l.b16 %v293
    %v1693 = vunpack.c.h.b16 %v293
    %v1694 = vunpack.c.l.b16 %v294
    %v1695 = vunpack.c.l.b16 %v295
    %v1696 = vunpack.c.h.b16 %v295
    %v1697 = vunpack.c.l.b16 %v296
    %v1698 = vunpack.c.h.b16 %v296
    %v1699 = vunpack.c.l.b16 %v297
    %v1700 = vunpack.c.l.b16 %v298
    %v1701 = vunpack.c.h.b16 %v298
    %v1702 = vunpack.c.l.b16 %v299
    %v1703 = vunpack.c.h.b16 %v299
    %v1704 = vunpack.c.l.b16 %v300
    %v1705 = vunpack.c.l.b16 %v301
    %v1706 = vunpack.c.h.b16 %v301
    %v1707 = vunpack.c.l.b16 %v302
    %v1708 = vunpack.c.h.b16 %v302
    %v1709 = vunpack.c.l.b16 %v303
    %v1710 = vunpack.c.l.b16 %v304
    %v1711 = vunpack.c.h.b16 %v304
    %v1712 = vunpack.c.l.b16 %v305
    %v1713 = vunpack.c.h.b16 %v305
    %v1714 = vunpack.c.l.b16 %v306
    %v1715 = vunpack.c.l.b16 %v307
    %v1716 = vunpack.c.h.b16 %v307
    %v1717 = vunpack.c.l.b16 %v308
    %v1718 = vunpack.c.h.b16 %v308
    %v1719 = vunpack.c.l.b16 %v309
    %v1720 = vunpack.c.l.b16 %v310
    %v1721 = vunpack.c.h.b16 %v310
    %v1722 = vunpack.c.l.b16 %v311
    %v1723 = vunpack.c.h.b16 %v311
    %v1724 = vunpack.c.l.b16 %v312
    %v1725 = vunpack.c.l.b16 %v313
    %v1726 = vunpack.c.h.b16 %v313
    %v1727 = vunpack.c.l.b16 %v314
    %v1728 = vunpack.c.h.b16 %v314
    %v1729 = vunpack.c.l.b16 %v315
    %v1730 = vunpack.c.l.b16 %v316
    %v1731 = vunpack.c.h.b16 %v316
    %v1732 = vunpack.c.l.b16 %v317
    %v1733 = vunpack.c.h.b16 %v317
    %v1734 = vunpack.c.l.b16 %v318
    %v1735 = vunpack.c.l.b16 %v319
    %v1736 = vunpack.c.h.b16 %v319
    %v1737 = vunpack.c.l.b16 %v320
    %v1738 = vunpack.c.h.b16 %v320
    %v1739 = vunpack.c.l.b16 %v321
    %v1740 = vunpack.c.l.b16 %v322
    %v1741 = vunpack.c.h.b16 %v322
    %v1742 = vunpack.c.l.b16 %v323
    %v1743 = vunpack.c.h.b16 %v323
    %v1744 = vunpack.c.l.b16 %v324
    %v1745 = vunpack.c.l.b16 %v325
    %v1746 = vunpack.c.h.b16 %v325
    %v1747 = vunpack.c.l.b16 %v326
    %v1748 = vunpack.c.h.b16 %v326
    %v1749 = vunpack.c.l.b16 %v327
    %v1750 = vunpack.c.l.b16 %v328
    %v1751 = vunpack.c.h.b16 %v328
    %v1752 = vunpack.c.l.b16 %v329
    %v1753 = vunpack.c.h.b16 %v329
    %v1754 = vunpack.c.l.b16 %v330
    %v1755 = vunpack.c.l.b16 %v331
    %v1756 = vunpack.c.h.b16 %v331
    %v1757 = vunpack.c.l.b16 %v332
    %v1758 = vunpack.c.h.b16 %v332
    %v1759 = vunpack.c.l.b16 %v333
    %v1760 = vunpack.c.l.b16 %v334
    %v1761 = vunpack.c.h.b16 %v334
    %v1762 = vunpack.c.l.b16 %v335
    %v1763 = vunpack.c.h.b16 %v335
    %v1764 = vunpack.c.l.b16 %v336
    %v1765 = vunpack.c.l.b16 %v337
    %v1766 = vunpack.c.h.b16 %v337
    %v1767 = vunpack.c.l.b16 %v338
    %v1768 = vunpack.c.h.b16 %v338
    %v1769 = vunpack.c.l.b16 %v339
    %v1770 = vunpack.c.l.b16 %v340
    %v1771 = vunpack.c.h.b16 %v340
    %v1772 = vunpack.c.l.b16 %v341
    %v1773 = vunpack.c.h.b16 %v341
    %v1774 = vunpack.c.l.b16 %v342
    %v1775 = vunpack.c.l.b16 %v343
    %v1776 = vunpack.c.h.b16 %v343
    %v1777 = vunpack.c.l.b16 %v344
    %v1778 = vunpack.c.h.b16 %v344
    %v1779 = vunpack.c.l.b16 %v345
    %v1780 = vunpack.c.l.b16 %v346
    %v1781 = vunpack.c.h.b16 %v346
    %v1782 = vunpack.c.l.b16 %v347
    %v1783 = vunpack.c.h.b16 %v347
    %v1784 = vunpack.c.l.b16 %v348
    %v1785 = vunpack.c.l.b16 %v349
    %v1786 = vunpack.c.h.b16 %v349
    %v1787 = vunpack.c.l.b16 %v350
    %v1788 = vunpack.c.h.b16 %v350
    %v1789 = vunpack.c.l.b16 %v351
    %v1790 = vunpack.c.l.b16 %v352
    %v1791 = vunpack.c.h.b16 %v352
    %v1792 = vunpack.c.l.b16 %v353
    %v1793 = vunpack.c.h.b16 %v353
    %v1794 = vunpack.c.l.b16 %v354
    %v1795 = vunpack.c.l.b16 %v355
    %v1796 = vunpack.c.h.b16 %v355
    %v1797 = vunpack.c.l.b16 %v356
    %v1798 = vunpack.c.h.b16 %v356
    %v1799 = vunpack.c.l.b16 %v357
    %v1800 = vunpack.c.l.b16 %v358
    %v1801 = vunpack.c.h.b16 %v358
    %v1802 = vunpack.c.l.b16 %v359
    %v1803 = vunpack.c.h.b16 %v359
    %v1804 = vunpack.c.l.b16 %v360
    %v1805 = vunpack.c.l.b16 %v361
    %v1806 = vunpack.c.h.b16 %v361
    %v1807 = vunpack.c.l.b16 %v362
    %v1808 = vunpack.c.h.b16 %v362
    %v1809 = vunpack.c.l.b16 %v363
    %v1810 = vunpack.c.l.b16 %v364
    %v1811 = vunpack.c.h.b16 %v364
    %v1812 = vunpack.c.l.b16 %v365
    %v1813 = vunpack.c.h.b16 %v365
    %v1814 = vunpack.c.l.b16 %v366
    %v1815 = vunpack.c.l.b16 %v367
    %v1816 = vunpack.c.h.b16 %v367
    %v1817 = vunpack.c.l.b16 %v368
    %v1818 = vunpack.c.h.b16 %v368
    %v1819 = vunpack.c.l.b16 %v369
    %v1820 = vunpack.c.l.b16 %v370
    %v1821 = vunpack.c.h.b16 %v370
    %v1822 = vunpack.c.l.b16 %v371
    %v1823 = vunpack.c.h.b16 %v371
    %v1824 = vunpack.c.l.b16 %v372
    %v1825 = vunpack.c.l.b16 %v373
    %v1826 = vunpack.c.h.b16 %v373
    %v1827 = vunpack.c.l.b16 %v374
    %v1828 = vunpack.c.h.b16 %v374
    %v1829 = vunpack.c.l.b16 %v375
    %v1830 = vunpack.c.l.b16 %v376
    %v1831 = vunpack.c.h.b16 %v376
    %v1832 = vunpack.c.l.b16 %v377
    %v1833 = vunpack.c.h.b16 %v377
    %v1834 = vunpack.c.l.b16 %v378
    %v1835 = vunpack.c.l.b16 %v379
    %v1836 = vunpack.c.h.b16 %v379
    %v1837 = vunpack.c.l.b16 %v380
    %v1838 = vunpack.c.h.b16 %v380
    %v1839 = vunpack.c.l.b16 %v381
    %v1840 = vunpack.c.l.b16 %v382
    %v1841 = vunpack.c.h.b16 %v382
    %v1842 = vunpack.c.l.b16 %v383
    %v1843 = vunpack.c.h.b16 %v383
    %v1844 = vunpack.c.l.b16 %v384
    %v1845 = vunpack.c.l.b16 %v385
    %v1846 = vunpack.c.h.b16 %v385
    %v1847 = vunpack.c.l.b16 %v386
    %v1848 = vunpack.c.h.b16 %v386
    %v1849 = vunpack.c.l.b16 %v387
    %v1850 = vunpack.c.l.b16 %v388
    %v1851 = vunpack.c.h.b16 %v388
    %v1852 = vunpack.c.l.b16 %v389
    %v1853 = vunpack.c.h.b16 %v389
    %v1854 = vunpack.c.l.b16 %v390
    %v1855 = vunpack.c.l.b16 %v391
    %v1856 = vunpack.c.h.b16 %v391
    %v1857 = vunpack.c.l.b16 %v392
    %v1858 = vunpack.c.h.b16 %v392
    %v1859 = vunpack.c.l.b16 %v393
    %v1860 = vunpack.c.l.b16 %v394
    %v1861 = vunpack.c.h.b16 %v394
    %v1862 = vunpack.c.l.b16 %v395
    %v1863 = vunpack.c.h.b16 %v395
    %v1864 = vunpack.c.l.b16 %v396
    %v1865 = vunpack.c.l.b16 %v397
    %v1866 = vunpack.c.h.b16 %v397
    %v1867 = vunpack.c.l.b16 %v398
    %v1868 = vunpack.c.h.b16 %v398
    %v1869 = vunpack.c.l.b16 %v399
    %v1870 = vunpack.c.l.b16 %v400
    %v1871 = vunpack.c.h.b16 %v400
    %v1872 = vunpack.c.l.b16 %v401
    %v1873 = vunpack.c.h.b16 %v401
    %v1874 = vunpack.c.l.b16 %v402
    %v1875 = vunpack.c.l.b16 %v403
    %v1876 = vunpack.c.h.b16 %v403
    %v1877 = vunpack.c.l.b16 %v404
    %v1878 = vunpack.c.h.b16 %v404
    %v1879 = vunpack.c.l.b16 %v405
    %v1880 = vunpack.c.l.b16 %v406
    %v1881 = vunpack.c.h.b16 %v406
    %v1882 = vunpack.c.l.b16 %v407
    %v1883 = vunpack.c.h.b16 %v407
    %v1884 = vunpack.c.l.b16 %v408
    %v1885 = vunpack.c.l.b16 %v409
    %v1886 = vunpack.c.h.b16 %v409
    %v1887 = vunpack.c.l.b16 %v410
    %v1888 = vunpack.c.h.b16 %v410
    %v1889 = vunpack.c.l.b16 %v411
    %v1890 = vunpack.c.l.b16 %v412
    %v1891 = vunpack.c.h.b16 %v412
    %v1892 = vunpack.c.l.b16 %v413
    %v1893 = vunpack.c.h.b16 %v413
    %v1894 = vunpack.c.l.b16 %v414
    %v1895 = vunpack.c.l.b16 %v415
    %v1896 = vunpack.c.h.b16 %v415
    %v1897 = vunpack.c.l.b16 %v416
    %v1898 = vunpack.c.h.b16 %v416
    %v1899 = vunpack.c.l.b16 %v417
    %v1900 = vunpack.c.l.b16 %v418
    %v1901 = vunpack.c.h.b16 %v418
    %v1902 = vunpack.c.l.b16 %v419
    %v1903 = vunpack.c.h.b16 %v419
    %v1904 = vunpack.c.l.b16 %v420
    %v1905 = vunpack.c.l.b16 %v421
    %v1906 = vunpack.c.h.b16 %v421
    %v1907 = vunpack.c.l.b16 %v422
    %v1908 = vunpack.c.h.b16 %v422
    %v1909 = vunpack.c.l.b16 %v423
    %v1910 = vunpack.c.l.b16 %v424
    %v1911 = vunpack.c.h.b16 %v424
    %v1912 = vunpack.c.l.b16 %v425
    %v1913 = vunpack.c.h.b16 %v425
    %v1914 = vunpack.c.l.b16 %v426
    %v1915 = vunpack.c.l.b16 %v427
    %v1916 = vunpack.c.h.b16 %v427
    %v1917 = vunpack.c.l.b16 %v428
    %v1918 = vunpack.c.h.b16 %v428
    %v1919 = vunpack.c.l.b16 %v429
    %v1920 = vunpack.c.l.b16 %v430
    %v1921 = vunpack.c.h.b16 %v430
    %v1922 = vunpack.c.l.b16 %v431
    %v1923 = vunpack.c.h.b16 %v431
    %v1924 = vunpack.c.l.b16 %v432
    %v1925 = vunpack.c.l.b16 %v433
    %v1926 = vunpack.c.h.b16 %v433
    %v1927 = vunpack.c.l.b16 %v434
    %v1928 = vunpack.c.h.b16 %v434
    %v1929 = vunpack.c.l.b16 %v435
    %v1930 = vunpack.c.l.b16 %v436
    %v1931 = vunpack.c.h.b16 %v436
    %v1932 = vunpack.c.l.b16 %v437
    %v1933 = vunpack.c.h.b16 %v437
    %v1934 = vunpack.c.l.b16 %v438
    %v1935 = vunpack.c.l.b16 %v439
    %v1936 = vunpack.c.h.b16 %v439
    %v1937 = vunpack.c.l.b16 %v440
    %v1938 = vunpack.c.h.b16 %v440
    %v1939 = vunpack.c.l.b16 %v441
    %v1940 = vunpack.c.l.b16 %v442
    %v1941 = vunpack.c.h.b16 %v442
    %v1942 = vunpack.c.l.b16 %v443
    %v1943 = vunpack.c.h.b16 %v443
    %v1944 = vunpack.c.l.b16 %v444
    %v1945 = vunpack.c.l.b16 %v445
    %v1946 = vunpack.c.h.b16 %v445
    %v1947 = vunpack.c.l.b16 %v446
    %v1948 = vunpack.c.h.b16 %v446
    %v1949 = vunpack.c.l.b16 %v447
    %v1950 = vunpack.c.l.b16 %v448
    %v1951 = vunpack.c.h.b16 %v448
    %v1952 = vunpack.c.l.b16 %v449
    %v1953 = vunpack.c.h.b16 %v449
    %v1954 = vunpack.c.l.b16 %v450
    %v1955 = vunpack.c.l.b16 %v451
    %v1956 = vunpack.c.h.b16 %v451
    %v1957 = vunpack.c.l.b16 %v452
    %v1958 = vunpack.c.h.b16 %v452
    %v1959 = vunpack.c.l.b16 %v453
    %v1960 = vunpack.c.l.b16 %v454
    %v1961 = vunpack.c.h.b16 %v454
    %v1962 = vunpack.c.l.b16 %v455
    %v1963 = vunpack.c.h.b16 %v455
    %v1964 = vunpack.c.l.b16 %v456
    %v1965 = vunpack.c.l.b16 %v457
    %v1966 = vunpack.c.h.b16 %v457
    %v1967 = vunpack.c.l.b16 %v458
    %v1968 = vunpack.c.h.b16 %v458
    %v1969 = vunpack.c.l.b16 %v459
    %v1970 = vunpack.c.l.b16 %v460
    %v1971 = vunpack.c.h.b16 %v460
    %v1972 = vunpack.c.l.b16 %v461
    %v1973 = vunpack.c.h.b16 %v461
    %v1974 = vunpack.c.l.b16 %v462
    %v1975 = vunpack.c.l.b16 %v463
    %v1976 = vunpack.c.h.b16 %v463
    %v1977 = vunpack.c.l.b16 %v464
    %v1978 = vunpack.c.h.b16 %v464
    %v1979 = vunpack.c.l.b16 %v465
    %v1980 = vunpack.c.l.b16 %v466
    %v1981 = vunpack.c.h.b16 %v466
    %v1982 = vunpack.c.l.b16 %v467
    %v1983 = vunpack.c.h.b16 %v467
    %v1984 = vunpack.c.l.b16 %v468
    %v1985 = vunpack.c.l.b16 %v469
    %v1986 = vunpack.c.h.b16 %v469
    %v1987 = vunpack.c.l.b16 %v470
    %v1988 = vunpack.c.h.b16 %v470
    %v1989 = vunpack.c.l.b16 %v471
    %v1990 = vunpack.c.l.b16 %v472
    %v1991 = vunpack.c.h.b16 %v472
    %v1992 = vunpack.c.l.b16 %v473
    %v1993 = vunpack.c.h.b16 %v473
    %v1994 = vunpack.c.l.b16 %v474
    %v1995 = vunpack.c.l.b16 %v475
    %v1996 = vunpack.c.h.b16 %v475
    %v1997 = vunpack.c.l.b16 %v476
    %v1998 = vunpack.c.h.b16 %v476
    %v1999 = vunpack.c.l.b16 %v477
    %v2000 = vunpack.c.l.b16 %v478
    %v2001 = vunpack.c.h.b16 %v478
    %v2002 = vunpack.c.l.b16 %v479
    %v2003 = vunpack.c.h.b16 %v479
    %v2004 = vunpack.c.l.b16 %v480
    %v2005 = vunpack.c.l.b16 %v481
    %v2006 = vunpack.c.h.b16 %v481
    %v2007 = vunpack.c.l.b16 %v482
    %v2008 = vunpack.c.h.b16 %v482
    %v2009 = vunpack.c.l.b16 %v483
    %v2010 = vunpack.c.l.b16 %v484
    %v2011 = vunpack.c.h.b16 %v484
    %v2012 = vunpack.c.l.b16 %v485
    %v2013 = vunpack.c.h.b16 %v485
    %v2014 = vunpack.c.l.b16 %v486
    %v2015 = vunpack.c.l.b16 %v487
    %v2016 = vunpack.c.h.b16 %v487
    %v2017 = vunpack.c.l.b16 %v488
    %v2018 = vunpack.c.h.b16 %v488
    %v2019 = vunpack.c.l.b16 %v489
    %v2020 = vunpack.c.l.b16 %v490
    %v2021 = vunpack.c.h.b16 %v490
    %v2022 = vunpack.c.l.b16 %v491
    %v2023 = vunpack.c.h.b16 %v491
    %v2024 = vunpack.c.l.b16 %v492
    %v2025 = vunpack.c.l.b16 %v493
    %v2026 = vunpack.c.h.b16 %v493
    %v2027 = vunpack.c.l.b16 %v494
    %v2028 = vunpack.c.h.b16 %v494
    %v2029 = vunpack.c.l.b16 %v495
    %v2030 = vunpack.c.l.b16 %v496
    %v2031 = vunpack.c.h.b16 %v496
    %v2032 = vunpack.c.l.b16 %v497
    %v2033 = vunpack.c.h.b16 %v497
    %v2034 = vunpack.c.l.b16 %v498
    %v2035 = vunpack.c.l.b16 %v499
    %v2036 = vunpack.c.h.b16 %v499
    %v2037 = vunpack.c.l.b16 %v500
    %v2038 = vunpack.c.h.b16 %v500
    %v2039 = vunpack.c.l.b16 %v501
    %v2040 = vunpack.c.l.b16 %v502
    %v2041 = vunpack.c.h.b16 %v502
    %v2042 = vunpack.c.l.b16 %v503
    %v2043 = vunpack.c.h.b16 %v503
    %v2044 = vunpack.c.l.b16 %v504
    %v2045 = vunpack.c.l.b16 %v505
    %v2046 = vunpack.c.h.b16 %v505
    %v2047 = vunpack.c.l.b16 %v506
    %v2048 = vunpack.c.h.b16 %v506
    %v2049 = vunpack.c.l.b16 %v507
    %v2050 = vunpack.c.l.b16 %v508
    %v2051 = vunpack.c.h.b16 %v508
    %v2052 = vunpack.c.l.b16 %v509
    %v2053 = vunpack.c.h.b16 %v509
    %v2054 = vunpack.c.l.b16 %v510
    %v2055 = vunpack.c.l.b16 %v511
    %v2056 = vunpack.c.h.b16 %v511
    %v2057 = vunpack.c.l.b16 %v512
    %v2058 = vunpack.c.h.b16 %v512
    %v2059 = vunpack.c.l.b16 %v513
    %v2060 = vunpack.c.l.b16 %v514
    %v2061 = vunpack.c.h.b16 %v514
    %v2062 = vunpack.c.l.b16 %v515
    %v2063 = vunpack.c.h.b16 %v515
    %v2064 = vunpack.c.l.b16 %v516
    %v2065 = vunpack.c.l.b16 %v517
    %v2066 = vunpack.c.h.b16 %v517
    %v2067 = vunpack.c.l.b16 %v518
    %v2068 = vunpack.c.h.b16 %v518
    %v2069 = vunpack.c.l.b16 %v519
    %v2070 = vunpack.c.l.b16 %v520
    %v2071 = vunpack.c.h.b16 %v520
    %v2072 = vunpack.c.l.b16 %v521
    %v2073 = vunpack.c.h.b16 %v521
    %v2074 = vunpack.c.l.b16 %v522
    %v2075 = vunpack.c.l.b16 %v523
    %v2076 = vunpack.c.h.b16 %v523
    %v2077 = vunpack.c.l.b16 %v524
    %v2078 = vunpack.c.h.b16 %v524
    %v2079 = vunpack.c.l.b16 %v525
    %v2080 = vunpack.c.l.b16 %v526
    %v2081 = vunpack.c.h.b16 %v526
    %v2082 = vunpack.c.l.b16 %v527
    %v2083 = vunpack.c.h.b16 %v527
    %v2084 = vunpack.c.l.b16 %v528
    %v2085 = vunpack.c.l.b16 %v529
    %v2086 = vunpack.c.h.b16 %v529
    %v2087 = vunpack.c.l.b16 %v530
    %v2088 = vunpack.c.h.b16 %v530
    %v2089 = vunpack.c.l.b16 %v531
    %v2090 = vunpack.c.l.b16 %v532
    %v2091 = vunpack.c.h.b16 %v532
    %v2092 = vunpack.c.l.b16 %v533
    %v2093 = vunpack.c.h.b16 %v533
    %v2094 = vunpack.c.l.b16 %v534
    %v2095 = vunpack.c.l.b16 %v535
    %v2096 = vunpack.c.h.b16 %v535
    %v2097 = vunpack.c.l.b16 %v536
    %v2098 = vunpack.c.h.b16 %v536
    %v2099 = vunpack.c.l.b16 %v537
    %v2100 = vunpack.c.l.b16 %v538
    %v2101 = vunpack.c.h.b16 %v538
    %v2102 = vunpack.c.l.b16 %v539
    %v2103 = vunpack.c.h.b16 %v539
    %v2104 = vunpack.c.l.b16 %v540
    %v2105 = vunpack.c.l.b16 %v541
    %v2106 = vunpack.c.h.b16 %v541
    %v2107 = vunpack.c.l.b16 %v542
    %v2108 = vunpack.c.h.b16 %v542
    %v2109 = vunpack.c.l.b16 %v543
    %v2110 = vunpack.c.l.b16 %v544
    %v2111 = vunpack.c.h.b16 %v544
    %v2112 = vunpack.c.l.b16 %v545
    %v2113 = vunpack.c.h.b16 %v545
    %v2114 = vunpack.c.l.b16 %v546
    %v2115 = vunpack.c.l.b16 %v547
    %v2116 = vunpack.c.h.b16 %v547
    %v2117 = vunpack.c.l.b16 %v548
    %v2118 = vunpack.c.h.b16 %v548
    %v2119 = vunpack.c.l.b16 %v549
    %v2120 = vunpack.c.l.b16 %v550
    %v2121 = vunpack.c.h.b16 %v550
    %v2122 = vunpack.c.l.b16 %v551
    %v2123 = vunpack.c.h.b16 %v551
    %v2124 = vunpack.c.l.b16 %v552
    %v2125 = vunpack.c.l.b16 %v553
    %v2126 = vunpack.c.h.b16 %v553
    %v2127 = vunpack.c.l.b16 %v554
    %v2128 = vunpack.c.h.b16 %v554
    %v2129 = vunpack.c.l.b16 %v555
    %v2130 = vunpack.c.l.b16 %v556
    %v2131 = vunpack.c.h.b16 %v556
    %v2132 = vunpack.c.l.b16 %v557
    %v2133 = vunpack.c.h.b16 %v557
    %v2134 = vunpack.c.l.b16 %v558
    %v2135 = vunpack.c.l.b16 %v559
    %v2136 = vunpack.c.h.b16 %v559
    %v2137 = vunpack.c.l.b16 %v560
    %v2138 = vunpack.c.h.b16 %v560
    %v2139 = vunpack.c.l.b16 %v561
    %v2140 = vunpack.c.l.b16 %v562
    %v2141 = vunpack.c.h.b16 %v562
    %v2142 = vunpack.c.l.b16 %v563
    %v2143 = vunpack.c.h.b16 %v563
    %v2144 = vunpack.c.l.b16 %v564
    %v2145 = vunpack.c.l.b16 %v565
    %v2146 = vunpack.c.h.b16 %v565
    %v2147 = vunpack.c.l.b16 %v566
    %v2148 = vunpack.c.h.b16 %v566
    %v2149 = vunpack.c.l.b16 %v567
    %v2150 = vunpack.c.l.b16 %v568
    %v2151 = vunpack.c.h.b16 %v568
    %v2152 = vunpack.c.l.b16 %v569
    %v2153 = vunpack.c.h.b16 %v569
    %v2154 = vunpack.c.l.b16 %v570
    %v2155 = vunpack.c.l.b16 %v571
    %v2156 = vunpack.c.h.b16 %v571
    %v2157 = vunpack.c.l.b16 %v572
    %v2158 = vunpack.c.h.b16 %v572
    %v2159 = vunpack.c.l.b16 %v573
    %v2160 = vunpack.c.l.b16 %v574
    %v2161 = vunpack.c.h.b16 %v574
    %v2162 = vunpack.c.l.b16 %v575
    %v2163 = vunpack.c.h.b16 %v575
    %v2164 = vunpack.c.l.b16 %v576
    %v2165 = vunpack.c.l.b16 %v577
    %v2166 = vunpack.c.h.b16 %v577
    %v2167 = vunpack.c.l.b16 %v578
    %v2168 = vunpack.c.h.b16 %v578
    %v2169 = vunpack.c.l.b16 %v579
    %v2170 = vunpack.c.l.b16 %v580
    %v2171 = vunpack.c.h.b16 %v580
    %v2172 = vunpack.c.l.b16 %v581
    %v2173 = vunpack.c.h.b16 %v581
    %v2174 = vunpack.c.l.b16 %v582
    %v2175 = vunpack.c.l.b16 %v583
    %v2176 = vunpack.c.h.b16 %v583
    %v2177 = vunpack.c.l.b16 %v584
    %v2178 = vunpack.c.h.b16 %v584
    %v2179 = vunpack.c.l.b16 %v585
    %v2180 = vunpack.c.l.b16 %v586
    %v2181 = vunpack.c.h.b16 %v586
    %v2182 = vunpack.c.l.b16 %v587
    %v2183 = vunpack.c.h.b16 %v587
    %v2184 = vunpack.c.l.b16 %v588
    %v2185 = vunpack.c.l.b16 %v589
    %v2186 = vunpack.c.h.b16 %v589
    %v2187 = vunpack.c.l.b16 %v590
    %v2188 = vunpack.c.h.b16 %v590
    %v2189 = vunpack.c.l.b16 %v591
    %v2190 = vunpack.c.l.b16 %v592
    %v2191 = vunpack.c.h.b16 %v592
    %v2192 = vunpack.c.l.b16 %v593
    %v2193 = vunpack.c.h.b16 %v593
    %v2194 = vunpack.c.l.b16 %v594
    %v2195 = vunpack.c.l.b16 %v595
    %v2196 = vunpack.c.h.b16 %v595
    %v2197 = vunpack.c.l.b16 %v596
    %v2198 = vunpack.c.h.b16 %v596
    %v2199 = vunpack.c.l.b16 %v597
    %v2200 = vunpack.c.l.b16 %v598
    %v2201 = vunpack.c.h.b16 %v598
    %v2202 = vunpack.c.l.b16 %v599
    %v2203 = vunpack.c.h.b16 %v599
    %v2204 = vunpack.c.l.b16 %v600
    %v2205 = vunpack.c.l.b16 %v601
    %v2206 = vunpack.c.h.b16 %v601
    %v2207 = vunpack.c.l.b16 %v602
    %v2208 = vunpack.c.h.b16 %v602
    %v2209 = vunpack.c.l.b16 %v603
    %v2210 = vunpack.c.l.b16 %v604
    %v2211 = vunpack.c.h.b16 %v604
    %v2212 = vunpack.c.l.b16 %v605
    %v2213 = vunpack.c.h.b16 %v605
    %v2214 = vunpack.c.l.b16 %v606
    %v2215 = vunpack.c.l.b16 %v607
    %v2216 = vunpack.c.h.b16 %v607
    %v2217 = vunpack.c.l.b16 %v608
    %v2218 = vunpack.c.h.b16 %v608
    %v2219 = vunpack.c.l.b16 %v609
    %v2220 = vunpack.c.l.b16 %v610
    %v2221 = vunpack.c.h.b16 %v610
    %v2222 = vunpack.c.l.b16 %v611
    %v2223 = vunpack.c.h.b16 %v611
    %v2224 = vunpack.c.l.b16 %v612
    %v2225 = vunpack.c.l.b16 %v613
    %v2226 = vunpack.c.h.b16 %v613
    %v2227 = vunpack.c.l.b16 %v614
    %v2228 = vunpack.c.h.b16 %v614
    %v2229 = vunpack.c.l.b16 %v615
    %v2230 = vunpack.c.l.b16 %v616
    %v2231 = vunpack.c.h.b16 %v616
    %v2232 = vunpack.c.l.b16 %v617
    %v2233 = vunpack.c.h.b16 %v617
    %v2234 = vunpack.c.l.b16 %v618
    %v2235 = vunpack.c.l.b16 %v619
    %v2236 = vunpack.c.h.b16 %v619
    %v2237 = vunpack.c.l.b16 %v620
    %v2238 = vunpack.c.h.b16 %v620
    %v2239 = vunpack.c.l.b16 %v621
    %v2240 = vunpack.c.l.b16 %v622
    %v2241 = vunpack.c.h.b16 %v622
    %v2242 = vunpack.c.l.b16 %v623
    %v2243 = vunpack.c.h.b16 %v623
    %v2244 = vunpack.c.l.b16 %v624
    %v2245 = vunpack.c.l.b16 %v625
    %v2246 = vunpack.c.h.b16 %v625
    %v2247 = vunpack.c.l.b16 %v626
    %v2248 = vunpack.c.h.b16 %v626
    %v2249 = vunpack.c.l.b16 %v627
    %v2250 = vunpack.c.l.b16 %v628
    %v2251 = vunpack.c.h.b16 %v628
    %v2252 = vunpack.c.l.b16 %v629
    %v2253 = vunpack.c.h.b16 %v629
    %v2254 = vunpack.c.l.b16 %v630
    %v2255 = vunpack.c.l.b16 %v631
    %v2256 = vunpack.c.h.b16 %v631
    %v2257 = vunpack.c.l.b16 %v632
    %v2258 = vunpack.c.h.b16 %v632
    %v2259 = vunpack.c.l.b16 %v633
    %v2260 = vunpack.c.l.b16 %v634
    %v2261 = vunpack.c.h.b16 %v634
    %v2262 = vunpack.c.l.b16 %v635
    %v2263 = vunpack.c.h.b16 %v635
    %v2264 = vunpack.c.l.b16 %v636
    %v2265 = vunpack.c.l.b16 %v637
    %v2266 = vunpack.c.h.b16 %v637
    %v2267 = vunpack.c.l.b16 %v638
    %v2268 = vunpack.c.h.b16 %v638
    %v2269 = vunpack.c.l.b16 %v639
    %v2270 = vunpack.c.l.b16 %v640
    %v2271 = vunpack.c.h.b16 %v640
    %v2272 = vunpack.c.l.b16 %v641
    %v2273 = vunpack.c.h.b16 %v641
    %v2274 = vunpack.c.l.b16 %v642
    %v2275 = vunpack.c.l.b16 %v643
    %v2276 = vunpack.c.h.b16 %v643
    %v2277 = vunpack.c.l.b16 %v644
    %v2278 = vunpack.c.h.b16 %v644
    %v2279 = vunpack.c.l.b16 %v645
    %v2280 = vunpack.c.l.b16 %v646
    %v2281 = vunpack.c.h.b16 %v646
    %v2282 = vunpack.c.l.b16 %v647
    %v2283 = vunpack.c.h.b16 %v647
    %v2284 = vunpack.c.l.b16 %v648
    %v2285 = vunpack.c.l.b16 %v649
    %v2286 = vunpack.c.h.b16 %v649
    %v2287 = vunpack.c.l.b16 %v650
    %v2288 = vunpack.c.h.b16 %v650
    %v2289 = vunpack.c.l.b16 %v651
    %v2290 = vunpack.c.l.b16 %v652
    %v2291 = vunpack.c.h.b16 %v652
    %v2292 = vunpack.c.l.b16 %v653
    %v2293 = vunpack.c.h.b16 %v653
    %v2294 = vunpack.c.l.b16 %v654
    %v2295 = vunpack.c.l.b16 %v655
    %v2296 = vunpack.c.h.b16 %v655
    %v2297 = vunpack.c.l.b16 %v656
    %v2298 = vunpack.c.h.b16 %v656
    %v2299 = vunpack.c.l.b16 %v657
    %v2300 = vunpack.c.l.b16 %v658
    %v2301 = vunpack.c.h.b16 %v658
    %v2302 = vunpack.c.l.b16 %v659
    %v2303 = vunpack.c.h.b16 %v659
    %v2304 = vunpack.c.l.b16 %v660
    %v2305 = vunpack.c.l.b16 %v661
    %v2306 = vunpack.c.h.b16 %v661
    %v2307 = vunpack.c.l.b16 %v662
    %v2308 = vunpack.c.h.b16 %v662
    %v2309 = vunpack.c.l.b16 %v663
    %v2310 = vunpack.c.l.b16 %v664
    %v2311 = vunpack.c.h.b16 %v664
    %v2312 = vunpack.c.l.b16 %v665
    %v2313 = vunpack.c.h.b16 %v665
    %v2314 = vunpack.c.l.b16 %v666
    %v2315 = vunpack.c.l.b16 %v667
    %v2316 = vunpack.c.h.b16 %v667
    %v2317 = vunpack.c.l.b16 %v668
    %v2318 = vunpack.c.h.b16 %v668
    %v2319 = vunpack.c.l.b16 %v669
    %v2320 = vunpack.c.l.b16 %v670
    %v2321 = vunpack.c.h.b16 %v670
    %v2322 = vunpack.c.l.b16 %v671
    %v2323 = vunpack.c.h.b16 %v671
    %v2324 = vunpack.c.l.b16 %v672
    %v2325 = vunpack.c.l.b16 %v673
    %v2326 = vunpack.c.h.b16 %v673
    %v2327 = vunpack.c.l.b16 %v674
    %v2328 = vunpack.c.h.b16 %v674
    %v2329 = vunpack.c.l.b16 %v675
    %v2330 = vunpack.c.l.b16 %v676
    %v2331 = vunpack.c.h.b16 %v676
    %v2332 = vunpack.c.l.b16 %v677
    %v2333 = vunpack.c.h.b16 %v677
    %v2334 = vunpack.c.l.b16 %v678
    %v2335 = vunpack.c.l.b16 %v679
    %v2336 = vunpack.c.h.b16 %v679
    %v2337 = vunpack.c.l.b16 %v680
    %v2338 = vunpack.c.h.b16 %v680
    %v2339 = vunpack.c.l.b16 %v681
    %v2340 = vunpack.c.l.b16 %v682
    %v2341 = vunpack.c.h.b16 %v682
    %v2342 = vunpack.c.l.b16 %v683
    %v2343 = vunpack.c.h.b16 %v683
    %v2344 = vunpack.c.l.b16 %v684
    %v2345 = vunpack.c.l.b16 %v685
    %v2346 = vunpack.c.h.b16 %v685
    %v2347 = vunpack.c.l.b16 %v686
    %v2348 = vunpack.c.h.b16 %v686
    %v2349 = vunpack.c.l.b16 %v687
    %v2350 = vunpack.c.l.b16 %v688
    %v2351 = vunpack.c.h.b16 %v688
    %v2352 = vunpack.c.l.b16 %v689
    %v2353 = vunpack.c.h.b16 %v689
    %v2354 = vunpack.c.l.b16 %v690
    %v2355 = vunpack.c.l.b16 %v691
    %v2356 = vunpack.c.h.b16 %v691
    %v2357 = vunpack.c.l.b16 %v692
    %v2358 = vunpack.c.h.b16 %v692
    %v2359 = vunpack.c.l.b16 %v693
    %v2360 = vunpack.c.l.b16 %v694
    %v2361 = vunpack.c.h.b16 %v694
    %v2362 = vunpack.c.l.b16 %v695
    %v2363 = vunpack.c.h.b16 %v695
    %v2364 = vunpack.c.l.b16 %v696
    %v2365 = vunpack.c.l.b16 %v697
    %v2366 = vunpack.c.h.b16 %v697
    %v2367 = vunpack.c.l.b16 %v698
    %v2368 = vunpack.c.h.b16 %v698
    %v2369 = vunpack.c.l.b16 %v699
    %v2370 = vunpack.c.l.b16 %v700
    %v2371 = vunpack.c.h.b16 %v700
    %v2372 = vunpack.c.l.b16 %v701
    %v2373 = vunpack.c.h.b16 %v701
    %v2374 = vunpack.c.l.b16 %v702
    %v2375 = vunpack.c.l.b16 %v703
    %v2376 = vunpack.c.h.b16 %v703
    %v2377 = vunpack.c.l.b16 %v704
    %v2378 = vunpack.c.h.b16 %v704
    %v2379 = vunpack.c.l.b16 %v705
    %v2380 = vunpack.c.l.b16 %v706
    %v2381 = vunpack.c.h.b16 %v706
    %v2382 = vunpack.c.l.b16 %v707
    %v2383 = vunpack.c.h.b16 %v707
    %v2384 = vunpack.c.l.b16 %v708
    %v2385 = vunpack.c.l.b16 %v709
    %v2386 = vunpack.c.h.b16 %v709
    %v2387 = vunpack.c.l.b16 %v710
    %v2388 = vunpack.c.h.b16 %v710
    %v2389 = vunpack.c.l.b16 %v711
    %v2390 = vunpack.c.l.b16 %v712
    %v2391 = vunpack.c.h.b16 %v712
    %v2392 = vunpack.c.l.b16 %v713
    %v2393 = vunpack.c.h.b16 %v713
    %v2394 = vunpack.c.l.b16 %v714
    %v2395 = vunpack.c.l.b16 %v715
    %v2396 = vunpack.c.h.b16 %v715
    %v2397 = vunpack.c.l.b16 %v716
    %v2398 = vunpack.c.h.b16 %v716
    %v2399 = vunpack.c.l.b16 %v717
    %v2400 = vunpack.c.l.b16 %v718
    %v2401 = vunpack.c.h.b16 %v718
    %v2402 = vunpack.c.l.b16 %v719
    %v2403 = vunpack.c.h.b16 %v719
    %v2404 = vunpack.c.l.b16 %v720
    %v2405 = vunpack.c.l.b16 %v721
    %v2406 = vunpack.c.h.b16 %v721
    %v2407 = vunpack.c.l.b16 %v722
    %v2408 = vunpack.c.h.b16 %v722
    %v2409 = vunpack.c.l.b16 %v723
    %v2410 = vunpack.c.l.b16 %v724
    %v2411 = vunpack.c.h.b16 %v724
    %v2412 = vunpack.c.l.b16 %v725
    %v2413 = vunpack.c.h.b16 %v725
    %v2414 = vunpack.c.l.b16 %v726
    %v2415 = vunpack.c.l.b16 %v727
    %v2416 = vunpack.c.h.b16 %v727
    %v2417 = vunpack.c.l.b16 %v728
    %v2418 = vunpack.c.h.b16 %v728
    %v2419 = vunpack.c.l.b16 %v729
    %v2420 = vunpack.c.l.b16 %v730
    %v2421 = vunpack.c.h.b16 %v730
    %v2422 = vunpack.c.l.b16 %v731
    %v2423 = vunpack.c.h.b16 %v731
    %v2424 = vunpack.c.l.b16 %v732
    %v2425 = vunpack.c.l.b16 %v733
    %v2426 = vunpack.c.h.b16 %v733
    %v2427 = vunpack.c.l.b16 %v734
    %v2428 = vunpack.c.h.b16 %v734
    %v2429 = vunpack.c.l.b16 %v735
    %v2430 = vunpack.c.l.b16 %v736
    %v2431 = vunpack.c.h.b16 %v736
    %v2432 = vunpack.c.l.b16 %v737
    %v2433 = vunpack.c.h.b16 %v737
    %v2434 = vunpack.c.l.b16 %v738
    %v2435 = vunpack.c.l.b16 %v739
    %v2436 = vunpack.c.h.b16 %v739
    %v2437 = vunpack.c.l.b16 %v740
    %v2438 = vunpack.c.h.b16 %v740
    %v2439 = vunpack.c.l.b16 %v741
    %v2440 = vunpack.c.l.b16 %v742
    %v2441 = vunpack.c.h.b16 %v742
    %v2442 = vunpack.c.l.b16 %v743
    %v2443 = vunpack.c.h.b16 %v743
    %v2444 = vunpack.c.l.b16 %v744
    %v2445 = vunpack.c.l.b16 %v745
    %v2446 = vunpack.c.h.b16 %v745
    %v2447 = vunpack.c.l.b16 %v746
    %v2448 = vunpack.c.h.b16 %v746
    %v2449 = vunpack.c.l.b16 %v747
    %v2450 = vunpack.c.l.b16 %v748
    %v2451 = vunpack.c.h.b16 %v748
    %v2452 = vunpack.c.l.b16 %v749
    %v2453 = vunpack.c.h.b16 %v749
    %v2454 = vunpack.c.l.b16 %v750
    %v2455 = vunpack.c.l.b16 %v751
    %v2456 = vunpack.c.h.b16 %v751
    %v2457 = vunpack.c.l.b16 %v752
    %v2458 = vunpack.c.h.b16 %v752
    %v2459 = vunpack.c.l.b16 %v753
    %v2460 = vunpack.c.l.b16 %v754
    %v2461 = vunpack.c.h.b16 %v754
    %v2462 = vunpack.c.l.b16 %v755
    %v2463 = vunpack.c.h.b16 %v755
    %v2464 = vunpack.c.l.b16 %v756
    %v2465 = vunpack.c.l.b16 %v757
    %v2466 = vunpack.c.h.b16 %v757
    %v2467 = vunpack.c.l.b16 %v758
    %v2468 = vunpack.c.h.b16 %v758
    %v2469 = vunpack.c.l.b16 %v759
    %v2470 = vunpack.c.l.b16 %v760
    %v2471 = vunpack.c.h.b16 %v760
    %v2472 = vunpack.c.l.b16 %v761
    %v2473 = vunpack.c.h.b16 %v761
    %v2474 = vunpack.c.l.b16 %v762
    %v2475 = vunpack.c.l.b16 %v763
    %v2476 = vunpack.c.h.b16 %v763
    %v2477 = vunpack.c.l.b16 %v764
    %v2478 = vunpack.c.h.b16 %v764
    %v2479 = vunpack.c.l.b16 %v765
    %v2480 = vunpack.c.l.b16 %v766
    %v2481 = vunpack.c.h.b16 %v766
    %v2482 = vunpack.c.l.b16 %v767
    %v2483 = vunpack.c.h.b16 %v767
    %v2484 = vunpack.c.l.b16 %v768
    %v2485 = vunpack.c.l.b16 %v769
    %v2486 = vunpack.c.h.b16 %v769
    %v2487 = vunpack.c.l.b16 %v770
    %v2488 = vunpack.c.h.b16 %v770
    %v2489 = vunpack.c.l.b16 %v771
    %v2490 = vunpack.c.l.b16 %v772
    %v2491 = vunpack.c.h.b16 %v772
    %v2492 = vunpack.c.l.b16 %v773
    %v2493 = vunpack.c.h.b16 %v773
    %v2494 = vunpack.c.l.b16 %v774
    %v2495 = vunpack.c.l.b16 %v775
    %v2496 = vunpack.c.h.b16 %v775
    %v2497 = vunpack.c.l.b16 %v776
    %v2498 = vunpack.c.h.b16 %v776
    %v2499 = vunpack.c.l.b16 %v777
    %v2500 = vpack.c.b16 %v1465, %v1460
    %v2501 = vpack.c.b16 %v1466, %v1461
    %v2502 = vpack.c.b16 %v1467, %v1462
    %v2503 = vpack.c.b16 %v1468, %v1463
    %v2504 = vpack.c.b16 %v1469, %v1464
    %v2505 = vpack.c.b16 %v1475, %v1470
    %v2506 = vpack.c.b16 %v1476, %v1471
    %v2507 = vpack.c.b16 %v1477, %v1472
    %v2508 = vpack.c.b16 %v1478, %v1473
    %v2509 = vpack.c.b16 %v1479, %v1474
    %v2510 = vpack.c.b16 %v1485, %v1480
    %v2511 = vpack.c.b16 %v1486, %v1481
    %v2512 = vpack.c.b16 %v1487, %v1482
    %v2513 = vpack.c.b16 %v1488, %v1483
    %v2514 = vpack.c.b16 %v1489, %v1484
    %v2515 = vpack.c.b16 %v1495, %v1490
    %v2516 = vpack.c.b16 %v1496, %v1491
    %v2517 = vpack.c.b16 %v1497, %v1492
    %v2518 = vpack.c.b16 %v1498, %v1493
    %v2519 = vpack.c.b16 %v1499, %v1494
    %v2520 = vpack.c.b16 %v1505, %v1500
    %v2521 = vpack.c.b16 %v1506, %v1501
    %v2522 = vpack.c.b16 %v1507, %v1502
    %v2523 = vpack.c.b16 %v1508, %v1503
    %v2524 = vpack.c.b16 %v1509, %v1504
    %v2525 = vpack.c.b16 %v1515, %v1510
    %v2526 = vpack.c.b16 %v1516, %v1511
    %v2527 = vpack.c.b16 %v1517, %v1512
    %v2528 = vpack.c.b16 %v1518, %v1513
    %v2529 = vpack.c.b16 %v1519, %v1514
    %v2530 = vpack.c.b16 %v1525, %v1520
    %v2531 = vpack.c.b16 %v1526, %v1521
    %v2532 = vpack.c.b16 %v1527, %v1522
    %v2533 = vpack.c.b16 %v1528, %v1523
    %v2534 = vpack.c.b16 %v1529, %v1524
    %v2535 = vpack.c.b16 %v1535, %v1530
    %v2536 = vpack.c.b16 %v1536, %v1531
    %v2537 = vpack.c.b16 %v1537, %v1532
    %v2538 = vpack.c.b16 %v1538, %v1533
    %v2539 = vpack.c.b16 %v1539, %v1534
    %v2540 = vpack.c.b16 %v1545, %v1540
    %v2541 = vpack.c.b16 %v1546, %v1541
    %v2542 = vpack.c.b16 %v1547, %v1542
    %v2543 = vpack.c.b16 %v1548, %v1543
    %v2544 = vpack.c.b16 %v1549, %v1544
    %v2545 = vpack.c.b16 %v1555, %v1550
    %v2546 = vpack.c.b16 %v1556, %v1551
    %v2547 = vpack.c.b16 %v1557, %v1552
    %v2548 = vpack.c.b16 %v1558, %v1553
    %v2549 = vpack.c.b16 %v1559, %v1554
    %v2550 = vpack.c.b16 %v1565, %v1560
    %v2551 = vpack.c.b16 %v1566, %v1561
    %v2552 = vpack.c.b16 %v1567, %v1562
    %v2553 = vpack.c.b16 %v1568, %v1563
    %v2554 = vpack.c.b16 %v1569, %v1564
    %v2555 = vpack.c.b16 %v1575, %v1570
    %v2556 = vpack.c.b16 %v1576, %v1571
    %v2557 = vpack.c.b16 %v1577, %v1572
    %v2558 = vpack.c.b16 %v1578, %v1573
    %v2559 = vpack.c.b16 %v1579, %v1574
    %v2560 = vpack.c.b16 %v1585, %v1580
    %v2561 = vpack.c.b16 %v1586, %v1581
    %v2562 = vpack.c.b16 %v1587, %v1582
    %v2563 = vpack.c.b16 %v1588, %v1583
    %v2564 = vpack.c.b16 %v1589, %v1584
    %v2565 = vpack.c.b16 %v1595, %v1590
    %v2566 = vpack.c.b16 %v1596, %v1591
    %v2567 = vpack.c.b16 %v1597, %v1592
    %v2568 = vpack.c.b16 %v1598, %v1593
    %v2569 = vpack.c.b16 %v1599, %v1594
    %v2570 = vpack.c.b16 %v1605, %v1600
    %v2571 = vpack.c.b16 %v1606, %v1601
    %v2572 = vpack.c.b16 %v1607, %v1602
    %v2573 = vpack.c.b16 %v1608, %v1603
    %v2574 = vpack.c.b16 %v1609, %v1604
    %v2575 = vpack.c.b16 %v1615, %v1610
    %v2576 = vpack.c.b16 %v1616, %v1611
    %v2577 = vpack.c.b16 %v1617, %v1612
    %v2578 = vpack.c.b16 %v1618, %v1613
    %v2579 = vpack.c.b16 %v1619, %v1614
    %v2580 = vpack.c.b16 %v1625, %v1620
    %v2581 = vpack.c.b16 %v1626, %v1621
    %v2582 = vpack.c.b16 %v1627, %v1622
    %v2583 = vpack.c.b16 %v1628, %v1623
    %v2584 = vpack.c.b16 %v1629, %v1624
    %v2585 = vpack.c.b16 %v1635, %v1630
    %v2586 = vpack.c.b16 %v1636, %v1631
    %v2587 = vpack.c.b16 %v1637, %v1632
    %v2588 = vpack.c.b16 %v1638, %v1633
    %v2589 = vpack.c.b16 %v1639, %v1634
    %v2590 = vpack.c.b16 %v1645, %v1640
    %v2591 = vpack.c.b16 %v1646, %v1641
    %v2592 = vpack.c.b16 %v1647, %v1642
    %v2593 = vpack.c.b16 %v1648, %v1643
    %v2594 = vpack.c.b16 %v1649, %v1644
    %v2595 = vpack.c.b16 %v1655, %v1650
    %v2596 = vpack.c.b16 %v1656, %v1651
    %v2597 = vpack.c.b16 %v1657, %v1652
    %v2598 = vpack.c.b16 %v1658, %v1653
    %v2599 = vpack.c.b16 %v1659, %v1654
    %v2600 = vpack.c.b16 %v1665, %v1660
    %v2601 = vpack.c.b16 %v1666, %v1661
    %v2602 = vpack.c.b16 %v1667, %v1662
    %v2603 = vpack.c.b16 %v1668, %v1663
    %v2604 = vpack.c.b16 %v1669, %v1664
    %v2605 = vpack.c.b16 %v1675, %v1670
    %v2606 = vpack.c.b16 %v1676, %v1671
    %v2607 = vpack.c.b16 %v1677, %v1672
    %v2608 = vpack.c.b16 %v1678, %v1673
    %v2609 = vpack.c.b16 %v1679, %v1674
    %v2610 = vpack.c.b16 %v1685, %v1680
    %v2611 = vpack.c.b16 %v1686, %v1681
    %v2612 = vpack.c.b16 %v1687, %v1682
    %v2613 = vpack.c.b16 %v1688, %v1683
    %v2614 = vpack.c.b16 %v1689, %v1684
    %v2615 = vpack.c.b16 %v1695, %v1690
    %v2616 = vpack.c.b16 %v1696, %v1691
    %v2617 = vpack.c.b16 %v1697, %v1692
    %v2618 = vpack.c.b16 %v1698, %v1693
    %v2619 = vpack.c.b16 %v1699, %v1694
    %v2620 = vpack.c.b16 %v1705, %v1700
    %v2621 = vpack.c.b16 %v1706, %v1701
    %v2622 = vpack.c.b16 %v1707, %v1702
    %v2623 = vpack.c.b16 %v1708, %v1703
    %v2624 = vpack.c.b16 %v1709, %v1704
    %v2625 = vpack.c.b16 %v1715, %v1710
    %v2626 = vpack.c.b16 %v1716, %v1711
    %v2627 = vpack.c.b16 %v1717, %v1712
    %v2628 = vpack.c.b16 %v1718, %v1713
    %v2629 = vpack.c.b16 %v1719, %v1714
    %v2630 = vpack.c.b16 %v1725, %v1720
    %v2631 = vpack.c.b16 %v1726, %v1721
    %v2632 = vpack.c.b16 %v1727, %v1722
    %v2633 = vpack.c.b16 %v1728, %v1723
    %v2634 = vpack.c.b16 %v1729, %v1724
    %v2635 = vpack.c.b16 %v1735, %v1730
    %v2636 = vpack.c.b16 %v1736, %v1731
    %v2637 = vpack.c.b16 %v1737, %v1732
    %v2638 = vpack.c.b16 %v1738, %v1733
    %v2639 = vpack.c.b16 %v1739, %v1734
    %v2640 = vpack.c.b16 %v1745, %v1740
    %v2641 = vpack.c.b16 %v1746, %v1741
    %v2642 = vpack.c.b16 %v1747, %v1742
    %v2643 = vpack.c.b16 %v1748, %v1743
    %v2644 = vpack.c.b16 %v1749, %v1744
    %v2645 = vpack.c.b16 %v1755, %v1750
    %v2646 = vpack.c.b16 %v1756, %v1751
    %v2647 = vpack.c.b16 %v1757, %v1752
    %v2648 = vpack.c.b16 %v1758, %v1753
    %v2649 = vpack.c.b16 %v1759, %v1754
    %v2650 = vpack.c.b16 %v1765, %v1760
    %v2651 = vpack.c.b16 %v1766, %v1761
    %v2652 = vpack.c.b16 %v1767, %v1762
    %v2653 = vpack.c.b16 %v1768, %v1763
    %v2654 = vpack.c.b16 %v1769, %v1764
    %v2655 = vpack.c.b16 %v1775, %v1770
    %v2656 = vpack.c.b16 %v1776, %v1771
    %v2657 = vpack.c.b16 %v1777, %v1772
    %v2658 = vpack.c.b16 %v1778, %v1773
    %v2659 = vpack.c.b16 %v1779, %v1774
    %v2660 = vpack.c.b16 %v1785, %v1780
    %v2661 = vpack.c.b16 %v1786, %v1781
    %v2662 = vpack.c.b16 %v1787, %v1782
    %v2663 = vpack.c.b16 %v1788, %v1783
    %v2664 = vpack.c.b16 %v1789, %v1784
    %v2665 = vpack.c.b16 %v1795, %v1790
    %v2666 = vpack.c.b16 %v1796, %v1791
    %v2667 = vpack.c.b16 %v1797, %v1792
    %v2668 = vpack.c.b16 %v1798, %v1793
    %v2669 = vpack.c.b16 %v1799, %v1794
    %v2670 = vpack.c.b16 %v1805, %v1800
    %v2671 = vpack.c.b16 %v1806, %v1801
    %v2672 = vpack.c.b16 %v1807, %v1802
    %v2673 = vpack.c.b16 %v1808, %v1803
    %v2674 = vpack.c.b16 %v1809, %v1804
    %v2675 = vpack.c.b16 %v1815, %v1810
    %v2676 = vpack.c.b16 %v1816, %v1811
    %v2677 = vpack.c.b16 %v1817, %v1812
    %v2678 = vpack.c.b16 %v1818, %v1813
    %v2679 = vpack.c.b16 %v1819, %v1814
    %v2680 = vpack.c.b16 %v1825, %v1820
    %v2681 = vpack.c.b16 %v1826, %v1821
    %v2682 = vpack.c.b16 %v1827, %v1822
    %v2683 = vpack.c.b16 %v1828, %v1823
    %v2684 = vpack.c.b16 %v1829, %v1824
    %v2685 = vpack.c.b16 %v1835, %v1830
    %v2686 = vpack.c.b16 %v1836, %v1831
    %v2687 = vpack.c.b16 %v1837, %v1832
    %v2688 = vpack.c.b16 %v1838, %v1833
    %v2689 = vpack.c.b16 %v1839, %v1834
    %v2690 = vpack.c.b16 %v1845, %v1840
    %v2691 = vpack.c.b16 %v1846, %v1841
    %v2692 = vpack.c.b16 %v1847, %v1842
    %v2693 = vpack.c.b16 %v1848, %v1843
    %v2694 = vpack.c.b16 %v1849, %v1844
    %v2695 = vpack.c.b16 %v1855, %v1850
    %v2696 = vpack.c.b16 %v1856, %v1851
    %v2697 = vpack.c.b16 %v1857, %v1852
    %v2698 = vpack.c.b16 %v1858, %v1853
    %v2699 = vpack.c.b16 %v1859, %v1854
    %v2700 = vpack.c.b16 %v1865, %v1860
    %v2701 = vpack.c.b16 %v1866, %v1861
    %v2702 = vpack.c.b16 %v1867, %v1862
    %v2703 = vpack.c.b16 %v1868, %v1863
    %v2704 = vpack.c.b16 %v1869, %v1864
    %v2705 = vpack.c.b16 %v1875, %v1870
    %v2706 = vpack.c.b16 %v1876, %v1871
    %v2707 = vpack.c.b16 %v1877, %v1872
    %v2708 = vpack.c.b16 %v1878, %v1873
    %v2709 = vpack.c.b16 %v1879, %v1874
    %v2710 = vpack.c.b16 %v1885, %v1880
    %v2711 = vpack.c.b16 %v1886, %v1881
    %v2712 = vpack.c.b16 %v1887, %v1882
    %v2713 = vpack.c.b16 %v1888, %v1883
    %v2714 = vpack.c.b16 %v1889, %v1884
    %v2715 = vpack.c.b16 %v1895, %v1890
    %v2716 = vpack.c.b16 %v1896, %v1891
    %v2717 = vpack.c.b16 %v1897, %v1892
    %v2718 = vpack.c.b16 %v1898, %v1893
    %v2719 = vpack.c.b16 %v1899, %v1894
    %v2720 = vpack.c.b16 %v1905, %v1900
    %v2721 = vpack.c.b16 %v1906, %v1901
    %v2722 = vpack.c.b16 %v1907, %v1902
    %v2723 = vpack.c.b16 %v1908, %v1903
    %v2724 = vpack.c.b16 %v1909, %v1904
    %v2725 = vpack.c.b16 %v1915, %v1910
    %v2726 = vpack.c.b16 %v1916, %v1911
    %v2727 = vpack.c.b16 %v1917, %v1912
    %v2728 = vpack.c.b16 %v1918, %v1913
    %v2729 = vpack.c.b16 %v1919, %v1914
    %v2730 = vpack.c.b16 %v1925, %v1920
    %v2731 = vpack.c.b16 %v1926, %v1921
    %v2732 = vpack.c.b16 %v1927, %v1922
    %v2733 = vpack.c.b16 %v1928, %v1923
    %v2734 = vpack.c.b16 %v1929, %v1924
    %v2735 = vpack.c.b16 %v1935, %v1930
    %v2736 = vpack.c.b16 %v1936, %v1931
    %v2737 = vpack.c.b16 %v1937, %v1932
    %v2738 = vpack.c.b16 %v1938, %v1933
    %v2739 = vpack.c.b16 %v1939, %v1934
    %v2740 = vpack.c.b16 %v1945, %v1940
    %v2741 = vpack.c.b16 %v1946, %v1941
    %v2742 = vpack.c.b16 %v1947, %v1942
    %v2743 = vpack.c.b16 %v1948, %v1943
    %v2744 = vpack.c.b16 %v1949, %v1944
    %v2745 = vpack.c.b16 %v1955, %v1950
    %v2746 = vpack.c.b16 %v1956, %v1951
    %v2747 = vpack.c.b16 %v1957, %v1952
    %v2748 = vpack.c.b16 %v1958, %v1953
    %v2749 = vpack.c.b16 %v1959, %v1954
    %v2750 = vpack.c.b16 %v1965, %v1960
    %v2751 = vpack.c.b16 %v1966, %v1961
    %v2752 = vpack.c.b16 %v1967, %v1962
    %v2753 = vpack.c.b16 %v1968, %v1963
    %v2754 = vpack.c.b16 %v1969, %v1964
    %v2755 = vpack.c.b16 %v1975, %v1970
    %v2756 = vpack.c.b16 %v1976, %v1971
    %v2757 = vpack.c.b16 %v1977, %v1972
    %v2758 = vpack.c.b16 %v1978, %v1973
    %v2759 = vpack.c.b16 %v1979, %v1974
    %v2760 = vpack.c.b16 %v1985, %v1980
    %v2761 = vpack.c.b16 %v1986, %v1981
    %v2762 = vpack.c.b16 %v1987, %v1982
    %v2763 = vpack.c.b16 %v1988, %v1983
    %v2764 = vpack.c.b16 %v1989, %v1984
    %v2765 = vpack.c.b16 %v1995, %v1990
    %v2766 = vpack.c.b16 %v1996, %v1991
    %v2767 = vpack.c.b16 %v1997, %v1992
    %v2768 = vpack.c.b16 %v1998, %v1993
    %v2769 = vpack.c.b16 %v1999, %v1994
    %v2770 = vpack.c.b16 %v2005, %v2000
    %v2771 = vpack.c.b16 %v2006, %v2001
    %v2772 = vpack.c.b16 %v2007, %v2002
    %v2773 = vpack.c.b16 %v2008, %v2003
    %v2774 = vpack.c.b16 %v2009, %v2004
    %v2775 = vpack.c.b16 %v2015, %v2010
    %v2776 = vpack.c.b16 %v2016, %v2011
    %v2777 = vpack.c.b16 %v2017, %v2012
    %v2778 = vpack.c.b16 %v2018, %v2013
    %v2779 = vpack.c.b16 %v2019, %v2014
    %v2780 = vpack.c.b16 %v2025, %v2020
    %v2781 = vpack.c.b16 %v2026, %v2021
    %v2782 = vpack.c.b16 %v2027, %v2022
    %v2783 = vpack.c.b16 %v2028, %v2023
    %v2784 = vpack.c.b16 %v2029, %v2024
    %v2785 = vpack.c.b16 %v2035, %v2030
    %v2786 = vpack.c.b16 %v2036, %v2031
    %v2787 = vpack.c.b16 %v2037, %v2032
    %v2788 = vpack.c.b16 %v2038, %v2033
    %v2789 = vpack.c.b16 %v2039, %v2034
    %v2790 = vpack.c.b16 %v2045, %v2040
    %v2791 = vpack.c.b16 %v2046, %v2041
    %v2792 = vpack.c.b16 %v2047, %v2042
    %v2793 = vpack.c.b16 %v2048, %v2043
    %v2794 = vpack.c.b16 %v2049, %v2044
    %v2795 = vpack.c.b16 %v2055, %v2050
    %v2796 = vpack.c.b16 %v2056, %v2051
    %v2797 = vpack.c.b16 %v2057, %v2052
    %v2798 = vpack.c.b16 %v2058, %v2053
    %v2799 = vpack.c.b16 %v2059, %v2054
    %v2800 = vpack.c.b16 %v2065, %v2060
    %v2801 = vpack.c.b16 %v2066, %v2061
    %v2802 = vpack.c.b16 %v2067, %v2062
    %v2803 = vpack.c.b16 %v2068, %v2063
    %v2804 = vpack.c.b16 %v2069, %v2064
    %v2805 = vpack.c.b16 %v2075, %v2070
    %v2806 = vpack.c.b16 %v2076, %v2071
    %v2807 = vpack.c.b16 %v2077, %v2072
    %v2808 = vpack.c.b16 %v2078, %v2073
    %v2809 = vpack.c.b16 %v2079, %v2074
    %v2810 = vpack.c.b16 %v2085, %v2080
    %v2811 = vpack.c.b16 %v2086, %v2081
    %v2812 = vpack.c.b16 %v2087, %v2082
    %v2813 = vpack.c.b16 %v2088, %v2083
    %v2814 = vpack.c.b16 %v2089, %v2084
    %v2815 = vpack.c.b16 %v2095, %v2090
    %v2816 = vpack.c.b16 %v2096, %v2091
    %v2817 = vpack.c.b16 %v2097, %v2092
    %v2818 = vpack.c.b16 %v2098, %v2093
    %v2819 = vpack.c.b16 %v2099, %v2094
    %v2820 = vpack.c.b16 %v2105, %v2100
    %v2821 = vpack.c.b16 %v2106, %v2101
    %v2822 = vpack.c.b16 %v2107, %v2102
    %v2823 = vpack.c.b16 %v2108, %v2103
    %v2824 = vpack.c.b16 %v2109, %v2104
    %v2825 = vpack.c.b16 %v2115, %v2110
    %v2826 = vpack.c.b16 %v2116, %v2111
    %v2827 = vpack.c.b16 %v2117, %v2112
    %v2828 = vpack.c.b16 %v2118, %v2113
    %v2829 = vpack.c.b16 %v2119, %v2114
    %v2830 = vpack.c.b16 %v2125, %v2120
    %v2831 = vpack.c.b16 %v2126, %v2121
    %v2832 = vpack.c.b16 %v2127, %v2122
    %v2833 = vpack.c.b16 %v2128, %v2123
    %v2834 = vpack.c.b16 %v2129, %v2124
    %v2835 = vpack.c.b16 %v2135, %v2130
    %v2836 = vpack.c.b16 %v2136, %v2131
    %v2837 = vpack.c.b16 %v2137, %v2132
    %v2838 = vpack.c.b16 %v2138, %v2133
    %v2839 = vpack.c.b16 %v2139, %v2134
    %v2840 = vpack.c.b16 %v2145, %v2140
    %v2841 = vpack.c.b16 %v2146, %v2141
    %v2842 = vpack.c.b16 %v2147, %v2142
    %v2843 = vpack.c.b16 %v2148, %v2143
    %v2844 = vpack.c.b16 %v2149, %v2144
    %v2845 = vpack.c.b16 %v2155, %v2150
    %v2846 = vpack.c.b16 %v2156, %v2151
    %v2847 = vpack.c.b16 %v2157, %v2152
    %v2848 = vpack.c.b16 %v2158, %v2153
    %v2849 = vpack.c.b16 %v2159, %v2154
    %v2850 = vpack.c.b16 %v2165, %v2160
    %v2851 = vpack.c.b16 %v2166, %v2161
    %v2852 = vpack.c.b16 %v2167, %v2162
    %v2853 = vpack.c.b16 %v2168, %v2163
    %v2854 = vpack.c.b16 %v2169, %v2164
    %v2855 = vpack.c.b16 %v2175, %v2170
    %v2856 = vpack.c.b16 %v2176, %v2171
    %v2857 = vpack.c.b16 %v2177, %v2172
    %v2858 = vpack.c.b16 %v2178, %v2173
    %v2859 = vpack.c.b16 %v2179, %v2174
    %v2860 = vpack.c.b16 %v2185, %v2180
    %v2861 = vpack.c.b16 %v2186, %v2181
    %v2862 = vpack.c.b16 %v2187, %v2182
    %v2863 = vpack.c.b16 %v2188, %v2183
    %v2864 = vpack.c.b16 %v2189, %v2184
    %v2865 = vpack.c.b16 %v2195, %v2190
    %v2866 = vpack.c.b16 %v2196, %v2191
    %v2867 = vpack.c.b16 %v2197, %v2192
    %v2868 = vpack.c.b16 %v2198, %v2193
    %v2869 = vpack.c.b16 %v2199, %v2194
    %v2870 = vpack.c.b16 %v2205, %v2200
    %v2871 = vpack.c.b16 %v2206, %v2201
    %v2872 = vpack.c.b16 %v2207, %v2202
    %v2873 = vpack.c.b16 %v2208, %v2203
    %v2874 = vpack.c.b16 %v2209, %v2204
    %v2875 = vpack.c.b16 %v2215, %v2210
    %v2876 = vpack.c.b16 %v2216, %v2211
    %v2877 = vpack.c.b16 %v2217, %v2212
    %v2878 = vpack.c.b16 %v2218, %v2213
    %v2879 = vpack.c.b16 %v2219, %v2214
    %v2880 = vpack.c.b16 %v2225, %v2220
    %v2881 = vpack.c.b16 %v2226, %v2221
    %v2882 = vpack.c.b16 %v2227, %v2222
    %v2883 = vpack.c.b16 %v2228, %v2223
    %v2884 = vpack.c.b16 %v2229, %v2224
    %v2885 = vpack.c.b16 %v2235, %v2230
    %v2886 = vpack.c.b16 %v2236, %v2231
    %v2887 = vpack.c.b16 %v2237, %v2232
    %v2888 = vpack.c.b16 %v2238, %v2233
    %v2889 = vpack.c.b16 %v2239, %v2234
    %v2890 = vpack.c.b16 %v2245, %v2240
    %v2891 = vpack.c.b16 %v2246, %v2241
    %v2892 = vpack.c.b16 %v2247, %v2242
    %v2893 = vpack.c.b16 %v2248, %v2243
    %v2894 = vpack.c.b16 %v2249, %v2244
    %v2895 = vpack.c.b16 %v2255, %v2250
    %v2896 = vpack.c.b16 %v2256, %v2251
    %v2897 = vpack.c.b16 %v2257, %v2252
    %v2898 = vpack.c.b16 %v2258, %v2253
    %v2899 = vpack.c.b16 %v2259, %v2254
    %v2900 = vpack.c.b16 %v2265, %v2260
    %v2901 = vpack.c.b16 %v2266, %v2261
    %v2902 = vpack.c.b16 %v2267, %v2262
    %v2903 = vpack.c.b16 %v2268, %v2263
    %v2904 = vpack.c.b16 %v2269, %v2264
    %v2905 = vpack.c.b16 %v2275, %v2270
    %v2906 = vpack.c.b16 %v2276, %v2271
    %v2907 = vpack.c.b16 %v2277, %v2272
    %v2908 = vpack.c.b16 %v2278, %v2273
    %v2909 = vpack.c.b16 %v2279, %v2274
    %v2910 = vpack.c.b16 %v2285, %v2280
    %v2911 = vpack.c.b16 %v2286, %v2281
    %v2912 = vpack.c.b16 %v2287, %v2282
    %v2913 = vpack.c.b16 %v2288, %v2283
    %v2914 = vpack.c.b16 %v2289, %v2284
    %v2915 = vpack.c.b16 %v2295, %v2290
    %v2916 = vpack.c.b16 %v2296, %v2291
    %v2917 = vpack.c.b16 %v2297, %v2292
    %v2918 = vpack.c.b16 %v2298, %v2293
    %v2919 = vpack.c.b16 %v2299, %v2294
    %v2920 = vpack.c.b16 %v2305, %v2300
    %v2921 = vpack.c.b16 %v2306, %v2301
    %v2922 = vpack.c.b16 %v2307, %v2302
    %v2923 = vpack.c.b16 %v2308, %v2303
    %v2924 = vpack.c.b16 %v2309, %v2304
    %v2925 = vpack.c.b16 %v2315, %v2310
    %v2926 = vpack.c.b16 %v2316, %v2311
    %v2927 = vpack.c.b16 %v2317, %v2312
    %v2928 = vpack.c.b16 %v2318, %v2313
    %v2929 = vpack.c.b16 %v2319, %v2314
    %v2930 = vpack.c.b16 %v2325, %v2320
    %v2931 = vpack.c.b16 %v2326, %v2321
    %v2932 = vpack.c.b16 %v2327, %v2322
    %v2933 = vpack.c.b16 %v2328, %v2323
    %v2934 = vpack.c.b16 %v2329, %v2324
    %v2935 = vpack.c.b16 %v2335, %v2330
    %v2936 = vpack.c.b16 %v2336, %v2331
    %v2937 = vpack.c.b16 %v2337, %v2332
    %v2938 = vpack.c.b16 %v2338, %v2333
    %v2939 = vpack.c.b16 %v2339, %v2334
    %v2940 = vpack.c.b16 %v2345, %v2340
    %v2941 = vpack.c.b16 %v2346, %v2341
    %v2942 = vpack.c.b16 %v2347, %v2342
    %v2943 = vpack.c.b16 %v2348, %v2343
    %v2944 = vpack.c.b16 %v2349, %v2344
    %v2945 = vpack.c.b16 %v2355, %v2350
    %v2946 = vpack.c.b16 %v2356, %v2351
    %v2947 = vpack.c.b16 %v2357, %v2352
    %v2948 = vpack.c.b16 %v2358, %v2353
    %v2949 = vpack.c.b16 %v2359, %v2354
    %v2950 = vpack.c.b16 %v2365, %v2360
    %v2951 = vpack.c.b16 %v2366, %v2361
    %v2952 = vpack.c.b16 %v2367, %v2362
    %v2953 = vpack.c.b16 %v2368, %v2363
    %v2954 = vpack.c.b16 %v2369, %v2364
    %v2955 = vpack.c.b16 %v2375, %v2370
    %v2956 = vpack.c.b16 %v2376, %v2371
    %v2957 = vpack.c.b16 %v2377, %v2372
    %v2958 = vpack.c.b16 %v2378, %v2373
    %v2959 = vpack.c.b16 %v2379, %v2374
    %v2960 = vpack.c.b16 %v2385, %v2380
    %v2961 = vpack.c.b16 %v2386, %v2381
    %v2962 = vpack.c.b16 %v2387, %v2382
    %v2963 = vpack.c.b16 %v2388, %v2383
    %v2964 = vpack.c.b16 %v2389, %v2384
    %v2965 = vpack.c.b16 %v2395, %v2390
    %v2966 = vpack.c.b16 %v2396, %v2391
    %v2967 = vpack.c.b16 %v2397, %v2392
    %v2968 = vpack.c.b16 %v2398, %v2393
    %v2969 = vpack.c.b16 %v2399, %v2394
    %v2970 = vpack.c.b16 %v2405, %v2400
    %v2971 = vpack.c.b16 %v2406, %v2401
    %v2972 = vpack.c.b16 %v2407, %v2402
    %v2973 = vpack.c.b16 %v2408, %v2403
    %v2974 = vpack.c.b16 %v2409, %v2404
    %v2975 = vpack.c.b16 %v2415, %v2410
    %v2976 = vpack.c.b16 %v2416, %v2411
    %v2977 = vpack.c.b16 %v2417, %v2412
    %v2978 = vpack.c.b16 %v2418, %v2413
    %v2979 = vpack.c.b16 %v2419, %v2414
    %v2980 = vpack.c.b16 %v2425, %v2420
    %v2981 = vpack.c.b16 %v2426, %v2421
    %v2982 = vpack.c.b16 %v2427, %v2422
    %v2983 = vpack.c.b16 %v2428, %v2423
    %v2984 = vpack.c.b16 %v2429, %v2424
    %v2985 = vpack.c.b16 %v2435, %v2430
    %v2986 = vpack.c.b16 %v2436, %v2431
    %v2987 = vpack.c.b16 %v2437, %v2432
    %v2988 = vpack.c.b16 %v2438, %v2433
    %v2989 = vpack.c.b16 %v2439, %v2434
    %v2990 = vpack.c.b16 %v2445, %v2440
    %v2991 = vpack.c.b16 %v2446, %v2441
    %v2992 = vpack.c.b16 %v2447, %v2442
    %v2993 = vpack.c.b16 %v2448, %v2443
    %v2994 = vpack.c.b16 %v2449, %v2444
    %v2995 = vpack.c.b16 %v2455, %v2450
    %v2996 = vpack.c.b16 %v2456, %v2451
    %v2997 = vpack.c.b16 %v2457, %v2452
    %v2998 = vpack.c.b16 %v2458, %v2453
    %v2999 = vpack.c.b16 %v2459, %v2454
    %v3000 = vpack.c.b16 %v2465, %v2460
    %v3001 = vpack.c.b16 %v2466, %v2461
    %v3002 = vpack.c.b16 %v2467, %v2462
    %v3003 = vpack.c.b16 %v2468, %v2463
    %v3004 = vpack.c.b16 %v2469, %v2464
    %v3005 = vpack.c.b16 %v2475, %v2470
    %v3006 = vpack.c.b16 %v2476, %v2471
    %v3007 = vpack.c.b16 %v2477, %v2472
    %v3008 = vpack.c.b16 %v2478, %v2473
    %v3009 = vpack.c.b16 %v2479, %v2474
    %v3010 = vpack.c.b16 %v2485, %v2480
    %v3011 = vpack.c.b16 %v2486, %v2481
    %v3012 = vpack.c.b16 %v2487, %v2482
    %v3013 = vpack.c.b16 %v2488, %v2483
    %v3014 = vpack.c.b16 %v2489, %v2484
    %v3015 = vpack.c.b16 %v2495, %v2490
    %v3016 = vpack.c.b16 %v2496, %v2491
    %v3017 = vpack.c.b16 %v2497, %v2492
    %v3018 = vpack.c.b16 %v2498, %v2493
    %v3019 = vpack.c.b16 %v2499, %v2494
    %3540 = vmatpush.bf16.msra.mxu0 %v2535
    %3541 = vmatpush.bf16.msra.mxu0 %v2530
    %3542 = vmatpush.bf16.msra.mxu0 %v2525
    %3543 = vmatpush.bf16.msra.mxu0 %v2520
    %3544 = vmatpush.bf16.msra.mxu0 %v2515
    %3545 = vmatpush.bf16.msra.mxu0 %v2510
    %3546 = vmatpush.bf16.msra.mxu0 %v2505
    %3547 = vmatpush.bf16.msra.mxu0 %v2500
    %3548 = vmatmul.bf16.gmra.mxu0 %v810
    %v3549 = vpop.f32.mrf.mxu0
    %v3550 = vadd.f32 %v780, %v3549
    %v3551 = vpop.f32.mrf.mxu0
    %3552 = vdwg.mxu0
    %3553 = vmatpush.bf16.msra.mxu0 %v2575
    %3554 = vmatpush.bf16.msra.mxu0 %v2570
    %3555 = vmatpush.bf16.msra.mxu0 %v2565
    %3556 = vmatpush.bf16.msra.mxu0 %v2560
    %3557 = vmatpush.bf16.msra.mxu0 %v2555
    %3558 = vmatpush.bf16.msra.mxu0 %v2550
    %3559 = vmatpush.bf16.msra.mxu0 %v2545
    %3560 = vmatpush.bf16.msra.mxu0 %v2540
    %3561 = vmatmul.bf16.gmra.mxu0 %v811
    %v3562 = vpop.f32.mrf.mxu0
    %v3563 = vadd.f32 %v3550, %v3562
    %v3564 = vpop.f32.mrf.mxu0
    %3565 = vdwg.mxu0
    %3566 = vmatpush.bf16.msra.mxu0 %v2615
    %3567 = vmatpush.bf16.msra.mxu0 %v2610
    %3568 = vmatpush.bf16.msra.mxu0 %v2605
    %3569 = vmatpush.bf16.msra.mxu0 %v2600
    %3570 = vmatpush.bf16.msra.mxu0 %v2595
    %3571 = vmatpush.bf16.msra.mxu0 %v2590
    %3572 = vmatpush.bf16.msra.mxu0 %v2585
    %3573 = vmatpush.bf16.msra.mxu0 %v2580
    %3574 = vmatmul.bf16.gmra.mxu0 %v812
    %v3575 = vpop.f32.mrf.mxu0
    %v3576 = vadd.f32 %v3563, %v3575
    %v3577 = vpop.f32.mrf.mxu0
    %3578 = vdwg.mxu0
    %3579 = vmatpush.bf16.msra.mxu0 %v2655
    %3580 = vmatpush.bf16.msra.mxu0 %v2650
    %3581 = vmatpush.bf16.msra.mxu0 %v2645
    %3582 = vmatpush.bf16.msra.mxu0 %v2640
    %3583 = vmatpush.bf16.msra.mxu0 %v2635
    %3584 = vmatpush.bf16.msra.mxu0 %v2630
    %3585 = vmatpush.bf16.msra.mxu0 %v2625
    %3586 = vmatpush.bf16.msra.mxu0 %v2620
    %3587 = vmatmul.bf16.gmra.mxu0 %v813
    %v3588 = vpop.f32.mrf.mxu0
    %v3589 = vadd.f32 %v3576, %v3588
    %v3590 = vpop.f32.mrf.mxu0
    %3591 = vdwg.mxu0
    %3592 = vmatpush.bf16.msra.mxu0 %v2695
    %3593 = vmatpush.bf16.msra.mxu0 %v2690
    %3594 = vmatpush.bf16.msra.mxu0 %v2685
    %3595 = vmatpush.bf16.msra.mxu0 %v2680
    %3596 = vmatpush.bf16.msra.mxu0 %v2675
    %3597 = vmatpush.bf16.msra.mxu0 %v2670
    %3598 = vmatpush.bf16.msra.mxu0 %v2665
    %3599 = vmatpush.bf16.msra.mxu0 %v2660
    %3600 = vmatmul.bf16.gmra.mxu0 %v814
    %v3601 = vpop.f32.mrf.mxu0
    %v3602 = vadd.f32 %v3589, %v3601
    %v3603 = vpop.f32.mrf.mxu0
    %3604 = vdwg.mxu0
    %3605 = vmatpush.bf16.msra.mxu0 %v2735
    %3606 = vmatpush.bf16.msra.mxu0 %v2730
    %3607 = vmatpush.bf16.msra.mxu0 %v2725
    %3608 = vmatpush.bf16.msra.mxu0 %v2720
    %3609 = vmatpush.bf16.msra.mxu0 %v2715
    %3610 = vmatpush.bf16.msra.mxu0 %v2710
    %3611 = vmatpush.bf16.msra.mxu0 %v2705
    %3612 = vmatpush.bf16.msra.mxu0 %v2700
    %3613 = vmatmul.bf16.gmra.mxu0 %v815
    %v3614 = vpop.f32.mrf.mxu0
    %v3615 = vadd.f32 %v3602, %v3614
    %v3616 = vpop.f32.mrf.mxu0
    %3617 = vdwg.mxu0
    %3618 = vmatpush.bf16.msra.mxu0 %v2775
    %3619 = vmatpush.bf16.msra.mxu0 %v2770
    %3620 = vmatpush.bf16.msra.mxu0 %v2765
    %3621 = vmatpush.bf16.msra.mxu0 %v2760
    %3622 = vmatpush.bf16.msra.mxu0 %v2755
    %3623 = vmatpush.bf16.msra.mxu0 %v2750
    %3624 = vmatpush.bf16.msra.mxu0 %v2745
    %3625 = vmatpush.bf16.msra.mxu0 %v2740
    %3626 = vmatmul.bf16.gmra.mxu0 %v816
    %v3627 = vpop.f32.mrf.mxu0
    %v3628 = vadd.f32 %v3615, %v3627
    %v3629 = vpop.f32.mrf.mxu0
    %3630 = vdwg.mxu0
    %3631 = vmatpush.bf16.msra.mxu0 %v2815
    %3632 = vmatpush.bf16.msra.mxu0 %v2810
    %3633 = vmatpush.bf16.msra.mxu0 %v2805
    %3634 = vmatpush.bf16.msra.mxu0 %v2800
    %3635 = vmatpush.bf16.msra.mxu0 %v2795
    %3636 = vmatpush.bf16.msra.mxu0 %v2790
    %3637 = vmatpush.bf16.msra.mxu0 %v2785
    %3638 = vmatpush.bf16.msra.mxu0 %v2780
    %3639 = vmatmul.bf16.gmra.mxu0 %v817
    %v3640 = vpop.f32.mrf.mxu0
    %v3641 = vadd.f32 %v3628, %v3640
    %v3642 = vpop.f32.mrf.mxu0
    %3643 = vdwg.mxu0
    %3644 = vmatpush.bf16.msra.mxu0 %v2855
    %3645 = vmatpush.bf16.msra.mxu0 %v2850
    %3646 = vmatpush.bf16.msra.mxu0 %v2845
    %3647 = vmatpush.bf16.msra.mxu0 %v2840
    %3648 = vmatpush.bf16.msra.mxu0 %v2835
    %3649 = vmatpush.bf16.msra.mxu0 %v2830
    %3650 = vmatpush.bf16.msra.mxu0 %v2825
    %3651 = vmatpush.bf16.msra.mxu0 %v2820
    %3652 = vmatmul.bf16.gmra.mxu0 %v818
    %v3653 = vpop.f32.mrf.mxu0
    %v3654 = vadd.f32 %v3641, %v3653
    %v3655 = vpop.f32.mrf.mxu0
    %3656 = vdwg.mxu0
    %3657 = vmatpush.bf16.msra.mxu0 %v2895
    %3658 = vmatpush.bf16.msra.mxu0 %v2890
    %3659 = vmatpush.bf16.msra.mxu0 %v2885
    %3660 = vmatpush.bf16.msra.mxu0 %v2880
    %3661 = vmatpush.bf16.msra.mxu0 %v2875
    %3662 = vmatpush.bf16.msra.mxu0 %v2870
    %3663 = vmatpush.bf16.msra.mxu0 %v2865
    %3664 = vmatpush.bf16.msra.mxu0 %v2860
    %3665 = vmatmul.bf16.gmra.mxu0 %v819
    %v3666 = vpop.f32.mrf.mxu0
    %v3667 = vadd.f32 %v3654, %v3666
    %v3668 = vpop.f32.mrf.mxu0
    %3669 = vdwg.mxu0
    %3670 = vmatpush.bf16.msra.mxu0 %v2935
    %3671 = vmatpush.bf16.msra.mxu0 %v2930
    %3672 = vmatpush.bf16.msra.mxu0 %v2925
    %3673 = vmatpush.bf16.msra.mxu0 %v2920
    %3674 = vmatpush.bf16.msra.mxu0 %v2915
    %3675 = vmatpush.bf16.msra.mxu0 %v2910
    %3676 = vmatpush.bf16.msra.mxu0 %v2905
    %3677 = vmatpush.bf16.msra.mxu0 %v2900
    %3678 = vmatmul.bf16.gmra.mxu0 %v820
    %v3679 = vpop.f32.mrf.mxu0
    %v3680 = vadd.f32 %v3667, %v3679
    %v3681 = vpop.f32.mrf.mxu0
    %3682 = vdwg.mxu0
    %3683 = vmatpush.bf16.msra.mxu0 %v2975
    %3684 = vmatpush.bf16.msra.mxu0 %v2970
    %3685 = vmatpush.bf16.msra.mxu0 %v2965
    %3686 = vmatpush.bf16.msra.mxu0 %v2960
    %3687 = vmatpush.bf16.msra.mxu0 %v2955
    %3688 = vmatpush.bf16.msra.mxu0 %v2950
    %3689 = vmatpush.bf16.msra.mxu0 %v2945
    %3690 = vmatpush.bf16.msra.mxu0 %v2940
    %3691 = vmatmul.bf16.gmra.mxu0 %v821
    %v3692 = vpop.f32.mrf.mxu0
    %v3693 = vadd.f32 %v3680, %v3692
    %v3694 = vpop.f32.mrf.mxu0
    %3695 = vdwg.mxu0
    %3696 = vmatpush.bf16.msra.mxu0 %v3015
    %3697 = vmatpush.bf16.msra.mxu0 %v3010
    %3698 = vmatpush.bf16.msra.mxu0 %v3005
    %3699 = vmatpush.bf16.msra.mxu0 %v3000
    %3700 = vmatpush.bf16.msra.mxu0 %v2995
    %3701 = vmatpush.bf16.msra.mxu0 %v2990
    %3702 = vmatpush.bf16.msra.mxu0 %v2985
    %3703 = vmatpush.bf16.msra.mxu0 %v2980
    %3704 = vmatmul.bf16.gmra.mxu0 %v822
    %v3705 = vpop.f32.mrf.mxu0
    %v3706 = vadd.f32 %v3693, %v3705
    %v3707 = vpop.f32.mrf.mxu0
    %3708 = vdwg.mxu0
    %3709 = vmatpush.bf16.msra.mxu0 %v2536
    %3710 = vmatpush.bf16.msra.mxu0 %v2531
    %3711 = vmatpush.bf16.msra.mxu0 %v2526
    %3712 = vmatpush.bf16.msra.mxu0 %v2521
    %3713 = vmatpush.bf16.msra.mxu0 %v2516
    %3714 = vmatpush.bf16.msra.mxu0 %v2511
    %3715 = vmatpush.bf16.msra.mxu0 %v2506
    %3716 = vmatpush.bf16.msra.mxu0 %v2501
    %3717 = vmatmul.bf16.gmra.mxu0 %v810
    %v3718 = vpop.f32.mrf.mxu0
    %v3719 = vadd.f32 %v781, %v3718
    %v3720 = vpop.f32.mrf.mxu0
    %3721 = vdwg.mxu0
    %3722 = vmatpush.bf16.msra.mxu0 %v2576
    %3723 = vmatpush.bf16.msra.mxu0 %v2571
    %3724 = vmatpush.bf16.msra.mxu0 %v2566
    %3725 = vmatpush.bf16.msra.mxu0 %v2561
    %3726 = vmatpush.bf16.msra.mxu0 %v2556
    %3727 = vmatpush.bf16.msra.mxu0 %v2551
    %3728 = vmatpush.bf16.msra.mxu0 %v2546
    %3729 = vmatpush.bf16.msra.mxu0 %v2541
    %3730 = vmatmul.bf16.gmra.mxu0 %v811
    %v3731 = vpop.f32.mrf.mxu0
    %v3732 = vadd.f32 %v3719, %v3731
    %v3733 = vpop.f32.mrf.mxu0
    %3734 = vdwg.mxu0
    %3735 = vmatpush.bf16.msra.mxu0 %v2616
    %3736 = vmatpush.bf16.msra.mxu0 %v2611
    %3737 = vmatpush.bf16.msra.mxu0 %v2606
    %3738 = vmatpush.bf16.msra.mxu0 %v2601
    %3739 = vmatpush.bf16.msra.mxu0 %v2596
    %3740 = vmatpush.bf16.msra.mxu0 %v2591
    %3741 = vmatpush.bf16.msra.mxu0 %v2586
    %3742 = vmatpush.bf16.msra.mxu0 %v2581
    %3743 = vmatmul.bf16.gmra.mxu0 %v812
    %v3744 = vpop.f32.mrf.mxu0
    %v3745 = vadd.f32 %v3732, %v3744
    %v3746 = vpop.f32.mrf.mxu0
    %3747 = vdwg.mxu0
    %3748 = vmatpush.bf16.msra.mxu0 %v2656
    %3749 = vmatpush.bf16.msra.mxu0 %v2651
    %3750 = vmatpush.bf16.msra.mxu0 %v2646
    %3751 = vmatpush.bf16.msra.mxu0 %v2641
    %3752 = vmatpush.bf16.msra.mxu0 %v2636
    %3753 = vmatpush.bf16.msra.mxu0 %v2631
    %3754 = vmatpush.bf16.msra.mxu0 %v2626
    %3755 = vmatpush.bf16.msra.mxu0 %v2621
    %3756 = vmatmul.bf16.gmra.mxu0 %v813
    %v3757 = vpop.f32.mrf.mxu0
    %v3758 = vadd.f32 %v3745, %v3757
    %v3759 = vpop.f32.mrf.mxu0
    %3760 = vdwg.mxu0
    %3761 = vmatpush.bf16.msra.mxu0 %v2696
    %3762 = vmatpush.bf16.msra.mxu0 %v2691
    %3763 = vmatpush.bf16.msra.mxu0 %v2686
    %3764 = vmatpush.bf16.msra.mxu0 %v2681
    %3765 = vmatpush.bf16.msra.mxu0 %v2676
    %3766 = vmatpush.bf16.msra.mxu0 %v2671
    %3767 = vmatpush.bf16.msra.mxu0 %v2666
    %3768 = vmatpush.bf16.msra.mxu0 %v2661
    %3769 = vmatmul.bf16.gmra.mxu0 %v814
    %v3770 = vpop.f32.mrf.mxu0
    %v3771 = vadd.f32 %v3758, %v3770
    %v3772 = vpop.f32.mrf.mxu0
    %3773 = vdwg.mxu0
    %3774 = vmatpush.bf16.msra.mxu0 %v2736
    %3775 = vmatpush.bf16.msra.mxu0 %v2731
    %3776 = vmatpush.bf16.msra.mxu0 %v2726
    %3777 = vmatpush.bf16.msra.mxu0 %v2721
    %3778 = vmatpush.bf16.msra.mxu0 %v2716
    %3779 = vmatpush.bf16.msra.mxu0 %v2711
    %3780 = vmatpush.bf16.msra.mxu0 %v2706
    %3781 = vmatpush.bf16.msra.mxu0 %v2701
    %3782 = vmatmul.bf16.gmra.mxu0 %v815
    %v3783 = vpop.f32.mrf.mxu0
    %v3784 = vadd.f32 %v3771, %v3783
    %v3785 = vpop.f32.mrf.mxu0
    %3786 = vdwg.mxu0
    %3787 = vmatpush.bf16.msra.mxu0 %v2776
    %3788 = vmatpush.bf16.msra.mxu0 %v2771
    %3789 = vmatpush.bf16.msra.mxu0 %v2766
    %3790 = vmatpush.bf16.msra.mxu0 %v2761
    %3791 = vmatpush.bf16.msra.mxu0 %v2756
    %3792 = vmatpush.bf16.msra.mxu0 %v2751
    %3793 = vmatpush.bf16.msra.mxu0 %v2746
    %3794 = vmatpush.bf16.msra.mxu0 %v2741
    %3795 = vmatmul.bf16.gmra.mxu0 %v816
    %v3796 = vpop.f32.mrf.mxu0
    %v3797 = vadd.f32 %v3784, %v3796
    %v3798 = vpop.f32.mrf.mxu0
    %3799 = vdwg.mxu0
    %3800 = vmatpush.bf16.msra.mxu0 %v2816
    %3801 = vmatpush.bf16.msra.mxu0 %v2811
    %3802 = vmatpush.bf16.msra.mxu0 %v2806
    %3803 = vmatpush.bf16.msra.mxu0 %v2801
    %3804 = vmatpush.bf16.msra.mxu0 %v2796
    %3805 = vmatpush.bf16.msra.mxu0 %v2791
    %3806 = vmatpush.bf16.msra.mxu0 %v2786
    %3807 = vmatpush.bf16.msra.mxu0 %v2781
    %3808 = vmatmul.bf16.gmra.mxu0 %v817
    %v3809 = vpop.f32.mrf.mxu0
    %v3810 = vadd.f32 %v3797, %v3809
    %v3811 = vpop.f32.mrf.mxu0
    %3812 = vdwg.mxu0
    %3813 = vmatpush.bf16.msra.mxu0 %v2856
    %3814 = vmatpush.bf16.msra.mxu0 %v2851
    %3815 = vmatpush.bf16.msra.mxu0 %v2846
    %3816 = vmatpush.bf16.msra.mxu0 %v2841
    %3817 = vmatpush.bf16.msra.mxu0 %v2836
    %3818 = vmatpush.bf16.msra.mxu0 %v2831
    %3819 = vmatpush.bf16.msra.mxu0 %v2826
    %3820 = vmatpush.bf16.msra.mxu0 %v2821
    %3821 = vmatmul.bf16.gmra.mxu0 %v818
    %v3822 = vpop.f32.mrf.mxu0
    %v3823 = vadd.f32 %v3810, %v3822
    %v3824 = vpop.f32.mrf.mxu0
    %3825 = vdwg.mxu0
    %3826 = vmatpush.bf16.msra.mxu0 %v2896
    %3827 = vmatpush.bf16.msra.mxu0 %v2891
    %3828 = vmatpush.bf16.msra.mxu0 %v2886
    %3829 = vmatpush.bf16.msra.mxu0 %v2881
    %3830 = vmatpush.bf16.msra.mxu0 %v2876
    %3831 = vmatpush.bf16.msra.mxu0 %v2871
    %3832 = vmatpush.bf16.msra.mxu0 %v2866
    %3833 = vmatpush.bf16.msra.mxu0 %v2861
    %3834 = vmatmul.bf16.gmra.mxu0 %v819
    %v3835 = vpop.f32.mrf.mxu0
    %v3836 = vadd.f32 %v3823, %v3835
    %v3837 = vpop.f32.mrf.mxu0
    %3838 = vdwg.mxu0
    %3839 = vmatpush.bf16.msra.mxu0 %v2936
    %3840 = vmatpush.bf16.msra.mxu0 %v2931
    %3841 = vmatpush.bf16.msra.mxu0 %v2926
    %3842 = vmatpush.bf16.msra.mxu0 %v2921
    %3843 = vmatpush.bf16.msra.mxu0 %v2916
    %3844 = vmatpush.bf16.msra.mxu0 %v2911
    %3845 = vmatpush.bf16.msra.mxu0 %v2906
    %3846 = vmatpush.bf16.msra.mxu0 %v2901
    %3847 = vmatmul.bf16.gmra.mxu0 %v820
    %v3848 = vpop.f32.mrf.mxu0
    %v3849 = vadd.f32 %v3836, %v3848
    %v3850 = vpop.f32.mrf.mxu0
    %3851 = vdwg.mxu0
    %3852 = vmatpush.bf16.msra.mxu0 %v2976
    %3853 = vmatpush.bf16.msra.mxu0 %v2971
    %3854 = vmatpush.bf16.msra.mxu0 %v2966
    %3855 = vmatpush.bf16.msra.mxu0 %v2961
    %3856 = vmatpush.bf16.msra.mxu0 %v2956
    %3857 = vmatpush.bf16.msra.mxu0 %v2951
    %3858 = vmatpush.bf16.msra.mxu0 %v2946
    %3859 = vmatpush.bf16.msra.mxu0 %v2941
    %3860 = vmatmul.bf16.gmra.mxu0 %v821
    %v3861 = vpop.f32.mrf.mxu0
    %v3862 = vadd.f32 %v3849, %v3861
    %v3863 = vpop.f32.mrf.mxu0
    %3864 = vdwg.mxu0
    %3865 = vmatpush.bf16.msra.mxu0 %v3016
    %3866 = vmatpush.bf16.msra.mxu0 %v3011
    %3867 = vmatpush.bf16.msra.mxu0 %v3006
    %3868 = vmatpush.bf16.msra.mxu0 %v3001
    %3869 = vmatpush.bf16.msra.mxu0 %v2996
    %3870 = vmatpush.bf16.msra.mxu0 %v2991
    %3871 = vmatpush.bf16.msra.mxu0 %v2986
    %3872 = vmatpush.bf16.msra.mxu0 %v2981
    %3873 = vmatmul.bf16.gmra.mxu0 %v822
    %v3874 = vpop.f32.mrf.mxu0
    %v3875 = vadd.f32 %v3862, %v3874
    %v3876 = vpop.f32.mrf.mxu0
    %3877 = vdwg.mxu0
    %3878 = vmatpush.bf16.msra.mxu0 %v2537
    %3879 = vmatpush.bf16.msra.mxu0 %v2532
    %3880 = vmatpush.bf16.msra.mxu0 %v2527
    %3881 = vmatpush.bf16.msra.mxu0 %v2522
    %3882 = vmatpush.bf16.msra.mxu0 %v2517
    %3883 = vmatpush.bf16.msra.mxu0 %v2512
    %3884 = vmatpush.bf16.msra.mxu0 %v2507
    %3885 = vmatpush.bf16.msra.mxu0 %v2502
    %3886 = vmatmul.bf16.gmra.mxu0 %v810
    %v3887 = vpop.f32.mrf.mxu0
    %v3888 = vadd.f32 %v782, %v3887
    %v3889 = vpop.f32.mrf.mxu0
    %3890 = vdwg.mxu0
    %3891 = vmatpush.bf16.msra.mxu0 %v2577
    %3892 = vmatpush.bf16.msra.mxu0 %v2572
    %3893 = vmatpush.bf16.msra.mxu0 %v2567
    %3894 = vmatpush.bf16.msra.mxu0 %v2562
    %3895 = vmatpush.bf16.msra.mxu0 %v2557
    %3896 = vmatpush.bf16.msra.mxu0 %v2552
    %3897 = vmatpush.bf16.msra.mxu0 %v2547
    %3898 = vmatpush.bf16.msra.mxu0 %v2542
    %3899 = vmatmul.bf16.gmra.mxu0 %v811
    %v3900 = vpop.f32.mrf.mxu0
    %v3901 = vadd.f32 %v3888, %v3900
    %v3902 = vpop.f32.mrf.mxu0
    %3903 = vdwg.mxu0
    %3904 = vmatpush.bf16.msra.mxu0 %v2617
    %3905 = vmatpush.bf16.msra.mxu0 %v2612
    %3906 = vmatpush.bf16.msra.mxu0 %v2607
    %3907 = vmatpush.bf16.msra.mxu0 %v2602
    %3908 = vmatpush.bf16.msra.mxu0 %v2597
    %3909 = vmatpush.bf16.msra.mxu0 %v2592
    %3910 = vmatpush.bf16.msra.mxu0 %v2587
    %3911 = vmatpush.bf16.msra.mxu0 %v2582
    %3912 = vmatmul.bf16.gmra.mxu0 %v812
    %v3913 = vpop.f32.mrf.mxu0
    %v3914 = vadd.f32 %v3901, %v3913
    %v3915 = vpop.f32.mrf.mxu0
    %3916 = vdwg.mxu0
    %3917 = vmatpush.bf16.msra.mxu0 %v2657
    %3918 = vmatpush.bf16.msra.mxu0 %v2652
    %3919 = vmatpush.bf16.msra.mxu0 %v2647
    %3920 = vmatpush.bf16.msra.mxu0 %v2642
    %3921 = vmatpush.bf16.msra.mxu0 %v2637
    %3922 = vmatpush.bf16.msra.mxu0 %v2632
    %3923 = vmatpush.bf16.msra.mxu0 %v2627
    %3924 = vmatpush.bf16.msra.mxu0 %v2622
    %3925 = vmatmul.bf16.gmra.mxu0 %v813
    %v3926 = vpop.f32.mrf.mxu0
    %v3927 = vadd.f32 %v3914, %v3926
    %v3928 = vpop.f32.mrf.mxu0
    %3929 = vdwg.mxu0
    %3930 = vmatpush.bf16.msra.mxu0 %v2697
    %3931 = vmatpush.bf16.msra.mxu0 %v2692
    %3932 = vmatpush.bf16.msra.mxu0 %v2687
    %3933 = vmatpush.bf16.msra.mxu0 %v2682
    %3934 = vmatpush.bf16.msra.mxu0 %v2677
    %3935 = vmatpush.bf16.msra.mxu0 %v2672
    %3936 = vmatpush.bf16.msra.mxu0 %v2667
    %3937 = vmatpush.bf16.msra.mxu0 %v2662
    %3938 = vmatmul.bf16.gmra.mxu0 %v814
    %v3939 = vpop.f32.mrf.mxu0
    %v3940 = vadd.f32 %v3927, %v3939
    %v3941 = vpop.f32.mrf.mxu0
    %3942 = vdwg.mxu0
    %3943 = vmatpush.bf16.msra.mxu0 %v2737
    %3944 = vmatpush.bf16.msra.mxu0 %v2732
    %3945 = vmatpush.bf16.msra.mxu0 %v2727
    %3946 = vmatpush.bf16.msra.mxu0 %v2722
    %3947 = vmatpush.bf16.msra.mxu0 %v2717
    %3948 = vmatpush.bf16.msra.mxu0 %v2712
    %3949 = vmatpush.bf16.msra.mxu0 %v2707
    %3950 = vmatpush.bf16.msra.mxu0 %v2702
    %3951 = vmatmul.bf16.gmra.mxu0 %v815
    %v3952 = vpop.f32.mrf.mxu0
    %v3953 = vadd.f32 %v3940, %v3952
    %v3954 = vpop.f32.mrf.mxu0
    %3955 = vdwg.mxu0
    %3956 = vmatpush.bf16.msra.mxu0 %v2777
    %3957 = vmatpush.bf16.msra.mxu0 %v2772
    %3958 = vmatpush.bf16.msra.mxu0 %v2767
    %3959 = vmatpush.bf16.msra.mxu0 %v2762
    %3960 = vmatpush.bf16.msra.mxu0 %v2757
    %3961 = vmatpush.bf16.msra.mxu0 %v2752
    %3962 = vmatpush.bf16.msra.mxu0 %v2747
    %3963 = vmatpush.bf16.msra.mxu0 %v2742
    %3964 = vmatmul.bf16.gmra.mxu0 %v816
    %v3965 = vpop.f32.mrf.mxu0
    %v3966 = vadd.f32 %v3953, %v3965
    %v3967 = vpop.f32.mrf.mxu0
    %3968 = vdwg.mxu0
    %3969 = vmatpush.bf16.msra.mxu0 %v2817
    %3970 = vmatpush.bf16.msra.mxu0 %v2812
    %3971 = vmatpush.bf16.msra.mxu0 %v2807
    %3972 = vmatpush.bf16.msra.mxu0 %v2802
    %3973 = vmatpush.bf16.msra.mxu0 %v2797
    %3974 = vmatpush.bf16.msra.mxu0 %v2792
    %3975 = vmatpush.bf16.msra.mxu0 %v2787
    %3976 = vmatpush.bf16.msra.mxu0 %v2782
    %3977 = vmatmul.bf16.gmra.mxu0 %v817
    %v3978 = vpop.f32.mrf.mxu0
    %v3979 = vadd.f32 %v3966, %v3978
    %v3980 = vpop.f32.mrf.mxu0
    %3981 = vdwg.mxu0
    %3982 = vmatpush.bf16.msra.mxu0 %v2857
    %3983 = vmatpush.bf16.msra.mxu0 %v2852
    %3984 = vmatpush.bf16.msra.mxu0 %v2847
    %3985 = vmatpush.bf16.msra.mxu0 %v2842
    %3986 = vmatpush.bf16.msra.mxu0 %v2837
    %3987 = vmatpush.bf16.msra.mxu0 %v2832
    %3988 = vmatpush.bf16.msra.mxu0 %v2827
    %3989 = vmatpush.bf16.msra.mxu0 %v2822
    %3990 = vmatmul.bf16.gmra.mxu0 %v818
    %v3991 = vpop.f32.mrf.mxu0
    %v3992 = vadd.f32 %v3979, %v3991
    %v3993 = vpop.f32.mrf.mxu0
    %3994 = vdwg.mxu0
    %3995 = vmatpush.bf16.msra.mxu0 %v2897
    %3996 = vmatpush.bf16.msra.mxu0 %v2892
    %3997 = vmatpush.bf16.msra.mxu0 %v2887
    %3998 = vmatpush.bf16.msra.mxu0 %v2882
    %3999 = vmatpush.bf16.msra.mxu0 %v2877
    %4000 = vmatpush.bf16.msra.mxu0 %v2872
    %4001 = vmatpush.bf16.msra.mxu0 %v2867
    %4002 = vmatpush.bf16.msra.mxu0 %v2862
    %4003 = vmatmul.bf16.gmra.mxu0 %v819
    %v4004 = vpop.f32.mrf.mxu0
    %v4005 = vadd.f32 %v3992, %v4004
    %v4006 = vpop.f32.mrf.mxu0
    %4007 = vdwg.mxu0
    %4008 = vmatpush.bf16.msra.mxu0 %v2937
    %4009 = vmatpush.bf16.msra.mxu0 %v2932
    %4010 = vmatpush.bf16.msra.mxu0 %v2927
    %4011 = vmatpush.bf16.msra.mxu0 %v2922
    %4012 = vmatpush.bf16.msra.mxu0 %v2917
    %4013 = vmatpush.bf16.msra.mxu0 %v2912
    %4014 = vmatpush.bf16.msra.mxu0 %v2907
    %4015 = vmatpush.bf16.msra.mxu0 %v2902
    %4016 = vmatmul.bf16.gmra.mxu0 %v820
    %v4017 = vpop.f32.mrf.mxu0
    %v4018 = vadd.f32 %v4005, %v4017
    %v4019 = vpop.f32.mrf.mxu0
    %4020 = vdwg.mxu0
    %4021 = vmatpush.bf16.msra.mxu0 %v2977
    %4022 = vmatpush.bf16.msra.mxu0 %v2972
    %4023 = vmatpush.bf16.msra.mxu0 %v2967
    %4024 = vmatpush.bf16.msra.mxu0 %v2962
    %4025 = vmatpush.bf16.msra.mxu0 %v2957
    %4026 = vmatpush.bf16.msra.mxu0 %v2952
    %4027 = vmatpush.bf16.msra.mxu0 %v2947
    %4028 = vmatpush.bf16.msra.mxu0 %v2942
    %4029 = vmatmul.bf16.gmra.mxu0 %v821
    %v4030 = vpop.f32.mrf.mxu0
    %v4031 = vadd.f32 %v4018, %v4030
    %v4032 = vpop.f32.mrf.mxu0
    %4033 = vdwg.mxu0
    %4034 = vmatpush.bf16.msra.mxu0 %v3017
    %4035 = vmatpush.bf16.msra.mxu0 %v3012
    %4036 = vmatpush.bf16.msra.mxu0 %v3007
    %4037 = vmatpush.bf16.msra.mxu0 %v3002
    %4038 = vmatpush.bf16.msra.mxu0 %v2997
    %4039 = vmatpush.bf16.msra.mxu0 %v2992
    %4040 = vmatpush.bf16.msra.mxu0 %v2987
    %4041 = vmatpush.bf16.msra.mxu0 %v2982
    %4042 = vmatmul.bf16.gmra.mxu0 %v822
    %v4043 = vpop.f32.mrf.mxu0
    %v4044 = vadd.f32 %v4031, %v4043
    %v4045 = vpop.f32.mrf.mxu0
    %4046 = vdwg.mxu0
    %4047 = vmatpush.bf16.msra.mxu0 %v2538
    %4048 = vmatpush.bf16.msra.mxu0 %v2533
    %4049 = vmatpush.bf16.msra.mxu0 %v2528
    %4050 = vmatpush.bf16.msra.mxu0 %v2523
    %4051 = vmatpush.bf16.msra.mxu0 %v2518
    %4052 = vmatpush.bf16.msra.mxu0 %v2513
    %4053 = vmatpush.bf16.msra.mxu0 %v2508
    %4054 = vmatpush.bf16.msra.mxu0 %v2503
    %4055 = vmatmul.bf16.gmra.mxu0 %v810
    %v4056 = vpop.f32.mrf.mxu0
    %v4057 = vadd.f32 %v783, %v4056
    %v4058 = vpop.f32.mrf.mxu0
    %4059 = vdwg.mxu0
    %4060 = vmatpush.bf16.msra.mxu0 %v2578
    %4061 = vmatpush.bf16.msra.mxu0 %v2573
    %4062 = vmatpush.bf16.msra.mxu0 %v2568
    %4063 = vmatpush.bf16.msra.mxu0 %v2563
    %4064 = vmatpush.bf16.msra.mxu0 %v2558
    %4065 = vmatpush.bf16.msra.mxu0 %v2553
    %4066 = vmatpush.bf16.msra.mxu0 %v2548
    %4067 = vmatpush.bf16.msra.mxu0 %v2543
    %4068 = vmatmul.bf16.gmra.mxu0 %v811
    %v4069 = vpop.f32.mrf.mxu0
    %v4070 = vadd.f32 %v4057, %v4069
    %v4071 = vpop.f32.mrf.mxu0
    %4072 = vdwg.mxu0
    %4073 = vmatpush.bf16.msra.mxu0 %v2618
    %4074 = vmatpush.bf16.msra.mxu0 %v2613
    %4075 = vmatpush.bf16.msra.mxu0 %v2608
    %4076 = vmatpush.bf16.msra.mxu0 %v2603
    %4077 = vmatpush.bf16.msra.mxu0 %v2598
    %4078 = vmatpush.bf16.msra.mxu0 %v2593
    %4079 = vmatpush.bf16.msra.mxu0 %v2588
    %4080 = vmatpush.bf16.msra.mxu0 %v2583
    %4081 = vmatmul.bf16.gmra.mxu0 %v812
    %v4082 = vpop.f32.mrf.mxu0
    %v4083 = vadd.f32 %v4070, %v4082
    %v4084 = vpop.f32.mrf.mxu0
    %4085 = vdwg.mxu0
    %4086 = vmatpush.bf16.msra.mxu0 %v2658
    %4087 = vmatpush.bf16.msra.mxu0 %v2653
    %4088 = vmatpush.bf16.msra.mxu0 %v2648
    %4089 = vmatpush.bf16.msra.mxu0 %v2643
    %4090 = vmatpush.bf16.msra.mxu0 %v2638
    %4091 = vmatpush.bf16.msra.mxu0 %v2633
    %4092 = vmatpush.bf16.msra.mxu0 %v2628
    %4093 = vmatpush.bf16.msra.mxu0 %v2623
    %4094 = vmatmul.bf16.gmra.mxu0 %v813
    %v4095 = vpop.f32.mrf.mxu0
    %v4096 = vadd.f32 %v4083, %v4095
    %v4097 = vpop.f32.mrf.mxu0
    %4098 = vdwg.mxu0
    %4099 = vmatpush.bf16.msra.mxu0 %v2698
    %4100 = vmatpush.bf16.msra.mxu0 %v2693
    %4101 = vmatpush.bf16.msra.mxu0 %v2688
    %4102 = vmatpush.bf16.msra.mxu0 %v2683
    %4103 = vmatpush.bf16.msra.mxu0 %v2678
    %4104 = vmatpush.bf16.msra.mxu0 %v2673
    %4105 = vmatpush.bf16.msra.mxu0 %v2668
    %4106 = vmatpush.bf16.msra.mxu0 %v2663
    %4107 = vmatmul.bf16.gmra.mxu0 %v814
    %v4108 = vpop.f32.mrf.mxu0
    %v4109 = vadd.f32 %v4096, %v4108
    %v4110 = vpop.f32.mrf.mxu0
    %4111 = vdwg.mxu0
    %4112 = vmatpush.bf16.msra.mxu0 %v2738
    %4113 = vmatpush.bf16.msra.mxu0 %v2733
    %4114 = vmatpush.bf16.msra.mxu0 %v2728
    %4115 = vmatpush.bf16.msra.mxu0 %v2723
    %4116 = vmatpush.bf16.msra.mxu0 %v2718
    %4117 = vmatpush.bf16.msra.mxu0 %v2713
    %4118 = vmatpush.bf16.msra.mxu0 %v2708
    %4119 = vmatpush.bf16.msra.mxu0 %v2703
    %4120 = vmatmul.bf16.gmra.mxu0 %v815
    %v4121 = vpop.f32.mrf.mxu0
    %v4122 = vadd.f32 %v4109, %v4121
    %v4123 = vpop.f32.mrf.mxu0
    %4124 = vdwg.mxu0
    %4125 = vmatpush.bf16.msra.mxu0 %v2778
    %4126 = vmatpush.bf16.msra.mxu0 %v2773
    %4127 = vmatpush.bf16.msra.mxu0 %v2768
    %4128 = vmatpush.bf16.msra.mxu0 %v2763
    %4129 = vmatpush.bf16.msra.mxu0 %v2758
    %4130 = vmatpush.bf16.msra.mxu0 %v2753
    %4131 = vmatpush.bf16.msra.mxu0 %v2748
    %4132 = vmatpush.bf16.msra.mxu0 %v2743
    %4133 = vmatmul.bf16.gmra.mxu0 %v816
    %v4134 = vpop.f32.mrf.mxu0
    %v4135 = vadd.f32 %v4122, %v4134
    %v4136 = vpop.f32.mrf.mxu0
    %4137 = vdwg.mxu0
    %4138 = vmatpush.bf16.msra.mxu0 %v2818
    %4139 = vmatpush.bf16.msra.mxu0 %v2813
    %4140 = vmatpush.bf16.msra.mxu0 %v2808
    %4141 = vmatpush.bf16.msra.mxu0 %v2803
    %4142 = vmatpush.bf16.msra.mxu0 %v2798
    %4143 = vmatpush.bf16.msra.mxu0 %v2793
    %4144 = vmatpush.bf16.msra.mxu0 %v2788
    %4145 = vmatpush.bf16.msra.mxu0 %v2783
    %4146 = vmatmul.bf16.gmra.mxu0 %v817
    %v4147 = vpop.f32.mrf.mxu0
    %v4148 = vadd.f32 %v4135, %v4147
    %v4149 = vpop.f32.mrf.mxu0
    %4150 = vdwg.mxu0
    %4151 = vmatpush.bf16.msra.mxu0 %v2858
    %4152 = vmatpush.bf16.msra.mxu0 %v2853
    %4153 = vmatpush.bf16.msra.mxu0 %v2848
    %4154 = vmatpush.bf16.msra.mxu0 %v2843
    %4155 = vmatpush.bf16.msra.mxu0 %v2838
    %4156 = vmatpush.bf16.msra.mxu0 %v2833
    %4157 = vmatpush.bf16.msra.mxu0 %v2828
    %4158 = vmatpush.bf16.msra.mxu0 %v2823
    %4159 = vmatmul.bf16.gmra.mxu0 %v818
    %v4160 = vpop.f32.mrf.mxu0
    %v4161 = vadd.f32 %v4148, %v4160
    %v4162 = vpop.f32.mrf.mxu0
    %4163 = vdwg.mxu0
    %4164 = vmatpush.bf16.msra.mxu0 %v2898
    %4165 = vmatpush.bf16.msra.mxu0 %v2893
    %4166 = vmatpush.bf16.msra.mxu0 %v2888
    %4167 = vmatpush.bf16.msra.mxu0 %v2883
    %4168 = vmatpush.bf16.msra.mxu0 %v2878
    %4169 = vmatpush.bf16.msra.mxu0 %v2873
    %4170 = vmatpush.bf16.msra.mxu0 %v2868
    %4171 = vmatpush.bf16.msra.mxu0 %v2863
    %4172 = vmatmul.bf16.gmra.mxu0 %v819
    %v4173 = vpop.f32.mrf.mxu0
    %v4174 = vadd.f32 %v4161, %v4173
    %v4175 = vpop.f32.mrf.mxu0
    %4176 = vdwg.mxu0
    %4177 = vmatpush.bf16.msra.mxu0 %v2938
    %4178 = vmatpush.bf16.msra.mxu0 %v2933
    %4179 = vmatpush.bf16.msra.mxu0 %v2928
    %4180 = vmatpush.bf16.msra.mxu0 %v2923
    %4181 = vmatpush.bf16.msra.mxu0 %v2918
    %4182 = vmatpush.bf16.msra.mxu0 %v2913
    %4183 = vmatpush.bf16.msra.mxu0 %v2908
    %4184 = vmatpush.bf16.msra.mxu0 %v2903
    %4185 = vmatmul.bf16.gmra.mxu0 %v820
    %v4186 = vpop.f32.mrf.mxu0
    %v4187 = vadd.f32 %v4174, %v4186
    %v4188 = vpop.f32.mrf.mxu0
    %4189 = vdwg.mxu0
    %4190 = vmatpush.bf16.msra.mxu0 %v2978
    %4191 = vmatpush.bf16.msra.mxu0 %v2973
    %4192 = vmatpush.bf16.msra.mxu0 %v2968
    %4193 = vmatpush.bf16.msra.mxu0 %v2963
    %4194 = vmatpush.bf16.msra.mxu0 %v2958
    %4195 = vmatpush.bf16.msra.mxu0 %v2953
    %4196 = vmatpush.bf16.msra.mxu0 %v2948
    %4197 = vmatpush.bf16.msra.mxu0 %v2943
    %4198 = vmatmul.bf16.gmra.mxu0 %v821
    %v4199 = vpop.f32.mrf.mxu0
    %v4200 = vadd.f32 %v4187, %v4199
    %v4201 = vpop.f32.mrf.mxu0
    %4202 = vdwg.mxu0
    %4203 = vmatpush.bf16.msra.mxu0 %v3018
    %4204 = vmatpush.bf16.msra.mxu0 %v3013
    %4205 = vmatpush.bf16.msra.mxu0 %v3008
    %4206 = vmatpush.bf16.msra.mxu0 %v3003
    %4207 = vmatpush.bf16.msra.mxu0 %v2998
    %4208 = vmatpush.bf16.msra.mxu0 %v2993
    %4209 = vmatpush.bf16.msra.mxu0 %v2988
    %4210 = vmatpush.bf16.msra.mxu0 %v2983
    %4211 = vmatmul.bf16.gmra.mxu0 %v822
    %v4212 = vpop.f32.mrf.mxu0
    %v4213 = vadd.f32 %v4200, %v4212
    %v4214 = vpop.f32.mrf.mxu0
    %4215 = vdwg.mxu0
    %4216 = vmatpush.bf16.msra.mxu0 %v2539
    %4217 = vmatpush.bf16.msra.mxu0 %v2534
    %4218 = vmatpush.bf16.msra.mxu0 %v2529
    %4219 = vmatpush.bf16.msra.mxu0 %v2524
    %4220 = vmatpush.bf16.msra.mxu0 %v2519
    %4221 = vmatpush.bf16.msra.mxu0 %v2514
    %4222 = vmatpush.bf16.msra.mxu0 %v2509
    %4223 = vmatpush.bf16.msra.mxu0 %v2504
    %4224 = vmatmul.bf16.gmra.mxu0 %v810
    %v4225 = vpop.f32.mrf.mxu0
    %v4226 = vadd.f32 %v784, %v4225
    %v4227 = vpop.f32.mrf.mxu0
    %4228 = vdwg.mxu0
    %4229 = vmatpush.bf16.msra.mxu0 %v2579
    %4230 = vmatpush.bf16.msra.mxu0 %v2574
    %4231 = vmatpush.bf16.msra.mxu0 %v2569
    %4232 = vmatpush.bf16.msra.mxu0 %v2564
    %4233 = vmatpush.bf16.msra.mxu0 %v2559
    %4234 = vmatpush.bf16.msra.mxu0 %v2554
    %4235 = vmatpush.bf16.msra.mxu0 %v2549
    %4236 = vmatpush.bf16.msra.mxu0 %v2544
    %4237 = vmatmul.bf16.gmra.mxu0 %v811
    %v4238 = vpop.f32.mrf.mxu0
    %v4239 = vadd.f32 %v4226, %v4238
    %v4240 = vpop.f32.mrf.mxu0
    %4241 = vdwg.mxu0
    %4242 = vmatpush.bf16.msra.mxu0 %v2619
    %4243 = vmatpush.bf16.msra.mxu0 %v2614
    %4244 = vmatpush.bf16.msra.mxu0 %v2609
    %4245 = vmatpush.bf16.msra.mxu0 %v2604
    %4246 = vmatpush.bf16.msra.mxu0 %v2599
    %4247 = vmatpush.bf16.msra.mxu0 %v2594
    %4248 = vmatpush.bf16.msra.mxu0 %v2589
    %4249 = vmatpush.bf16.msra.mxu0 %v2584
    %4250 = vmatmul.bf16.gmra.mxu0 %v812
    %v4251 = vpop.f32.mrf.mxu0
    %v4252 = vadd.f32 %v4239, %v4251
    %v4253 = vpop.f32.mrf.mxu0
    %4254 = vdwg.mxu0
    %4255 = vmatpush.bf16.msra.mxu0 %v2659
    %4256 = vmatpush.bf16.msra.mxu0 %v2654
    %4257 = vmatpush.bf16.msra.mxu0 %v2649
    %4258 = vmatpush.bf16.msra.mxu0 %v2644
    %4259 = vmatpush.bf16.msra.mxu0 %v2639
    %4260 = vmatpush.bf16.msra.mxu0 %v2634
    %4261 = vmatpush.bf16.msra.mxu0 %v2629
    %4262 = vmatpush.bf16.msra.mxu0 %v2624
    %4263 = vmatmul.bf16.gmra.mxu0 %v813
    %v4264 = vpop.f32.mrf.mxu0
    %v4265 = vadd.f32 %v4252, %v4264
    %v4266 = vpop.f32.mrf.mxu0
    %4267 = vdwg.mxu0
    %4268 = vmatpush.bf16.msra.mxu0 %v2699
    %4269 = vmatpush.bf16.msra.mxu0 %v2694
    %4270 = vmatpush.bf16.msra.mxu0 %v2689
    %4271 = vmatpush.bf16.msra.mxu0 %v2684
    %4272 = vmatpush.bf16.msra.mxu0 %v2679
    %4273 = vmatpush.bf16.msra.mxu0 %v2674
    %4274 = vmatpush.bf16.msra.mxu0 %v2669
    %4275 = vmatpush.bf16.msra.mxu0 %v2664
    %4276 = vmatmul.bf16.gmra.mxu0 %v814
    %v4277 = vpop.f32.mrf.mxu0
    %v4278 = vadd.f32 %v4265, %v4277
    %v4279 = vpop.f32.mrf.mxu0
    %4280 = vdwg.mxu0
    %4281 = vmatpush.bf16.msra.mxu0 %v2739
    %4282 = vmatpush.bf16.msra.mxu0 %v2734
    %4283 = vmatpush.bf16.msra.mxu0 %v2729
    %4284 = vmatpush.bf16.msra.mxu0 %v2724
    %4285 = vmatpush.bf16.msra.mxu0 %v2719
    %4286 = vmatpush.bf16.msra.mxu0 %v2714
    %4287 = vmatpush.bf16.msra.mxu0 %v2709
    %4288 = vmatpush.bf16.msra.mxu0 %v2704
    %4289 = vmatmul.bf16.gmra.mxu0 %v815
    %v4290 = vpop.f32.mrf.mxu0
    %v4291 = vadd.f32 %v4278, %v4290
    %v4292 = vpop.f32.mrf.mxu0
    %4293 = vdwg.mxu0
    %4294 = vmatpush.bf16.msra.mxu0 %v2779
    %4295 = vmatpush.bf16.msra.mxu0 %v2774
    %4296 = vmatpush.bf16.msra.mxu0 %v2769
    %4297 = vmatpush.bf16.msra.mxu0 %v2764
    %4298 = vmatpush.bf16.msra.mxu0 %v2759
    %4299 = vmatpush.bf16.msra.mxu0 %v2754
    %4300 = vmatpush.bf16.msra.mxu0 %v2749
    %4301 = vmatpush.bf16.msra.mxu0 %v2744
    %4302 = vmatmul.bf16.gmra.mxu0 %v816
    %v4303 = vpop.f32.mrf.mxu0
    %v4304 = vadd.f32 %v4291, %v4303
    %v4305 = vpop.f32.mrf.mxu0
    %4306 = vdwg.mxu0
    %4307 = vmatpush.bf16.msra.mxu0 %v2819
    %4308 = vmatpush.bf16.msra.mxu0 %v2814
    %4309 = vmatpush.bf16.msra.mxu0 %v2809
    %4310 = vmatpush.bf16.msra.mxu0 %v2804
    %4311 = vmatpush.bf16.msra.mxu0 %v2799
    %4312 = vmatpush.bf16.msra.mxu0 %v2794
    %4313 = vmatpush.bf16.msra.mxu0 %v2789
    %4314 = vmatpush.bf16.msra.mxu0 %v2784
    %4315 = vmatmul.bf16.gmra.mxu0 %v817
    %v4316 = vpop.f32.mrf.mxu0
    %v4317 = vadd.f32 %v4304, %v4316
    %v4318 = vpop.f32.mrf.mxu0
    %4319 = vdwg.mxu0
    %4320 = vmatpush.bf16.msra.mxu0 %v2859
    %4321 = vmatpush.bf16.msra.mxu0 %v2854
    %4322 = vmatpush.bf16.msra.mxu0 %v2849
    %4323 = vmatpush.bf16.msra.mxu0 %v2844
    %4324 = vmatpush.bf16.msra.mxu0 %v2839
    %4325 = vmatpush.bf16.msra.mxu0 %v2834
    %4326 = vmatpush.bf16.msra.mxu0 %v2829
    %4327 = vmatpush.bf16.msra.mxu0 %v2824
    %4328 = vmatmul.bf16.gmra.mxu0 %v818
    %v4329 = vpop.f32.mrf.mxu0
    %v4330 = vadd.f32 %v4317, %v4329
    %v4331 = vpop.f32.mrf.mxu0
    %4332 = vdwg.mxu0
    %4333 = vmatpush.bf16.msra.mxu0 %v2899
    %4334 = vmatpush.bf16.msra.mxu0 %v2894
    %4335 = vmatpush.bf16.msra.mxu0 %v2889
    %4336 = vmatpush.bf16.msra.mxu0 %v2884
    %4337 = vmatpush.bf16.msra.mxu0 %v2879
    %4338 = vmatpush.bf16.msra.mxu0 %v2874
    %4339 = vmatpush.bf16.msra.mxu0 %v2869
    %4340 = vmatpush.bf16.msra.mxu0 %v2864
    %4341 = vmatmul.bf16.gmra.mxu0 %v819
    %v4342 = vpop.f32.mrf.mxu0
    %v4343 = vadd.f32 %v4330, %v4342
    %v4344 = vpop.f32.mrf.mxu0
    %4345 = vdwg.mxu0
    %4346 = vmatpush.bf16.msra.mxu0 %v2939
    %4347 = vmatpush.bf16.msra.mxu0 %v2934
    %4348 = vmatpush.bf16.msra.mxu0 %v2929
    %4349 = vmatpush.bf16.msra.mxu0 %v2924
    %4350 = vmatpush.bf16.msra.mxu0 %v2919
    %4351 = vmatpush.bf16.msra.mxu0 %v2914
    %4352 = vmatpush.bf16.msra.mxu0 %v2909
    %4353 = vmatpush.bf16.msra.mxu0 %v2904
    %4354 = vmatmul.bf16.gmra.mxu0 %v820
    %v4355 = vpop.f32.mrf.mxu0
    %v4356 = vadd.f32 %v4343, %v4355
    %v4357 = vpop.f32.mrf.mxu0
    %4358 = vdwg.mxu0
    %4359 = vmatpush.bf16.msra.mxu0 %v2979
    %4360 = vmatpush.bf16.msra.mxu0 %v2974
    %4361 = vmatpush.bf16.msra.mxu0 %v2969
    %4362 = vmatpush.bf16.msra.mxu0 %v2964
    %4363 = vmatpush.bf16.msra.mxu0 %v2959
    %4364 = vmatpush.bf16.msra.mxu0 %v2954
    %4365 = vmatpush.bf16.msra.mxu0 %v2949
    %4366 = vmatpush.bf16.msra.mxu0 %v2944
    %4367 = vmatmul.bf16.gmra.mxu0 %v821
    %v4368 = vpop.f32.mrf.mxu0
    %v4369 = vadd.f32 %v4356, %v4368
    %v4370 = vpop.f32.mrf.mxu0
    %4371 = vdwg.mxu0
    %4372 = vmatpush.bf16.msra.mxu0 %v3019
    %4373 = vmatpush.bf16.msra.mxu0 %v3014
    %4374 = vmatpush.bf16.msra.mxu0 %v3009
    %4375 = vmatpush.bf16.msra.mxu0 %v3004
    %4376 = vmatpush.bf16.msra.mxu0 %v2999
    %4377 = vmatpush.bf16.msra.mxu0 %v2994
    %4378 = vmatpush.bf16.msra.mxu0 %v2989
    %4379 = vmatpush.bf16.msra.mxu0 %v2984
    %4380 = vmatmul.bf16.gmra.mxu0 %v822
    %v4381 = vpop.f32.mrf.mxu0
    %v4382 = vadd.f32 %v4369, %v4381
    %v4383 = vpop.f32.mrf.mxu0
    %4384 = vdwg.mxu0
    %v4385 = vmax.f32 %v3706, 0.0
    %v4386 = vmax.f32 %v3875, 0.0
    %v4387 = vmax.f32 %v4044, 0.0
    %v4388 = vmax.f32 %v4213, 0.0
    %v4389 = vmax.f32 %v4382, 0.0
    %v4390 = vpack.c.bf16 %v4385, %v4385
    %v4391 = vpack.c.bf16 %v4386, %v4386
    %v4392 = vpack.c.bf16 %v4387, %v4387
    %v4393 = vpack.c.bf16 %v4388, %v4388
    %v4394 = vpack.c.bf16 %v4389, %v4389
    %v4395 = vld [vmem:[#allocation7] sm:$0xff]
    %v4396 = vld [vmem:[#allocation7 + $0x8] sm:$0xf]
    %v4397 = vld [vmem:[#allocation7 + $0xc] sm:$0xff]
    %v4398 = vld [vmem:[#allocation7 + $0x14] sm:$0xf]
    %v4399 = vld [vmem:[#allocation7 + $0x18] sm:$0xff]
    %v4400 = vld [vmem:[#allocation7 + $0x20] sm:$0xf]
    %v4401 = vld [vmem:[#allocation7 + $0x24] sm:$0xff]
    %v4402 = vld [vmem:[#allocation7 + $0x2c] sm:$0xf]
    %v4403 = vld [vmem:[#allocation7 + $0x30] sm:$0xff]
    %v4404 = vld [vmem:[#allocation7 + $0x38] sm:$0xf]
    %v4405 = vld [vmem:[#allocation7 + $0x3c] sm:$0xff]
    %v4406 = vld [vmem:[#allocation7 + $0x44] sm:$0xf]
    %v4407 = vld [vmem:[#allocation7 + $0x48] sm:$0xff]
    %v4408 = vld [vmem:[#allocation7 + $0x50] sm:$0xf]
    %v4409 = vld [vmem:[#allocation7 + $0x54] sm:$0xff]
    %v4410 = vld [vmem:[#allocation7 + $0x5c] sm:$0xf]
    %v4411 = vld [vmem:[#allocation7 + $0x60] sm:$0xff]
    %v4412 = vld [vmem:[#allocation7 + $0x68] sm:$0xf]
    %v4413 = vld [vmem:[#allocation7 + $0x6c] sm:$0xff]
    %v4414 = vld [vmem:[#allocation7 + $0x74] sm:$0xf]
    %v4415 = vld [vmem:[#allocation7 + $0x78] sm:$0xff]
    %v4416 = vld [vmem:[#allocation7 + $0x80] sm:$0xf]
    %v4417 = vld [vmem:[#allocation7 + $0x84] sm:$0xff]
    %v4418 = vld [vmem:[#allocation7 + $0x8c] sm:$0xf]
    %v4419 = vld [vmem:[#allocation7 + $0x90] sm:$0xff]
    %v4420 = vld [vmem:[#allocation7 + $0x98] sm:$0xf]
    %v4421 = vld [vmem:[#allocation7 + $0x9c] sm:$0xff]
    %v4422 = vld [vmem:[#allocation7 + $0xa4] sm:$0xf]
    %v4423 = vld [vmem:[#allocation7 + $0xa8] sm:$0xff]
    %v4424 = vld [vmem:[#allocation7 + $0xb0] sm:$0xf]
    %v4425 = vld [vmem:[#allocation7 + $0xb4] sm:$0xff]
    %v4426 = vld [vmem:[#allocation7 + $0xbc] sm:$0xf]
    %v4427 = vld [vmem:[#allocation7 + $0xc0] sm:$0xff]
    %v4428 = vld [vmem:[#allocation7 + $0xc8] sm:$0xf]
    %v4429 = vld [vmem:[#allocation7 + $0xcc] sm:$0xff]
    %v4430 = vld [vmem:[#allocation7 + $0xd4] sm:$0xf]
    %v4431 = vld [vmem:[#allocation7 + $0xd8] sm:$0xff]
    %v4432 = vld [vmem:[#allocation7 + $0xe0] sm:$0xf]
    %v4433 = vld [vmem:[#allocation7 + $0xe4] sm:$0xff]
    %v4434 = vld [vmem:[#allocation7 + $0xec] sm:$0xf]
    %v4435 = vld [vmem:[#allocation7 + $0xf0] sm:$0xff]
    %v4436 = vld [vmem:[#allocation7 + $0xf8] sm:$0xf]
    %v4437 = vld [vmem:[#allocation7 + $0xfc] sm:$0xff]
    %v4438 = vld [vmem:[#allocation7 + $0x104] sm:$0xf]
    %v4439 = vld [vmem:[#allocation7 + $0x108] sm:$0xff]
    %v4440 = vld [vmem:[#allocation7 + $0x110] sm:$0xf]
    %v4441 = vld [vmem:[#allocation7 + $0x114] sm:$0xff]
    %v4442 = vld [vmem:[#allocation7 + $0x11c] sm:$0xf]
    %v4443 = vld [vmem:[#allocation7 + $0x120] sm:$0xff]
    %v4444 = vld [vmem:[#allocation7 + $0x128] sm:$0xf]
    %v4445 = vld [vmem:[#allocation7 + $0x12c] sm:$0xff]
    %v4446 = vld [vmem:[#allocation7 + $0x134] sm:$0xf]
    %v4447 = vld [vmem:[#allocation7 + $0x138] sm:$0xff]
    %v4448 = vld [vmem:[#allocation7 + $0x140] sm:$0xf]
    %v4449 = vld [vmem:[#allocation7 + $0x144] sm:$0xff]
    %v4450 = vld [vmem:[#allocation7 + $0x14c] sm:$0xf]
    %v4451 = vld [vmem:[#allocation7 + $0x150] sm:$0xff]
    %v4452 = vld [vmem:[#allocation7 + $0x158] sm:$0xf]
    %v4453 = vld [vmem:[#allocation7 + $0x15c] sm:$0xff]
    %v4454 = vld [vmem:[#allocation7 + $0x164] sm:$0xf]
    %v4455 = vld [vmem:[#allocation7 + $0x168] sm:$0xff]
    %v4456 = vld [vmem:[#allocation7 + $0x170] sm:$0xf]
    %v4457 = vld [vmem:[#allocation7 + $0x174] sm:$0xff]
    %v4458 = vld [vmem:[#allocation7 + $0x17c] sm:$0xf]
    %v4459 = vld [vmem:[#allocation7 + $0x180] sm:$0xff]
    %v4460 = vld [vmem:[#allocation7 + $0x188] sm:$0xf]
    %v4461 = vld [vmem:[#allocation7 + $0x18c] sm:$0xff]
    %v4462 = vld [vmem:[#allocation7 + $0x194] sm:$0xf]
    %v4463 = vld [vmem:[#allocation7 + $0x198] sm:$0xff]
    %v4464 = vld [vmem:[#allocation7 + $0x1a0] sm:$0xf]
    %v4465 = vld [vmem:[#allocation7 + $0x1a4] sm:$0xff]
    %v4466 = vld [vmem:[#allocation7 + $0x1ac] sm:$0xf]
    %v4467 = vld [vmem:[#allocation7 + $0x1b0] sm:$0xff]
    %v4468 = vld [vmem:[#allocation7 + $0x1b8] sm:$0xf]
    %v4469 = vld [vmem:[#allocation7 + $0x1bc] sm:$0xff]
    %v4470 = vld [vmem:[#allocation7 + $0x1c4] sm:$0xf]
    %v4471 = vld [vmem:[#allocation7 + $0x1c8] sm:$0xff]
    %v4472 = vld [vmem:[#allocation7 + $0x1d0] sm:$0xf]
    %v4473 = vld [vmem:[#allocation7 + $0x1d4] sm:$0xff]
    %v4474 = vld [vmem:[#allocation7 + $0x1dc] sm:$0xf]
    %v4475 = vld [vmem:[#allocation7 + $0x1e0] sm:$0xff]
    %v4476 = vld [vmem:[#allocation7 + $0x1e8] sm:$0xf]
    %v4477 = vld [vmem:[#allocation7 + $0x1ec] sm:$0xff]
    %v4478 = vld [vmem:[#allocation7 + $0x1f4] sm:$0xf]
    %v4479 = vld [vmem:[#allocation7 + $0x1f8] sm:$0xff]
    %v4480 = vld [vmem:[#allocation7 + $0x200] sm:$0xf]
    %v4481 = vld [vmem:[#allocation7 + $0x204] sm:$0xff]
    %v4482 = vld [vmem:[#allocation7 + $0x20c] sm:$0xf]
    %v4483 = vld [vmem:[#allocation7 + $0x210] sm:$0xff]
    %v4484 = vld [vmem:[#allocation7 + $0x218] sm:$0xf]
    %v4485 = vld [vmem:[#allocation7 + $0x21c] sm:$0xff]
    %v4486 = vld [vmem:[#allocation7 + $0x224] sm:$0xf]
    %v4487 = vld [vmem:[#allocation7 + $0x228] sm:$0xff]
    %v4488 = vld [vmem:[#allocation7 + $0x230] sm:$0xf]
    %v4489 = vld [vmem:[#allocation7 + $0x234] sm:$0xff]
    %v4490 = vld [vmem:[#allocation7 + $0x23c] sm:$0xf]
    %v4491 = vld [vmem:[#allocation7 + $0x240] sm:$0xff]
    %v4492 = vld [vmem:[#allocation7 + $0x248] sm:$0xf]
    %v4493 = vld [vmem:[#allocation7 + $0x24c] sm:$0xff]
    %v4494 = vld [vmem:[#allocation7 + $0x254] sm:$0xf]
    %v4495 = vld [vmem:[#allocation7 + $0x258] sm:$0xff]
    %v4496 = vld [vmem:[#allocation7 + $0x260] sm:$0xf]
    %v4497 = vld [vmem:[#allocation7 + $0x264] sm:$0xff]
    %v4498 = vld [vmem:[#allocation7 + $0x26c] sm:$0xf]
    %v4499 = vld [vmem:[#allocation7 + $0x270] sm:$0xff]
    %v4500 = vld [vmem:[#allocation7 + $0x278] sm:$0xf]
    %v4501 = vld [vmem:[#allocation7 + $0x27c] sm:$0xff]
    %v4502 = vld [vmem:[#allocation7 + $0x284] sm:$0xf]
    %v4503 = vld [vmem:[#allocation7 + $0x288] sm:$0xff]
    %v4504 = vld [vmem:[#allocation7 + $0x290] sm:$0xf]
    %v4505 = vld [vmem:[#allocation7 + $0x294] sm:$0xff]
    %v4506 = vld [vmem:[#allocation7 + $0x29c] sm:$0xf]
    %v4507 = vld [vmem:[#allocation7 + $0x2a0] sm:$0xff]
    %v4508 = vld [vmem:[#allocation7 + $0x2a8] sm:$0xf]
    %v4509 = vld [vmem:[#allocation7 + $0x2ac] sm:$0xff]
    %v4510 = vld [vmem:[#allocation7 + $0x2b4] sm:$0xf]
    %v4511 = vld [vmem:[#allocation7 + $0x2b8] sm:$0xff]
    %v4512 = vld [vmem:[#allocation7 + $0x2c0] sm:$0xf]
    %v4513 = vld [vmem:[#allocation7 + $0x2c4] sm:$0xff]
    %v4514 = vld [vmem:[#allocation7 + $0x2cc] sm:$0xf]
    %v4515 = vld [vmem:[#allocation7 + $0x2d0] sm:$0xff]
    %v4516 = vld [vmem:[#allocation7 + $0x2d8] sm:$0xf]
    %v4517 = vld [vmem:[#allocation7 + $0x2dc] sm:$0xff]
    %v4518 = vld [vmem:[#allocation7 + $0x2e4] sm:$0xf]
    %v4519 = vld [vmem:[#allocation7 + $0x2e8] sm:$0xff]
    %v4520 = vld [vmem:[#allocation7 + $0x2f0] sm:$0xf]
    %v4521 = vld [vmem:[#allocation7 + $0x2f4] sm:$0xff]
    %v4522 = vld [vmem:[#allocation7 + $0x2fc] sm:$0xf]
    %v4523 = vld [vmem:[#allocation7 + $0x300] sm:$0xff]
    %v4524 = vld [vmem:[#allocation7 + $0x308] sm:$0xf]
    %v4525 = vld [vmem:[#allocation7 + $0x30c] sm:$0xff]
    %v4526 = vld [vmem:[#allocation7 + $0x314] sm:$0xf]
    %v4527 = vld [vmem:[#allocation7 + $0x318] sm:$0xff]
    %v4528 = vld [vmem:[#allocation7 + $0x320] sm:$0xf]
    %v4529 = vld [vmem:[#allocation7 + $0x324] sm:$0xff]
    %v4530 = vld [vmem:[#allocation7 + $0x32c] sm:$0xf]
    %v4531 = vld [vmem:[#allocation7 + $0x330] sm:$0xff]
    %v4532 = vld [vmem:[#allocation7 + $0x338] sm:$0xf]
    %v4533 = vld [vmem:[#allocation7 + $0x33c] sm:$0xff]
    %v4534 = vld [vmem:[#allocation7 + $0x344] sm:$0xf]
    %v4535 = vld [vmem:[#allocation7 + $0x348] sm:$0xff]
    %v4536 = vld [vmem:[#allocation7 + $0x350] sm:$0xf]
    %v4537 = vld [vmem:[#allocation7 + $0x354] sm:$0xff]
    %v4538 = vld [vmem:[#allocation7 + $0x35c] sm:$0xf]
    %v4539 = vld [vmem:[#allocation7 + $0x360] sm:$0xff]
    %v4540 = vld [vmem:[#allocation7 + $0x368] sm:$0xf]
    %v4541 = vld [vmem:[#allocation7 + $0x36c] sm:$0xff]
    %v4542 = vld [vmem:[#allocation7 + $0x374] sm:$0xf]
    %v4543 = vld [vmem:[#allocation7 + $0x378] sm:$0xff]
    %v4544 = vld [vmem:[#allocation7 + $0x380] sm:$0xf]
    %v4545 = vld [vmem:[#allocation7 + $0x384] sm:$0xff]
    %v4546 = vld [vmem:[#allocation7 + $0x38c] sm:$0xf]
    %v4547 = vld [vmem:[#allocation7 + $0x390] sm:$0xff]
    %v4548 = vld [vmem:[#allocation7 + $0x398] sm:$0xf]
    %v4549 = vld [vmem:[#allocation7 + $0x39c] sm:$0xff]
    %v4550 = vld [vmem:[#allocation7 + $0x3a4] sm:$0xf]
    %v4551 = vld [vmem:[#allocation7 + $0x3a8] sm:$0xff]
    %v4552 = vld [vmem:[#allocation7 + $0x3b0] sm:$0xf]
    %v4553 = vld [vmem:[#allocation7 + $0x3b4] sm:$0xff]
    %v4554 = vld [vmem:[#allocation7 + $0x3bc] sm:$0xf]
    %v4555 = vld [vmem:[#allocation9] sm:$0x7]
    %v4557 = vperm.slane %v4555, 0
    %v4558 = vperm.slane %v4555, 1
    %v4559 = vperm.slane %v4555, 2
    %v4723 = vunpack.c.l.b16 %v4395
    %v4724 = vunpack.c.h.b16 %v4395
    %v4725 = vunpack.c.l.b16 %v4396
    %v4726 = vunpack.c.l.b16 %v4397
    %v4727 = vunpack.c.h.b16 %v4397
    %v4728 = vunpack.c.l.b16 %v4398
    %v4729 = vunpack.c.l.b16 %v4399
    %v4730 = vunpack.c.h.b16 %v4399
    %v4731 = vunpack.c.l.b16 %v4400
    %v4732 = vunpack.c.l.b16 %v4401
    %v4733 = vunpack.c.h.b16 %v4401
    %v4734 = vunpack.c.l.b16 %v4402
    %v4735 = vunpack.c.l.b16 %v4403
    %v4736 = vunpack.c.h.b16 %v4403
    %v4737 = vunpack.c.l.b16 %v4404
    %v4738 = vunpack.c.l.b16 %v4405
    %v4739 = vunpack.c.h.b16 %v4405
    %v4740 = vunpack.c.l.b16 %v4406
    %v4741 = vunpack.c.l.b16 %v4407
    %v4742 = vunpack.c.h.b16 %v4407
    %v4743 = vunpack.c.l.b16 %v4408
    %v4744 = vunpack.c.l.b16 %v4409
    %v4745 = vunpack.c.h.b16 %v4409
    %v4746 = vunpack.c.l.b16 %v4410
    %v4747 = vunpack.c.l.b16 %v4411
    %v4748 = vunpack.c.h.b16 %v4411
    %v4749 = vunpack.c.l.b16 %v4412
    %v4750 = vunpack.c.l.b16 %v4413
    %v4751 = vunpack.c.h.b16 %v4413
    %v4752 = vunpack.c.l.b16 %v4414
    %v4753 = vunpack.c.l.b16 %v4415
    %v4754 = vunpack.c.h.b16 %v4415
    %v4755 = vunpack.c.l.b16 %v4416
    %v4756 = vunpack.c.l.b16 %v4417
    %v4757 = vunpack.c.h.b16 %v4417
    %v4758 = vunpack.c.l.b16 %v4418
    %v4759 = vunpack.c.l.b16 %v4419
    %v4760 = vunpack.c.h.b16 %v4419
    %v4761 = vunpack.c.l.b16 %v4420
    %v4762 = vunpack.c.l.b16 %v4421
    %v4763 = vunpack.c.h.b16 %v4421
    %v4764 = vunpack.c.l.b16 %v4422
    %v4765 = vunpack.c.l.b16 %v4423
    %v4766 = vunpack.c.h.b16 %v4423
    %v4767 = vunpack.c.l.b16 %v4424
    %v4768 = vunpack.c.l.b16 %v4425
    %v4769 = vunpack.c.h.b16 %v4425
    %v4770 = vunpack.c.l.b16 %v4426
    %v4771 = vunpack.c.l.b16 %v4427
    %v4772 = vunpack.c.h.b16 %v4427
    %v4773 = vunpack.c.l.b16 %v4428
    %v4774 = vunpack.c.l.b16 %v4429
    %v4775 = vunpack.c.h.b16 %v4429
    %v4776 = vunpack.c.l.b16 %v4430
    %v4777 = vunpack.c.l.b16 %v4431
    %v4778 = vunpack.c.h.b16 %v4431
    %v4779 = vunpack.c.l.b16 %v4432
    %v4780 = vunpack.c.l.b16 %v4433
    %v4781 = vunpack.c.h.b16 %v4433
    %v4782 = vunpack.c.l.b16 %v4434
    %v4783 = vunpack.c.l.b16 %v4435
    %v4784 = vunpack.c.h.b16 %v4435
    %v4785 = vunpack.c.l.b16 %v4436
    %v4786 = vunpack.c.l.b16 %v4437
    %v4787 = vunpack.c.h.b16 %v4437
    %v4788 = vunpack.c.l.b16 %v4438
    %v4789 = vunpack.c.l.b16 %v4439
    %v4790 = vunpack.c.h.b16 %v4439
    %v4791 = vunpack.c.l.b16 %v4440
    %v4792 = vunpack.c.l.b16 %v4441
    %v4793 = vunpack.c.h.b16 %v4441
    %v4794 = vunpack.c.l.b16 %v4442
    %v4795 = vunpack.c.l.b16 %v4443
    %v4796 = vunpack.c.h.b16 %v4443
    %v4797 = vunpack.c.l.b16 %v4444
    %v4798 = vunpack.c.l.b16 %v4445
    %v4799 = vunpack.c.h.b16 %v4445
    %v4800 = vunpack.c.l.b16 %v4446
    %v4801 = vunpack.c.l.b16 %v4447
    %v4802 = vunpack.c.h.b16 %v4447
    %v4803 = vunpack.c.l.b16 %v4448
    %v4804 = vunpack.c.l.b16 %v4449
    %v4805 = vunpack.c.h.b16 %v4449
    %v4806 = vunpack.c.l.b16 %v4450
    %v4807 = vunpack.c.l.b16 %v4451
    %v4808 = vunpack.c.h.b16 %v4451
    %v4809 = vunpack.c.l.b16 %v4452
    %v4810 = vunpack.c.l.b16 %v4453
    %v4811 = vunpack.c.h.b16 %v4453
    %v4812 = vunpack.c.l.b16 %v4454
    %v4813 = vunpack.c.l.b16 %v4455
    %v4814 = vunpack.c.h.b16 %v4455
    %v4815 = vunpack.c.l.b16 %v4456
    %v4816 = vunpack.c.l.b16 %v4457
    %v4817 = vunpack.c.h.b16 %v4457
    %v4818 = vunpack.c.l.b16 %v4458
    %v4819 = vunpack.c.l.b16 %v4459
    %v4820 = vunpack.c.h.b16 %v4459
    %v4821 = vunpack.c.l.b16 %v4460
    %v4822 = vunpack.c.l.b16 %v4461
    %v4823 = vunpack.c.h.b16 %v4461
    %v4824 = vunpack.c.l.b16 %v4462
    %v4825 = vunpack.c.l.b16 %v4463
    %v4826 = vunpack.c.h.b16 %v4463
    %v4827 = vunpack.c.l.b16 %v4464
    %v4828 = vunpack.c.l.b16 %v4465
    %v4829 = vunpack.c.h.b16 %v4465
    %v4830 = vunpack.c.l.b16 %v4466
    %v4831 = vunpack.c.l.b16 %v4467
    %v4832 = vunpack.c.h.b16 %v4467
    %v4833 = vunpack.c.l.b16 %v4468
    %v4834 = vunpack.c.l.b16 %v4469
    %v4835 = vunpack.c.h.b16 %v4469
    %v4836 = vunpack.c.l.b16 %v4470
    %v4837 = vunpack.c.l.b16 %v4471
    %v4838 = vunpack.c.h.b16 %v4471
    %v4839 = vunpack.c.l.b16 %v4472
    %v4840 = vunpack.c.l.b16 %v4473
    %v4841 = vunpack.c.h.b16 %v4473
    %v4842 = vunpack.c.l.b16 %v4474
    %v4843 = vunpack.c.l.b16 %v4475
    %v4844 = vunpack.c.h.b16 %v4475
    %v4845 = vunpack.c.l.b16 %v4476
    %v4846 = vunpack.c.l.b16 %v4477
    %v4847 = vunpack.c.h.b16 %v4477
    %v4848 = vunpack.c.l.b16 %v4478
    %v4849 = vunpack.c.l.b16 %v4479
    %v4850 = vunpack.c.h.b16 %v4479
    %v4851 = vunpack.c.l.b16 %v4480
    %v4852 = vunpack.c.l.b16 %v4481
    %v4853 = vunpack.c.h.b16 %v4481
    %v4854 = vunpack.c.l.b16 %v4482
    %v4855 = vunpack.c.l.b16 %v4483
    %v4856 = vunpack.c.h.b16 %v4483
    %v4857 = vunpack.c.l.b16 %v4484
    %v4858 = vunpack.c.l.b16 %v4485
    %v4859 = vunpack.c.h.b16 %v4485
    %v4860 = vunpack.c.l.b16 %v4486
    %v4861 = vunpack.c.l.b16 %v4487
    %v4862 = vunpack.c.h.b16 %v4487
    %v4863 = vunpack.c.l.b16 %v4488
    %v4864 = vunpack.c.l.b16 %v4489
    %v4865 = vunpack.c.h.b16 %v4489
    %v4866 = vunpack.c.l.b16 %v4490
    %v4867 = vunpack.c.l.b16 %v4491
    %v4868 = vunpack.c.h.b16 %v4491
    %v4869 = vunpack.c.l.b16 %v4492
    %v4870 = vunpack.c.l.b16 %v4493
    %v4871 = vunpack.c.h.b16 %v4493
    %v4872 = vunpack.c.l.b16 %v4494
    %v4873 = vunpack.c.l.b16 %v4495
    %v4874 = vunpack.c.h.b16 %v4495
    %v4875 = vunpack.c.l.b16 %v4496
    %v4876 = vunpack.c.l.b16 %v4497
    %v4877 = vunpack.c.h.b16 %v4497
    %v4878 = vunpack.c.l.b16 %v4498
    %v4879 = vunpack.c.l.b16 %v4499
    %v4880 = vunpack.c.h.b16 %v4499
    %v4881 = vunpack.c.l.b16 %v4500
    %v4882 = vunpack.c.l.b16 %v4501
    %v4883 = vunpack.c.h.b16 %v4501
    %v4884 = vunpack.c.l.b16 %v4502
    %v4885 = vunpack.c.l.b16 %v4503
    %v4886 = vunpack.c.h.b16 %v4503
    %v4887 = vunpack.c.l.b16 %v4504
    %v4888 = vunpack.c.l.b16 %v4505
    %v4889 = vunpack.c.h.b16 %v4505
    %v4890 = vunpack.c.l.b16 %v4506
    %v4891 = vunpack.c.l.b16 %v4507
    %v4892 = vunpack.c.h.b16 %v4507
    %v4893 = vunpack.c.l.b16 %v4508
    %v4894 = vunpack.c.l.b16 %v4509
    %v4895 = vunpack.c.h.b16 %v4509
    %v4896 = vunpack.c.l.b16 %v4510
    %v4897 = vunpack.c.l.b16 %v4511
    %v4898 = vunpack.c.h.b16 %v4511
    %v4899 = vunpack.c.l.b16 %v4512
    %v4900 = vunpack.c.l.b16 %v4513
    %v4901 = vunpack.c.h.b16 %v4513
    %v4902 = vunpack.c.l.b16 %v4514
    %v4903 = vunpack.c.l.b16 %v4515
    %v4904 = vunpack.c.h.b16 %v4515
    %v4905 = vunpack.c.l.b16 %v4516
    %v4906 = vunpack.c.l.b16 %v4517
    %v4907 = vunpack.c.h.b16 %v4517
    %v4908 = vunpack.c.l.b16 %v4518
    %v4909 = vunpack.c.l.b16 %v4519
    %v4910 = vunpack.c.h.b16 %v4519
    %v4911 = vunpack.c.l.b16 %v4520
    %v4912 = vunpack.c.l.b16 %v4521
    %v4913 = vunpack.c.h.b16 %v4521
    %v4914 = vunpack.c.l.b16 %v4522
    %v4915 = vunpack.c.l.b16 %v4523
    %v4916 = vunpack.c.h.b16 %v4523
    %v4917 = vunpack.c.l.b16 %v4524
    %v4918 = vunpack.c.l.b16 %v4525
    %v4919 = vunpack.c.h.b16 %v4525
    %v4920 = vunpack.c.l.b16 %v4526
    %v4921 = vunpack.c.l.b16 %v4527
    %v4922 = vunpack.c.h.b16 %v4527
    %v4923 = vunpack.c.l.b16 %v4528
    %v4924 = vunpack.c.l.b16 %v4529
    %v4925 = vunpack.c.h.b16 %v4529
    %v4926 = vunpack.c.l.b16 %v4530
    %v4927 = vunpack.c.l.b16 %v4531
    %v4928 = vunpack.c.h.b16 %v4531
    %v4929 = vunpack.c.l.b16 %v4532
    %v4930 = vunpack.c.l.b16 %v4533
    %v4931 = vunpack.c.h.b16 %v4533
    %v4932 = vunpack.c.l.b16 %v4534
    %v4933 = vunpack.c.l.b16 %v4535
    %v4934 = vunpack.c.h.b16 %v4535
    %v4935 = vunpack.c.l.b16 %v4536
    %v4936 = vunpack.c.l.b16 %v4537
    %v4937 = vunpack.c.h.b16 %v4537
    %v4938 = vunpack.c.l.b16 %v4538
    %v4939 = vunpack.c.l.b16 %v4539
    %v4940 = vunpack.c.h.b16 %v4539
    %v4941 = vunpack.c.l.b16 %v4540
    %v4942 = vunpack.c.l.b16 %v4541
    %v4943 = vunpack.c.h.b16 %v4541
    %v4944 = vunpack.c.l.b16 %v4542
    %v4945 = vunpack.c.l.b16 %v4543
    %v4946 = vunpack.c.h.b16 %v4543
    %v4947 = vunpack.c.l.b16 %v4544
    %v4948 = vunpack.c.l.b16 %v4545
    %v4949 = vunpack.c.h.b16 %v4545
    %v4950 = vunpack.c.l.b16 %v4546
    %v4951 = vunpack.c.l.b16 %v4547
    %v4952 = vunpack.c.h.b16 %v4547
    %v4953 = vunpack.c.l.b16 %v4548
    %v4954 = vunpack.c.l.b16 %v4549
    %v4955 = vunpack.c.h.b16 %v4549
    %v4956 = vunpack.c.l.b16 %v4550
    %v4957 = vunpack.c.l.b16 %v4551
    %v4958 = vunpack.c.h.b16 %v4551
    %v4959 = vunpack.c.l.b16 %v4552
    %v4960 = vunpack.c.l.b16 %v4553
    %v4961 = vunpack.c.h.b16 %v4553
    %v4962 = vunpack.c.l.b16 %v4554
    %v4963 = vpack.c.b16 %v4726, %v4723
    %v4964 = vpack.c.b16 %v4727, %v4724
    %v4965 = vpack.c.b16 %v4728, %v4725
    %v4966 = vpack.c.b16 %v4732, %v4729
    %v4967 = vpack.c.b16 %v4733, %v4730
    %v4968 = vpack.c.b16 %v4734, %v4731
    %v4969 = vpack.c.b16 %v4738, %v4735
    %v4970 = vpack.c.b16 %v4739, %v4736
    %v4971 = vpack.c.b16 %v4740, %v4737
    %v4972 = vpack.c.b16 %v4744, %v4741
    %v4973 = vpack.c.b16 %v4745, %v4742
    %v4974 = vpack.c.b16 %v4746, %v4743
    %v4975 = vpack.c.b16 %v4750, %v4747
    %v4976 = vpack.c.b16 %v4751, %v4748
    %v4977 = vpack.c.b16 %v4752, %v4749
    %v4978 = vpack.c.b16 %v4756, %v4753
    %v4979 = vpack.c.b16 %v4757, %v4754
    %v4980 = vpack.c.b16 %v4758, %v4755
    %v4981 = vpack.c.b16 %v4762, %v4759
    %v4982 = vpack.c.b16 %v4763, %v4760
    %v4983 = vpack.c.b16 %v4764, %v4761
    %v4984 = vpack.c.b16 %v4768, %v4765
    %v4985 = vpack.c.b16 %v4769, %v4766
    %v4986 = vpack.c.b16 %v4770, %v4767
    %v4987 = vpack.c.b16 %v4774, %v4771
    %v4988 = vpack.c.b16 %v4775, %v4772
    %v4989 = vpack.c.b16 %v4776, %v4773
    %v4990 = vpack.c.b16 %v4780, %v4777
    %v4991 = vpack.c.b16 %v4781, %v4778
    %v4992 = vpack.c.b16 %v4782, %v4779
    %v4993 = vpack.c.b16 %v4786, %v4783
    %v4994 = vpack.c.b16 %v4787, %v4784
    %v4995 = vpack.c.b16 %v4788, %v4785
    %v4996 = vpack.c.b16 %v4792, %v4789
    %v4997 = vpack.c.b16 %v4793, %v4790
    %v4998 = vpack.c.b16 %v4794, %v4791
    %v4999 = vpack.c.b16 %v4798, %v4795
    %v5000 = vpack.c.b16 %v4799, %v4796
    %v5001 = vpack.c.b16 %v4800, %v4797
    %v5002 = vpack.c.b16 %v4804, %v4801
    %v5003 = vpack.c.b16 %v4805, %v4802
    %v5004 = vpack.c.b16 %v4806, %v4803
    %v5005 = vpack.c.b16 %v4810, %v4807
    %v5006 = vpack.c.b16 %v4811, %v4808
    %v5007 = vpack.c.b16 %v4812, %v4809
    %v5008 = vpack.c.b16 %v4816, %v4813
    %v5009 = vpack.c.b16 %v4817, %v4814
    %v5010 = vpack.c.b16 %v4818, %v4815
    %v5011 = vpack.c.b16 %v4822, %v4819
    %v5012 = vpack.c.b16 %v4823, %v4820
    %v5013 = vpack.c.b16 %v4824, %v4821
    %v5014 = vpack.c.b16 %v4828, %v4825
    %v5015 = vpack.c.b16 %v4829, %v4826
    %v5016 = vpack.c.b16 %v4830, %v4827
    %v5017 = vpack.c.b16 %v4834, %v4831
    %v5018 = vpack.c.b16 %v4835, %v4832
    %v5019 = vpack.c.b16 %v4836, %v4833
    %v5020 = vpack.c.b16 %v4840, %v4837
    %v5021 = vpack.c.b16 %v4841, %v4838
    %v5022 = vpack.c.b16 %v4842, %v4839
    %v5023 = vpack.c.b16 %v4846, %v4843
    %v5024 = vpack.c.b16 %v4847, %v4844
    %v5025 = vpack.c.b16 %v4848, %v4845
    %v5026 = vpack.c.b16 %v4852, %v4849
    %v5027 = vpack.c.b16 %v4853, %v4850
    %v5028 = vpack.c.b16 %v4854, %v4851
    %v5029 = vpack.c.b16 %v4858, %v4855
    %v5030 = vpack.c.b16 %v4859, %v4856
    %v5031 = vpack.c.b16 %v4860, %v4857
    %v5032 = vpack.c.b16 %v4864, %v4861
    %v5033 = vpack.c.b16 %v4865, %v4862
    %v5034 = vpack.c.b16 %v4866, %v4863
    %v5035 = vpack.c.b16 %v4870, %v4867
    %v5036 = vpack.c.b16 %v4871, %v4868
    %v5037 = vpack.c.b16 %v4872, %v4869
    %v5038 = vpack.c.b16 %v4876, %v4873
    %v5039 = vpack.c.b16 %v4877, %v4874
    %v5040 = vpack.c.b16 %v4878, %v4875
    %v5041 = vpack.c.b16 %v4882, %v4879
    %v5042 = vpack.c.b16 %v4883, %v4880
    %v5043 = vpack.c.b16 %v4884, %v4881
    %v5044 = vpack.c.b16 %v4888, %v4885
    %v5045 = vpack.c.b16 %v4889, %v4886
    %v5046 = vpack.c.b16 %v4890, %v4887
    %v5047 = vpack.c.b16 %v4894, %v4891
    %v5048 = vpack.c.b16 %v4895, %v4892
    %v5049 = vpack.c.b16 %v4896, %v4893
    %v5050 = vpack.c.b16 %v4900, %v4897
    %v5051 = vpack.c.b16 %v4901, %v4898
    %v5052 = vpack.c.b16 %v4902, %v4899
    %v5053 = vpack.c.b16 %v4906, %v4903
    %v5054 = vpack.c.b16 %v4907, %v4904
    %v5055 = vpack.c.b16 %v4908, %v4905
    %v5056 = vpack.c.b16 %v4912, %v4909
    %v5057 = vpack.c.b16 %v4913, %v4910
    %v5058 = vpack.c.b16 %v4914, %v4911
    %v5059 = vpack.c.b16 %v4918, %v4915
    %v5060 = vpack.c.b16 %v4919, %v4916
    %v5061 = vpack.c.b16 %v4920, %v4917
    %v5062 = vpack.c.b16 %v4924, %v4921
    %v5063 = vpack.c.b16 %v4925, %v4922
    %v5064 = vpack.c.b16 %v4926, %v4923
    %v5065 = vpack.c.b16 %v4930, %v4927
    %v5066 = vpack.c.b16 %v4931, %v4928
    %v5067 = vpack.c.b16 %v4932, %v4929
    %v5068 = vpack.c.b16 %v4936, %v4933
    %v5069 = vpack.c.b16 %v4937, %v4934
    %v5070 = vpack.c.b16 %v4938, %v4935
    %v5071 = vpack.c.b16 %v4942, %v4939
    %v5072 = vpack.c.b16 %v4943, %v4940
    %v5073 = vpack.c.b16 %v4944, %v4941
    %v5074 = vpack.c.b16 %v4948, %v4945
    %v5075 = vpack.c.b16 %v4949, %v4946
    %v5076 = vpack.c.b16 %v4950, %v4947
    %v5077 = vpack.c.b16 %v4954, %v4951
    %v5078 = vpack.c.b16 %v4955, %v4952
    %v5079 = vpack.c.b16 %v4956, %v4953
    %v5080 = vpack.c.b16 %v4960, %v4957
    %v5081 = vpack.c.b16 %v4961, %v4958
    %v5082 = vpack.c.b16 %v4962, %v4959
    %5203 = vmatpush.bf16.msra.mxu0 %v4984
    %5204 = vmatpush.bf16.msra.mxu0 %v4981
    %5205 = vmatpush.bf16.msra.mxu0 %v4978
    %5206 = vmatpush.bf16.msra.mxu0 %v4975
    %5207 = vmatpush.bf16.msra.mxu0 %v4972
    %5208 = vmatpush.bf16.msra.mxu0 %v4969
    %5209 = vmatpush.bf16.msra.mxu0 %v4966
    %5210 = vmatpush.bf16.msra.mxu0 %v4963
    %5211 = vmatmul.bf16.gmra.mxu0 %v4390
    %v5212 = vpop.f32.mrf.mxu0
    %v5213 = vadd.f32 %v4557, %v5212
    %v5214 = vpop.f32.mrf.mxu0
    %5215 = vdwg.mxu0
    %5216 = vmatpush.bf16.msra.mxu0 %v5008
    %5217 = vmatpush.bf16.msra.mxu0 %v5005
    %5218 = vmatpush.bf16.msra.mxu0 %v5002
    %5219 = vmatpush.bf16.msra.mxu0 %v4999
    %5220 = vmatpush.bf16.msra.mxu0 %v4996
    %5221 = vmatpush.bf16.msra.mxu0 %v4993
    %5222 = vmatpush.bf16.msra.mxu0 %v4990
    %5223 = vmatpush.bf16.msra.mxu0 %v4987
    %5224 = vmatmul.bf16.gmra.mxu0 %v4391
    %v5225 = vpop.f32.mrf.mxu0
    %v5226 = vadd.f32 %v5213, %v5225
    %v5227 = vpop.f32.mrf.mxu0
    %5228 = vdwg.mxu0
    %5229 = vmatpush.bf16.msra.mxu0 %v5032
    %5230 = vmatpush.bf16.msra.mxu0 %v5029
    %5231 = vmatpush.bf16.msra.mxu0 %v5026
    %5232 = vmatpush.bf16.msra.mxu0 %v5023
    %5233 = vmatpush.bf16.msra.mxu0 %v5020
    %5234 = vmatpush.bf16.msra.mxu0 %v5017
    %5235 = vmatpush.bf16.msra.mxu0 %v5014
    %5236 = vmatpush.bf16.msra.mxu0 %v5011
    %5237 = vmatmul.bf16.gmra.mxu0 %v4392
    %v5238 = vpop.f32.mrf.mxu0
    %v5239 = vadd.f32 %v5226, %v5238
    %v5240 = vpop.f32.mrf.mxu0
    %5241 = vdwg.mxu0
    %5242 = vmatpush.bf16.msra.mxu0 %v5056
    %5243 = vmatpush.bf16.msra.mxu0 %v5053
    %5244 = vmatpush.bf16.msra.mxu0 %v5050
    %5245 = vmatpush.bf16.msra.mxu0 %v5047
    %5246 = vmatpush.bf16.msra.mxu0 %v5044
    %5247 = vmatpush.bf16.msra.mxu0 %v5041
    %5248 = vmatpush.bf16.msra.mxu0 %v5038
    %5249 = vmatpush.bf16.msra.mxu0 %v5035
    %5250 = vmatmul.bf16.gmra.mxu0 %v4393
    %v5251 = vpop.f32.mrf.mxu0
    %v5252 = vadd.f32 %v5239, %v5251
    %v5253 = vpop.f32.mrf.mxu0
    %5254 = vdwg.mxu0
    %5255 = vmatpush.bf16.msra.mxu0 %v5080
    %5256 = vmatpush.bf16.msra.mxu0 %v5077
    %5257 = vmatpush.bf16.msra.mxu0 %v5074
    %5258 = vmatpush.bf16.msra.mxu0 %v5071
    %5259 = vmatpush.bf16.msra.mxu0 %v5068
    %5260 = vmatpush.bf16.msra.mxu0 %v5065
    %5261 = vmatpush.bf16.msra.mxu0 %v5062
    %5262 = vmatpush.bf16.msra.mxu0 %v5059
    %5263 = vmatmul.bf16.gmra.mxu0 %v4394
    %v5264 = vpop.f32.mrf.mxu0
    %v5265 = vadd.f32 %v5252, %v5264
    %v5266 = vpop.f32.mrf.mxu0
    %5267 = vdwg.mxu0
    %5268 = vmatpush.bf16.msra.mxu0 %v4985
    %5269 = vmatpush.bf16.msra.mxu0 %v4982
    %5270 = vmatpush.bf16.msra.mxu0 %v4979
    %5271 = vmatpush.bf16.msra.mxu0 %v4976
    %5272 = vmatpush.bf16.msra.mxu0 %v4973
    %5273 = vmatpush.bf16.msra.mxu0 %v4970
    %5274 = vmatpush.bf16.msra.mxu0 %v4967
    %5275 = vmatpush.bf16.msra.mxu0 %v4964
    %5276 = vmatmul.bf16.gmra.mxu0 %v4390
    %v5277 = vpop.f32.mrf.mxu0
    %v5278 = vadd.f32 %v4558, %v5277
    %v5279 = vpop.f32.mrf.mxu0
    %5280 = vdwg.mxu0
    %5281 = vmatpush.bf16.msra.mxu0 %v5009
    %5282 = vmatpush.bf16.msra.mxu0 %v5006
    %5283 = vmatpush.bf16.msra.mxu0 %v5003
    %5284 = vmatpush.bf16.msra.mxu0 %v5000
    %5285 = vmatpush.bf16.msra.mxu0 %v4997
    %5286 = vmatpush.bf16.msra.mxu0 %v4994
    %5287 = vmatpush.bf16.msra.mxu0 %v4991
    %5288 = vmatpush.bf16.msra.mxu0 %v4988
    %5289 = vmatmul.bf16.gmra.mxu0 %v4391
    %v5290 = vpop.f32.mrf.mxu0
    %v5291 = vadd.f32 %v5278, %v5290
    %v5292 = vpop.f32.mrf.mxu0
    %5293 = vdwg.mxu0
    %5294 = vmatpush.bf16.msra.mxu0 %v5033
    %5295 = vmatpush.bf16.msra.mxu0 %v5030
    %5296 = vmatpush.bf16.msra.mxu0 %v5027
    %5297 = vmatpush.bf16.msra.mxu0 %v5024
    %5298 = vmatpush.bf16.msra.mxu0 %v5021
    %5299 = vmatpush.bf16.msra.mxu0 %v5018
    %5300 = vmatpush.bf16.msra.mxu0 %v5015
    %5301 = vmatpush.bf16.msra.mxu0 %v5012
    %5302 = vmatmul.bf16.gmra.mxu0 %v4392
    %v5303 = vpop.f32.mrf.mxu0
    %v5304 = vadd.f32 %v5291, %v5303
    %v5305 = vpop.f32.mrf.mxu0
    %5306 = vdwg.mxu0
    %5307 = vmatpush.bf16.msra.mxu0 %v5057
    %5308 = vmatpush.bf16.msra.mxu0 %v5054
    %5309 = vmatpush.bf16.msra.mxu0 %v5051
    %5310 = vmatpush.bf16.msra.mxu0 %v5048
    %5311 = vmatpush.bf16.msra.mxu0 %v5045
    %5312 = vmatpush.bf16.msra.mxu0 %v5042
    %5313 = vmatpush.bf16.msra.mxu0 %v5039
    %5314 = vmatpush.bf16.msra.mxu0 %v5036
    %5315 = vmatmul.bf16.gmra.mxu0 %v4393
    %v5316 = vpop.f32.mrf.mxu0
    %v5317 = vadd.f32 %v5304, %v5316
    %v5318 = vpop.f32.mrf.mxu0
    %5319 = vdwg.mxu0
    %5320 = vmatpush.bf16.msra.mxu0 %v5081
    %5321 = vmatpush.bf16.msra.mxu0 %v5078
    %5322 = vmatpush.bf16.msra.mxu0 %v5075
    %5323 = vmatpush.bf16.msra.mxu0 %v5072
    %5324 = vmatpush.bf16.msra.mxu0 %v5069
    %5325 = vmatpush.bf16.msra.mxu0 %v5066
    %5326 = vmatpush.bf16.msra.mxu0 %v5063
    %5327 = vmatpush.bf16.msra.mxu0 %v5060
    %5328 = vmatmul.bf16.gmra.mxu0 %v4394
    %v5329 = vpop.f32.mrf.mxu0
    %v5330 = vadd.f32 %v5317, %v5329
    %v5331 = vpop.f32.mrf.mxu0
    %5332 = vdwg.mxu0
    %5333 = vmatpush.bf16.msra.mxu0 %v4986
    %5334 = vmatpush.bf16.msra.mxu0 %v4983
    %5335 = vmatpush.bf16.msra.mxu0 %v4980
    %5336 = vmatpush.bf16.msra.mxu0 %v4977
    %5337 = vmatpush.bf16.msra.mxu0 %v4974
    %5338 = vmatpush.bf16.msra.mxu0 %v4971
    %5339 = vmatpush.bf16.msra.mxu0 %v4968
    %5340 = vmatpush.bf16.msra.mxu0 %v4965
    %5341 = vmatmul.bf16.gmra.mxu0 %v4390
    %v5342 = vpop.f32.mrf.mxu0
    %v5343 = vadd.f32 %v4559, %v5342
    %v5344 = vpop.f32.mrf.mxu0
    %5345 = vdwg.mxu0
    %5346 = vmatpush.bf16.msra.mxu0 %v5010
    %5347 = vmatpush.bf16.msra.mxu0 %v5007
    %5348 = vmatpush.bf16.msra.mxu0 %v5004
    %5349 = vmatpush.bf16.msra.mxu0 %v5001
    %5350 = vmatpush.bf16.msra.mxu0 %v4998
    %5351 = vmatpush.bf16.msra.mxu0 %v4995
    %5352 = vmatpush.bf16.msra.mxu0 %v4992
    %5353 = vmatpush.bf16.msra.mxu0 %v4989
    %5354 = vmatmul.bf16.gmra.mxu0 %v4391
    %v5355 = vpop.f32.mrf.mxu0
    %v5356 = vadd.f32 %v5343, %v5355
    %v5357 = vpop.f32.mrf.mxu0
    %5358 = vdwg.mxu0
    %5359 = vmatpush.bf16.msra.mxu0 %v5034
    %5360 = vmatpush.bf16.msra.mxu0 %v5031
    %5361 = vmatpush.bf16.msra.mxu0 %v5028
    %5362 = vmatpush.bf16.msra.mxu0 %v5025
    %5363 = vmatpush.bf16.msra.mxu0 %v5022
    %5364 = vmatpush.bf16.msra.mxu0 %v5019
    %5365 = vmatpush.bf16.msra.mxu0 %v5016
    %5366 = vmatpush.bf16.msra.mxu0 %v5013
    %5367 = vmatmul.bf16.gmra.mxu0 %v4392
    %v5368 = vpop.f32.mrf.mxu0
    %v5369 = vadd.f32 %v5356, %v5368
    %v5370 = vpop.f32.mrf.mxu0
    %5371 = vdwg.mxu0
    %5372 = vmatpush.bf16.msra.mxu0 %v5058
    %5373 = vmatpush.bf16.msra.mxu0 %v5055
    %5374 = vmatpush.bf16.msra.mxu0 %v5052
    %5375 = vmatpush.bf16.msra.mxu0 %v5049
    %5376 = vmatpush.bf16.msra.mxu0 %v5046
    %5377 = vmatpush.bf16.msra.mxu0 %v5043
    %5378 = vmatpush.bf16.msra.mxu0 %v5040
    %5379 = vmatpush.bf16.msra.mxu0 %v5037
    %5380 = vmatmul.bf16.gmra.mxu0 %v4393
    %v5381 = vpop.f32.mrf.mxu0
    %v5382 = vadd.f32 %v5369, %v5381
    %v5383 = vpop.f32.mrf.mxu0
    %5384 = vdwg.mxu0
    %5385 = vmatpush.bf16.msra.mxu0 %v5082
    %5386 = vmatpush.bf16.msra.mxu0 %v5079
    %5387 = vmatpush.bf16.msra.mxu0 %v5076
    %5388 = vmatpush.bf16.msra.mxu0 %v5073
    %5389 = vmatpush.bf16.msra.mxu0 %v5070
    %5390 = vmatpush.bf16.msra.mxu0 %v5067
    %5391 = vmatpush.bf16.msra.mxu0 %v5064
    %5392 = vmatpush.bf16.msra.mxu0 %v5061
    %5393 = vmatmul.bf16.gmra.mxu0 %v4394
    %v5394 = vpop.f32.mrf.mxu0
    %v5395 = vadd.f32 %v5382, %v5394
    %v5396 = vpop.f32.mrf.mxu0
    %5397 = vdwg.mxu0
    %v5398 = vmax.f32 %v5265, 0.0
    %v5399 = vmax.f32 %v5330, 0.0
    %v5400 = vmax.f32 %v5395, 0.0
    %v5401 = vpack.c.bf16 %v5398, %v5398
    %v5402 = vpack.c.bf16 %v5399, %v5399
    %v5403 = vpack.c.bf16 %v5400, %v5400
    %v5404 = vld [vmem:[#allocation10] sm:$0xff]
    %v5405 = vld [vmem:[#allocation10 + $0x8] sm:$0xff]
    %v5406 = vld [vmem:[#allocation10 + $0x10] sm:$0xff]
    %v5407 = vld [vmem:[#allocation10 + $0x18] sm:$0xff]
    %v5408 = vld [vmem:[#allocation10 + $0x20] sm:$0xff]
    %v5409 = vld [vmem:[#allocation10 + $0x28] sm:$0xff]
    %v5410 = vld [vmem:[#allocation10 + $0x30] sm:$0xff]
    %v5411 = vld [vmem:[#allocation10 + $0x38] sm:$0xff]
    %v5412 = vld [vmem:[#allocation10 + $0x40] sm:$0xff]
    %v5413 = vld [vmem:[#allocation10 + $0x48] sm:$0xff]
    %v5414 = vld [vmem:[#allocation10 + $0x50] sm:$0xff]
    %v5415 = vld [vmem:[#allocation10 + $0x58] sm:$0xff]
    %v5416 = vld [vmem:[#allocation10 + $0x60] sm:$0xff]
    %v5417 = vld [vmem:[#allocation10 + $0x68] sm:$0xff]
    %v5418 = vld [vmem:[#allocation10 + $0x70] sm:$0xff]
    %v5419 = vld [vmem:[#allocation10 + $0x78] sm:$0xff]
    %v5420 = vld [vmem:[#allocation10 + $0x80] sm:$0xff]
    %v5421 = vld [vmem:[#allocation10 + $0x88] sm:$0xff]
    %v5422 = vld [vmem:[#allocation10 + $0x90] sm:$0xff]
    %v5423 = vld [vmem:[#allocation10 + $0x98] sm:$0xff]
    %v5424 = vld [vmem:[#allocation10 + $0xa0] sm:$0xff]
    %v5425 = vld [vmem:[#allocation10 + $0xa8] sm:$0xff]
    %v5426 = vld [vmem:[#allocation10 + $0xb0] sm:$0xff]
    %v5427 = vld [vmem:[#allocation10 + $0xb8] sm:$0xff]
    %v5428 = vld [vmem:[#allocation10 + $0xc0] sm:$0xff]
    %v5429 = vld [vmem:[#allocation10 + $0xc8] sm:$0xff]
    %v5430 = vld [vmem:[#allocation10 + $0xd0] sm:$0xff]
    %v5431 = vld [vmem:[#allocation10 + $0xd8] sm:$0xff]
    %v5432 = vld [vmem:[#allocation10 + $0xe0] sm:$0xff]
    %v5433 = vld [vmem:[#allocation10 + $0xe8] sm:$0xff]
    %v5434 = vld [vmem:[#allocation10 + $0xf0] sm:$0xff]
    %v5435 = vld [vmem:[#allocation10 + $0xf8] sm:$0xff]
    %v5436 = vld [vmem:[#allocation10 + $0x100] sm:$0xff]
    %v5437 = vld [vmem:[#allocation10 + $0x108] sm:$0xff]
    %v5438 = vld [vmem:[#allocation10 + $0x110] sm:$0xff]
    %v5439 = vld [vmem:[#allocation10 + $0x118] sm:$0xff]
    %v5440 = vld [vmem:[#allocation10 + $0x120] sm:$0xff]
    %v5441 = vld [vmem:[#allocation10 + $0x128] sm:$0xff]
    %v5442 = vld [vmem:[#allocation10 + $0x130] sm:$0xff]
    %v5443 = vld [vmem:[#allocation10 + $0x138] sm:$0xff]
    %v5444 = vld [vmem:[#allocation10 + $0x140] sm:$0xff]
    %v5445 = vld [vmem:[#allocation10 + $0x148] sm:$0xff]
    %v5446 = vld [vmem:[#allocation10 + $0x150] sm:$0xff]
    %v5447 = vld [vmem:[#allocation10 + $0x158] sm:$0xff]
    %v5448 = vld [vmem:[#allocation10 + $0x160] sm:$0xff]
    %v5449 = vld [vmem:[#allocation10 + $0x168] sm:$0xff]
    %v5450 = vld [vmem:[#allocation10 + $0x170] sm:$0xff]
    %v5451 = vld [vmem:[#allocation10 + $0x178] sm:$0xff]
    %v5452 = vld [vmem:[#allocation12] sm:$0x3]
    %v5454 = vperm.slane %v5452, 0
    %v5455 = vperm.slane %v5452, 1
    %v5506 = vunpack.c.l.b16 %v5404
    %v5507 = vunpack.c.h.b16 %v5404
    %v5508 = vunpack.c.l.b16 %v5405
    %v5509 = vunpack.c.h.b16 %v5405
    %v5510 = vunpack.c.l.b16 %v5406
    %v5511 = vunpack.c.h.b16 %v5406
    %v5512 = vunpack.c.l.b16 %v5407
    %v5513 = vunpack.c.h.b16 %v5407
    %v5514 = vunpack.c.l.b16 %v5408
    %v5515 = vunpack.c.h.b16 %v5408
    %v5516 = vunpack.c.l.b16 %v5409
    %v5517 = vunpack.c.h.b16 %v5409
    %v5518 = vunpack.c.l.b16 %v5410
    %v5519 = vunpack.c.h.b16 %v5410
    %v5520 = vunpack.c.l.b16 %v5411
    %v5521 = vunpack.c.h.b16 %v5411
    %v5522 = vunpack.c.l.b16 %v5412
    %v5523 = vunpack.c.h.b16 %v5412
    %v5524 = vunpack.c.l.b16 %v5413
    %v5525 = vunpack.c.h.b16 %v5413
    %v5526 = vunpack.c.l.b16 %v5414
    %v5527 = vunpack.c.h.b16 %v5414
    %v5528 = vunpack.c.l.b16 %v5415
    %v5529 = vunpack.c.h.b16 %v5415
    %v5530 = vunpack.c.l.b16 %v5416
    %v5531 = vunpack.c.h.b16 %v5416
    %v5532 = vunpack.c.l.b16 %v5417
    %v5533 = vunpack.c.h.b16 %v5417
    %v5534 = vunpack.c.l.b16 %v5418
    %v5535 = vunpack.c.h.b16 %v5418
    %v5536 = vunpack.c.l.b16 %v5419
    %v5537 = vunpack.c.h.b16 %v5419
    %v5538 = vunpack.c.l.b16 %v5420
    %v5539 = vunpack.c.h.b16 %v5420
    %v5540 = vunpack.c.l.b16 %v5421
    %v5541 = vunpack.c.h.b16 %v5421
    %v5542 = vunpack.c.l.b16 %v5422
    %v5543 = vunpack.c.h.b16 %v5422
    %v5544 = vunpack.c.l.b16 %v5423
    %v5545 = vunpack.c.h.b16 %v5423
    %v5546 = vunpack.c.l.b16 %v5424
    %v5547 = vunpack.c.h.b16 %v5424
    %v5548 = vunpack.c.l.b16 %v5425
    %v5549 = vunpack.c.h.b16 %v5425
    %v5550 = vunpack.c.l.b16 %v5426
    %v5551 = vunpack.c.h.b16 %v5426
    %v5552 = vunpack.c.l.b16 %v5427
    %v5553 = vunpack.c.h.b16 %v5427
    %v5554 = vunpack.c.l.b16 %v5428
    %v5555 = vunpack.c.h.b16 %v5428
    %v5556 = vunpack.c.l.b16 %v5429
    %v5557 = vunpack.c.h.b16 %v5429
    %v5558 = vunpack.c.l.b16 %v5430
    %v5559 = vunpack.c.h.b16 %v5430
    %v5560 = vunpack.c.l.b16 %v5431
    %v5561 = vunpack.c.h.b16 %v5431
    %v5562 = vunpack.c.l.b16 %v5432
    %v5563 = vunpack.c.h.b16 %v5432
    %v5564 = vunpack.c.l.b16 %v5433
    %v5565 = vunpack.c.h.b16 %v5433
    %v5566 = vunpack.c.l.b16 %v5434
    %v5567 = vunpack.c.h.b16 %v5434
    %v5568 = vunpack.c.l.b16 %v5435
    %v5569 = vunpack.c.h.b16 %v5435
    %v5570 = vunpack.c.l.b16 %v5436
    %v5571 = vunpack.c.h.b16 %v5436
    %v5572 = vunpack.c.l.b16 %v5437
    %v5573 = vunpack.c.h.b16 %v5437
    %v5574 = vunpack.c.l.b16 %v5438
    %v5575 = vunpack.c.h.b16 %v5438
    %v5576 = vunpack.c.l.b16 %v5439
    %v5577 = vunpack.c.h.b16 %v5439
    %v5578 = vunpack.c.l.b16 %v5440
    %v5579 = vunpack.c.h.b16 %v5440
    %v5580 = vunpack.c.l.b16 %v5441
    %v5581 = vunpack.c.h.b16 %v5441
    %v5582 = vunpack.c.l.b16 %v5442
    %v5583 = vunpack.c.h.b16 %v5442
    %v5584 = vunpack.c.l.b16 %v5443
    %v5585 = vunpack.c.h.b16 %v5443
    %v5586 = vunpack.c.l.b16 %v5444
    %v5587 = vunpack.c.h.b16 %v5444
    %v5588 = vunpack.c.l.b16 %v5445
    %v5589 = vunpack.c.h.b16 %v5445
    %v5590 = vunpack.c.l.b16 %v5446
    %v5591 = vunpack.c.h.b16 %v5446
    %v5592 = vunpack.c.l.b16 %v5447
    %v5593 = vunpack.c.h.b16 %v5447
    %v5594 = vunpack.c.l.b16 %v5448
    %v5595 = vunpack.c.h.b16 %v5448
    %v5596 = vunpack.c.l.b16 %v5449
    %v5597 = vunpack.c.h.b16 %v5449
    %v5598 = vunpack.c.l.b16 %v5450
    %v5599 = vunpack.c.h.b16 %v5450
    %v5600 = vunpack.c.l.b16 %v5451
    %v5601 = vunpack.c.h.b16 %v5451
    %v5602 = vpack.c.b16 %v5508, %v5506
    %v5603 = vpack.c.b16 %v5509, %v5507
    %v5604 = vpack.c.b16 %v5512, %v5510
    %v5605 = vpack.c.b16 %v5513, %v5511
    %v5606 = vpack.c.b16 %v5516, %v5514
    %v5607 = vpack.c.b16 %v5517, %v5515
    %v5608 = vpack.c.b16 %v5520, %v5518
    %v5609 = vpack.c.b16 %v5521, %v5519
    %v5610 = vpack.c.b16 %v5524, %v5522
    %v5611 = vpack.c.b16 %v5525, %v5523
    %v5612 = vpack.c.b16 %v5528, %v5526
    %v5613 = vpack.c.b16 %v5529, %v5527
    %v5614 = vpack.c.b16 %v5532, %v5530
    %v5615 = vpack.c.b16 %v5533, %v5531
    %v5616 = vpack.c.b16 %v5536, %v5534
    %v5617 = vpack.c.b16 %v5537, %v5535
    %v5618 = vpack.c.b16 %v5540, %v5538
    %v5619 = vpack.c.b16 %v5541, %v5539
    %v5620 = vpack.c.b16 %v5544, %v5542
    %v5621 = vpack.c.b16 %v5545, %v5543
    %v5622 = vpack.c.b16 %v5548, %v5546
    %v5623 = vpack.c.b16 %v5549, %v5547
    %v5624 = vpack.c.b16 %v5552, %v5550
    %v5625 = vpack.c.b16 %v5553, %v5551
    %v5626 = vpack.c.b16 %v5556, %v5554
    %v5627 = vpack.c.b16 %v5557, %v5555
    %v5628 = vpack.c.b16 %v5560, %v5558
    %v5629 = vpack.c.b16 %v5561, %v5559
    %v5630 = vpack.c.b16 %v5564, %v5562
    %v5631 = vpack.c.b16 %v5565, %v5563
    %v5632 = vpack.c.b16 %v5568, %v5566
    %v5633 = vpack.c.b16 %v5569, %v5567
    %v5634 = vpack.c.b16 %v5572, %v5570
    %v5635 = vpack.c.b16 %v5573, %v5571
    %v5636 = vpack.c.b16 %v5576, %v5574
    %v5637 = vpack.c.b16 %v5577, %v5575
    %v5638 = vpack.c.b16 %v5580, %v5578
    %v5639 = vpack.c.b16 %v5581, %v5579
    %v5640 = vpack.c.b16 %v5584, %v5582
    %v5641 = vpack.c.b16 %v5585, %v5583
    %v5642 = vpack.c.b16 %v5588, %v5586
    %v5643 = vpack.c.b16 %v5589, %v5587
    %v5644 = vpack.c.b16 %v5592, %v5590
    %v5645 = vpack.c.b16 %v5593, %v5591
    %v5646 = vpack.c.b16 %v5596, %v5594
    %v5647 = vpack.c.b16 %v5597, %v5595
    %v5648 = vpack.c.b16 %v5600, %v5598
    %v5649 = vpack.c.b16 %v5601, %v5599
    %5698 = vmatpush.bf16.msra.mxu0 %v5616
    %5699 = vmatpush.bf16.msra.mxu0 %v5614
    %5700 = vmatpush.bf16.msra.mxu0 %v5612
    %5701 = vmatpush.bf16.msra.mxu0 %v5610
    %5702 = vmatpush.bf16.msra.mxu0 %v5608
    %5703 = vmatpush.bf16.msra.mxu0 %v5606
    %5704 = vmatpush.bf16.msra.mxu0 %v5604
    %5705 = vmatpush.bf16.msra.mxu0 %v5602
    %5706 = vmatmul.bf16.gmra.mxu0 %v5401
    %v5707 = vpop.f32.mrf.mxu0
    %v5708 = vadd.f32 %v5454, %v5707
    %v5709 = vpop.f32.mrf.mxu0
    %5710 = vdwg.mxu0
    %5711 = vmatpush.bf16.msra.mxu0 %v5632
    %5712 = vmatpush.bf16.msra.mxu0 %v5630
    %5713 = vmatpush.bf16.msra.mxu0 %v5628
    %5714 = vmatpush.bf16.msra.mxu0 %v5626
    %5715 = vmatpush.bf16.msra.mxu0 %v5624
    %5716 = vmatpush.bf16.msra.mxu0 %v5622
    %5717 = vmatpush.bf16.msra.mxu0 %v5620
    %5718 = vmatpush.bf16.msra.mxu0 %v5618
    %5719 = vmatmul.bf16.gmra.mxu0 %v5402
    %v5720 = vpop.f32.mrf.mxu0
    %v5721 = vadd.f32 %v5708, %v5720
    %v5722 = vpop.f32.mrf.mxu0
    %5723 = vdwg.mxu0
    %5724 = vmatpush.bf16.msra.mxu0 %v5648
    %5725 = vmatpush.bf16.msra.mxu0 %v5646
    %5726 = vmatpush.bf16.msra.mxu0 %v5644
    %5727 = vmatpush.bf16.msra.mxu0 %v5642
    %5728 = vmatpush.bf16.msra.mxu0 %v5640
    %5729 = vmatpush.bf16.msra.mxu0 %v5638
    %5730 = vmatpush.bf16.msra.mxu0 %v5636
    %5731 = vmatpush.bf16.msra.mxu0 %v5634
    %5732 = vmatmul.bf16.gmra.mxu0 %v5403
    %v5733 = vpop.f32.mrf.mxu0
    %v5734 = vadd.f32 %v5721, %v5733
    %v5735 = vpop.f32.mrf.mxu0
    %5736 = vdwg.mxu0
    %5737 = vmatpush.bf16.msra.mxu0 %v5617
    %5738 = vmatpush.bf16.msra.mxu0 %v5615
    %5739 = vmatpush.bf16.msra.mxu0 %v5613
    %5740 = vmatpush.bf16.msra.mxu0 %v5611
    %5741 = vmatpush.bf16.msra.mxu0 %v5609
    %5742 = vmatpush.bf16.msra.mxu0 %v5607
    %5743 = vmatpush.bf16.msra.mxu0 %v5605
    %5744 = vmatpush.bf16.msra.mxu0 %v5603
    %5745 = vmatmul.bf16.gmra.mxu0 %v5401
    %v5746 = vpop.f32.mrf.mxu0
    %v5747 = vadd.f32 %v5455, %v5746
    %v5748 = vpop.f32.mrf.mxu0
    %5749 = vdwg.mxu0
    %5750 = vmatpush.bf16.msra.mxu0 %v5633
    %5751 = vmatpush.bf16.msra.mxu0 %v5631
    %5752 = vmatpush.bf16.msra.mxu0 %v5629
    %5753 = vmatpush.bf16.msra.mxu0 %v5627
    %5754 = vmatpush.bf16.msra.mxu0 %v5625
    %5755 = vmatpush.bf16.msra.mxu0 %v5623
    %5756 = vmatpush.bf16.msra.mxu0 %v5621
    %5757 = vmatpush.bf16.msra.mxu0 %v5619
    %5758 = vmatmul.bf16.gmra.mxu0 %v5402
    %v5759 = vpop.f32.mrf.mxu0
    %v5760 = vadd.f32 %v5747, %v5759
    %v5761 = vpop.f32.mrf.mxu0
    %5762 = vdwg.mxu0
    %5763 = vmatpush.bf16.msra.mxu0 %v5649
    %5764 = vmatpush.bf16.msra.mxu0 %v5647
    %5765 = vmatpush.bf16.msra.mxu0 %v5645
    %5766 = vmatpush.bf16.msra.mxu0 %v5643
    %5767 = vmatpush.bf16.msra.mxu0 %v5641
    %5768 = vmatpush.bf16.msra.mxu0 %v5639
    %5769 = vmatpush.bf16.msra.mxu0 %v5637
    %5770 = vmatpush.bf16.msra.mxu0 %v5635
    %5771 = vmatmul.bf16.gmra.mxu0 %v5403
    %v5772 = vpop.f32.mrf.mxu0
    %v5773 = vadd.f32 %v5760, %v5772
    %v5774 = vpop.f32.mrf.mxu0
    %5775 = vdwg.mxu0
    %v5776 = vmax.f32 %v5734, 0.0
    %v5777 = vmax.f32 %v5773, 0.0
    %v5778 = vpack.c.bf16 %v5776, %v5776
    %v5779 = vpack.c.bf16 %v5777, %v5777
    %v5780 = vld [vmem:[%s7] sm:$0xf]
    %v5781 = vld [vmem:[%s7 + $0x4] sm:$0xf]
    %v5782 = vld [vmem:[%s7 + $0x8] sm:$0xf]
    %v5783 = vld [vmem:[%s7 + $0xc] sm:$0xf]
    %v5784 = vld [vmem:[%s7 + $0x10] sm:$0xf]
    %v5785 = vld [vmem:[%s7 + $0x14] sm:$0xf]
    %v5786 = vld [vmem:[%s7 + $0x18] sm:$0xf]
    %v5787 = vld [vmem:[%s7 + $0x1c] sm:$0xf]
    %v5788 = vld [vmem:[%s7 + $0x20] sm:$0xf]
    %v5789 = vld [vmem:[%s7 + $0x24] sm:$0xf]
    %v5790 = vld [vmem:[%s7 + $0x28] sm:$0xf]
    %v5791 = vld [vmem:[%s7 + $0x2c] sm:$0xf]
    %v5792 = vld [vmem:[%s7 + $0x30] sm:$0xf]
    %v5793 = vld [vmem:[%s7 + $0x34] sm:$0xf]
    %v5794 = vld [vmem:[%s7 + $0x38] sm:$0xf]
    %v5795 = vld [vmem:[%s7 + $0x3c] sm:$0xf]
    %v5796 = vld [vmem:[%s7 + $0x40] sm:$0xf]
    %v5797 = vld [vmem:[%s7 + $0x44] sm:$0xf]
    %v5798 = vld [vmem:[%s7 + $0x48] sm:$0xf]
    %v5799 = vld [vmem:[%s7 + $0x4c] sm:$0xf]
    %v5800 = vld [vmem:[%s7 + $0x50] sm:$0xf]
    %v5801 = vld [vmem:[%s7 + $0x54] sm:$0xf]
    %v5802 = vld [vmem:[%s7 + $0x58] sm:$0xf]
    %v5803 = vld [vmem:[%s7 + $0x5c] sm:$0xf]
    %v5804 = vld [vmem:[%s7 + $0x60] sm:$0xf]
    %v5805 = vld [vmem:[%s7 + $0x64] sm:$0xf]
    %v5806 = vld [vmem:[%s7 + $0x68] sm:$0xf]
    %v5807 = vld [vmem:[%s7 + $0x6c] sm:$0xf]
    %v5808 = vld [vmem:[%s7 + $0x70] sm:$0xf]
    %v5809 = vld [vmem:[%s7 + $0x74] sm:$0xf]
    %v5810 = vld [vmem:[%s7 + $0x78] sm:$0xf]
    %v5811 = vld [vmem:[%s7 + $0x7c] sm:$0xf]
    %v5812 = vld [vmem:[#allocation13] sm:$0x1]
    %v5814 = vperm.slane %v5812, 0
    %v5848 = vunpack.c.l.b16 %v5780
    %v5849 = vunpack.c.l.b16 %v5781
    %v5850 = vunpack.c.l.b16 %v5782
    %v5851 = vunpack.c.l.b16 %v5783
    %v5852 = vunpack.c.l.b16 %v5784
    %v5853 = vunpack.c.l.b16 %v5785
    %v5854 = vunpack.c.l.b16 %v5786
    %v5855 = vunpack.c.l.b16 %v5787
    %v5856 = vunpack.c.l.b16 %v5788
    %v5857 = vunpack.c.l.b16 %v5789
    %v5858 = vunpack.c.l.b16 %v5790
    %v5859 = vunpack.c.l.b16 %v5791
    %v5860 = vunpack.c.l.b16 %v5792
    %v5861 = vunpack.c.l.b16 %v5793
    %v5862 = vunpack.c.l.b16 %v5794
    %v5863 = vunpack.c.l.b16 %v5795
    %v5864 = vunpack.c.l.b16 %v5796
    %v5865 = vunpack.c.l.b16 %v5797
    %v5866 = vunpack.c.l.b16 %v5798
    %v5867 = vunpack.c.l.b16 %v5799
    %v5868 = vunpack.c.l.b16 %v5800
    %v5869 = vunpack.c.l.b16 %v5801
    %v5870 = vunpack.c.l.b16 %v5802
    %v5871 = vunpack.c.l.b16 %v5803
    %v5872 = vunpack.c.l.b16 %v5804
    %v5873 = vunpack.c.l.b16 %v5805
    %v5874 = vunpack.c.l.b16 %v5806
    %v5875 = vunpack.c.l.b16 %v5807
    %v5876 = vunpack.c.l.b16 %v5808
    %v5877 = vunpack.c.l.b16 %v5809
    %v5878 = vunpack.c.l.b16 %v5810
    %v5879 = vunpack.c.l.b16 %v5811
    %v5880 = vpack.c.b16 %v5849, %v5848
    %v5881 = vpack.c.b16 %v5851, %v5850
    %v5882 = vpack.c.b16 %v5853, %v5852
    %v5883 = vpack.c.b16 %v5855, %v5854
    %v5884 = vpack.c.b16 %v5857, %v5856
    %v5885 = vpack.c.b16 %v5859, %v5858
    %v5886 = vpack.c.b16 %v5861, %v5860
    %v5887 = vpack.c.b16 %v5863, %v5862
    %v5888 = vpack.c.b16 %v5865, %v5864
    %v5889 = vpack.c.b16 %v5867, %v5866
    %v5890 = vpack.c.b16 %v5869, %v5868
    %v5891 = vpack.c.b16 %v5871, %v5870
    %v5892 = vpack.c.b16 %v5873, %v5872
    %v5893 = vpack.c.b16 %v5875, %v5874
    %v5894 = vpack.c.b16 %v5877, %v5876
    %v5895 = vpack.c.b16 %v5879, %v5878
    %5912 = vmatpush.bf16.msra.mxu0 %v5887
    %5913 = vmatpush.bf16.msra.mxu0 %v5886
    %5914 = vmatpush.bf16.msra.mxu0 %v5885
    %5915 = vmatpush.bf16.msra.mxu0 %v5884
    %5916 = vmatpush.bf16.msra.mxu0 %v5883
    %5917 = vmatpush.bf16.msra.mxu0 %v5882
    %5918 = vmatpush.bf16.msra.mxu0 %v5881
    %5919 = vmatpush.bf16.msra.mxu0 %v5880
    %5920 = vmatmul.bf16.gmra.mxu0 %v5778
    %v5921 = vpop.f32.mrf.mxu0
    %v5922 = vadd.f32 %v5814, %v5921
    %v5923 = vpop.f32.mrf.mxu0
    %5924 = vdwg.mxu0
    %5925 = vmatpush.bf16.msra.mxu0 %v5895
    %5926 = vmatpush.bf16.msra.mxu0 %v5894
    %5927 = vmatpush.bf16.msra.mxu0 %v5893
    %5928 = vmatpush.bf16.msra.mxu0 %v5892
    %5929 = vmatpush.bf16.msra.mxu0 %v5891
    %5930 = vmatpush.bf16.msra.mxu0 %v5890
    %5931 = vmatpush.bf16.msra.mxu0 %v5889
    %5932 = vmatpush.bf16.msra.mxu0 %v5888
    %5933 = vmatmul.bf16.gmra.mxu0 %v5779
    %v5934 = vpop.f32.mrf.mxu0
    %v5935 = vadd.f32 %v5922, %v5934
    %v5936 = vpop.f32.mrf.mxu0
    %5937 = vdwg.mxu0
    %5939 = vrot.lane.b32.xlu0 %v5935, 127
    %v5940 = vpop.permute.xlu0 %5939
    %v5942 = vsub.f32 %v5935, %v5940
    %v5943 = vsub.f32 0.0, %v5942
    %v5944 = vmul.f32 %v5943, 1.442695
    %v5945 = vpow.pop %v5944
    %v5946 = vadd.f32 %v5945, 1.0
    %v5947 = vrcp.pop %v5946
    %v5948 = vmul.f32 %v5946, %v5947
    %v5949 = vsub.f32 1.0, %v5948
    %v5950 = vmul.f32 %v5947, %v5949
    %v5951 = vadd.f32 %v5947, %v5950
    %vm5952 = vweird.f32 %v5946
    %vm5953 = vweird.f32 %v5947
    %vm5954 = vmor %vm5952, %vm5953
    %v5955 = vsel %vm5954, %v5947, %v5951
    %v5956 = vand.u32 2147483647, %v5946
    %vm5957 = vcmp.eq.f32.partialorder %v5956, 8.507059e+37
    %v5958 = vand.u32 %v5946, 2147483648
    %v5959 = vor.u32 1.1754944e-38, %v5958
    %v5960 = vsel %vm5957, %v5959, %v5955
    %v5961 = vmul.f32 1.0, %v5960
    %v5962 = vlaneseq
    %v5963 = vand.u32 %v5962, 127
    %vm5964 = vcmp.eq.s32.totalorder %v5963, 0
    %v5965 = vsub.f32 1.0, %v5961
    %5967 = vset.pattern.permute.xlu0 0
    %5968 = vperm.xlu0 %5967, %v5961
    %v5969 = vpop.permute.xlu0 %5968
    %5972 = vset.pattern.permute.xlu0 0
    %5973 = vperm.xlu0 %5972, %v5965
    %v5974 = vpop.permute.xlu0 %5973
    %v5976 = vsel %vm5964, %v5969, %v5974
    %vm5977 = vcmask 15360
    %5978 = vst.msk [vmem:[%s9] sm:$0xff] %vm5977, %v5976
    // Predicated region
    $region70: #{tpu_custom_call.1} parent=1 // pred_check
      _
    $region71: #{tpu_custom_call.1} parent=1 // pred_check_branch
      %5980 = sbr.rel (0) target = $region73
    $region72: #{tpu_custom_call.1} parent=1 // pred_region
      _
    $region73: #{tpu_custom_call.1} parent=1 // pred_fallthru
      _
    // Predicated region
    $region74: #{tpu_custom_call.1} parent=1 // pred_check
      _
    $region75: #{tpu_custom_call.1} parent=1 // pred_check_branch
      %5982 = sbr.rel (0) target = $region77
    $region76: #{tpu_custom_call.1} parent=1 // pred_region
      _
    $region77: #{tpu_custom_call.1} parent=1 // pred_fallthru
      _
    %5983 = vsyncpa [#allocation3], 1
    %5984 = vsyncpa [#allocation5], 1
    %5985 = vsyncpa [#allocation8], 1
    %5986 = vsyncpa [#allocation11], 1
    %5987 = vsyncpa [#allocation14], 1

</llo_original>
